<compile_context>
chip_gen: v7x
topology: tpu7x:2x2x1
jax: 0.10.0
libtpu: 0.0.40
codegen_flags: <defaults>
</compile_context>

<pallas_src>
import functools

import jax
import jax.numpy as jnp
from jax import lax
from jax.experimental import pallas as pl
from jax.experimental.pallas import tpu as pltpu

LANE = 128


def _round_up(x, m):
    return (x + m - 1) // m * m


# ----------------------------- Pallas kernel ------------------------------ #
def _conv_fused_kernel(x_ref, w_ref, b_ref, o_ref, acc_ref, *, K, Wp, M):
    """Fused im2col + GEMM for one image and one Cout tile.

    x_ref  : (flat_rows, Cin)  bf16  zero-padded image, spatial dims flattened
    w_ref  : (K*K, Cin, tn)    bf16  weights, taps on the leading axis
    b_ref  : (1, tn)           f32
    o_ref  : (M, tn)           f32   M = Ho * Wp rows (cols >= Wo are discarded)
    acc_ref: (M, tn)           f32   VMEM scratch accumulator
    """
    acc_ref[...] = jnp.zeros_like(acc_ref)
    for kh in range(K):
        for kw in range(K):
            start = kh * Wp + kw                      # static shift per tap
            a = x_ref[start:start + M, :]             # (M, Cin) shifted view
            acc_ref[...] += jnp.dot(a, w_ref[kh * K + kw],
                                    preferred_element_type=jnp.float32)
    o_ref[...] = acc_ref[...] + b_ref[...]


def _conv2d_pallas_stride1(x_nchw, weight_oihw, bias):
    """Stride-1 'same'-padded conv.  NCHW in, NCHW out, f32."""
    N, Cin, H, W = x_nchw.shape
    Cout, _, K, _ = weight_oihw.shape
    pad = (K - 1) // 2
    Hp, Wp = H + 2 * pad, W + 2 * pad
    Ho, Wo = Hp - K + 1, Wp - K + 1
    Cout_p = _round_up(max(Cout, LANE), LANE)         # lane-dense output
    tn = LANE
    M = Ho * Wp                                       # output rows per image
    flat_rows = (Hp + 1) * Wp                         # +1 zero row keeps taps in-bounds

    # glue: NCHW -> NHWC, zero-pad, flatten spatial, cast to bf16
    x = jnp.transpose(x_nchw, (0, 2, 3, 1))
    x = jnp.pad(x, ((0, 0), (pad, pad + 1), (pad, pad), (0, 0)))
    x = x.reshape(N, flat_rows, Cin).astype(jnp.bfloat16)

    # weights OIHW -> (K*K, Cin, Cout_p) bf16 ; bias -> (1, Cout_p) f32
    w = jnp.transpose(weight_oihw, (2, 3, 1, 0)).reshape(K * K, Cin, Cout)
    w = jnp.pad(w, ((0, 0), (0, 0), (0, Cout_p - Cout))).astype(jnp.bfloat16)
    b = jnp.pad(bias, (0, Cout_p - Cout)).reshape(1, Cout_p).astype(jnp.float32)

    kernel = functools.partial(_conv_fused_kernel, K=K, Wp=Wp, M=M)
    flops = 2 * N * M * K * K * Cin * Cout_p
    bytes_accessed = x.size * 2 + w.size * 2 + b.size * 4 + N * M * Cout_p * 4

    out = pl.pallas_call(
        kernel,
        out_shape=jax.ShapeDtypeStruct((N, M, Cout_p), jnp.float32),
        grid_spec=pltpu.PrefetchScalarGridSpec(
            num_scalar_prefetch=0,
            grid=(N, Cout_p // tn),
            in_specs=[
                pl.BlockSpec((None, flat_rows, Cin), lambda n, j: (n, 0, 0)),
                pl.BlockSpec((K * K, Cin, tn), lambda n, j: (0, 0, j)),
                pl.BlockSpec((1, tn), lambda n, j: (0, j)),
            ],
            out_specs=pl.BlockSpec((None, M, tn), lambda n, j: (n, 0, j)),
            scratch_shapes=[pltpu.VMEM((M, tn), jnp.float32)],
        ),
        compiler_params=pltpu.CompilerParams(
            dimension_semantics=("parallel", "parallel"),
            vmem_limit_bytes=32 * 1024 * 1024),
        cost_estimate=pl.CostEstimate(flops=flops, transcendentals=0,
                                      bytes_accessed=bytes_accessed),
    )(x, w, b)

    # glue: drop wrap-around / padded columns and channels, back to NCHW
    out = out.reshape(N, Ho, Wp, Cout_p)[:, :, :Wo, :Cout]
    return jnp.transpose(out, (0, 3, 1, 2))


# ------------------------------ Conv2D module ----------------------------- #
def init_conv2d_params(key, input_dim, output_dim, kernel_size):
    """Deterministic init matching PyTorch Conv2d default (uniform +-1/sqrt(fan_in))."""
    w_key, b_key = jax.random.split(key)
    fan_in = input_dim * kernel_size * kernel_size
    bound = 1.0 / jnp.sqrt(fan_in)
    weight = jax.random.uniform(
        w_key, (output_dim, input_dim, kernel_size, kernel_size),
        minval=-bound, maxval=bound, dtype=jnp.float32)       # OIHW (PyTorch)
    bias = jax.random.uniform(
        b_key, (output_dim,), minval=-bound, maxval=bound, dtype=jnp.float32)
    return weight, bias


@functools.partial(jax.jit, static_argnames=("stride",))
def conv2d_forward(x_nchw, weight_oihw, bias, stride=1):
    """Forward of Conv2D: NCHW in, NCHW out (same semantics as nn.Conv2d)."""
    y = _conv2d_pallas_stride1(x_nchw, weight_oihw, bias)
    if stride > 1:
        # TODO(synk): stride > 1 computes the stride-1 conv and subsamples
        # (correct, but overcomputes); fold stride into the in-kernel tap slices.
        y = y[:, :, ::stride, ::stride]
    return y


# ---------------------------------- main ---------------------------------- #
if __name__ == "__main__":
    key = jax.random.PRNGKey(0)
    x_key, p_key = jax.random.split(key)

    # Conv2D(input_dim=4, output_dim=8, kernel_size=3, stride=1)
    input_dim, output_dim, kernel_size, stride = 4, 8, 3, 1
    x = jax.random.normal(x_key, (2, input_dim, 16, 16), dtype=jnp.float32)
    weight, bias = init_conv2d_params(p_key, input_dim, output_dim, kernel_size)

    y = conv2d_forward(x, weight, bias, stride=stride)
    y = jax.block_until_ready(y)

    # reference: XLA conv on the same bf16-rounded inputs (kernel is bf16-in/f32-acc)
    pad = (kernel_size - 1) // 2
    xq = x.astype(jnp.bfloat16).astype(jnp.float32)
    wq = weight.astype(jnp.bfloat16).astype(jnp.float32)
    y_ref = lax.conv_general_dilated(
        xq, wq, window_strides=(stride, stride),
        padding=((pad, pad), (pad, pad)),
        dimension_numbers=("NCHW", "OIHW", "NCHW"),
        precision=lax.Precision.HIGHEST,
    ) + bias.reshape(1, -1, 1, 1)

    assert y.shape == (2, output_dim, 16, 16)
    assert jnp.allclose(y, y_ref, atol=2e-3, rtol=2e-3)

    print("KERNEL_OK")
</pallas_src>

<mosaic_0001>
module attributes {stable_mosaic.version = 11 : i64} {
  func.func @_conv_fused_kernel(%arg0: i32, %arg1: i32, %arg2: memref<1x342x4xbf16, #tpu.memory_space<vmem>>, %arg3: memref<9x4x128xbf16, #tpu.memory_space<vmem>>, %arg4: memref<1x128xf32, #tpu.memory_space<vmem>>, %arg5: memref<1x288x128xf32, #tpu.memory_space<vmem>>, %arg6: memref<288x128xf32, #tpu.memory_space<vmem>>) attributes {dimension_semantics = [#tpu.dimension_semantics<parallel>, #tpu.dimension_semantics<parallel>], iteration_bounds = array<i64: 2, 1>, scalar_prefetch = 0 : i64, scratch_operands = 1 : i64, tpu.core_type = #tpu.core_type<tc>, window_params = [{transform_indices = @transform_0, window_bounds = array<i64: 1, 342, 4>}, {transform_indices = @transform_1, window_bounds = array<i64: 9, 4, 128>}, {transform_indices = @transform_2, window_bounds = array<i64: 1, 128>}, {transform_indices = @transform_3, window_bounds = array<i64: 1, 288, 128>}]} {
    %cst = arith.constant 0.000000e+00 : f32
    %0 = vector.broadcast %cst : f32 to vector<288x128xf32>
    %c0 = arith.constant 0 : index
    %c0_0 = arith.constant 0 : index
    %1 = vector.load %arg6[%c0, %c0_0] : memref<288x128xf32, #tpu.memory_space<vmem>>, vector<288x128xf32>
    tpu.vector_store %arg6[%c0, %c0_0], %0 {strides = array<i32>} : memref<288x128xf32, #tpu.memory_space<vmem>>, vector<288x128xf32>,
    %c0_1 = arith.constant 0 : index
    %c0_2 = arith.constant 0 : index
    %c0_3 = arith.constant 0 : index
    %2 = vector.load %arg2[%c0_1, %c0_2, %c0_3] : memref<1x342x4xbf16, #tpu.memory_space<vmem>>, vector<1x288x4xbf16>
    %3 = vector.shape_cast %2 : vector<1x288x4xbf16> to vector<288x4xbf16>
    %c0_4 = arith.constant 0 : index
    %c0_5 = arith.constant 0 : index
    %4 = vector.load %arg6[%c0_4, %c0_5] : memref<288x128xf32, #tpu.memory_space<vmem>>, vector<288x128xf32>
    %c0_6 = arith.constant 0 : index
    %c0_7 = arith.constant 0 : index
    %c0_8 = arith.constant 0 : index
    %5 = vector.load %arg3[%c0_6, %c0_7, %c0_8] : memref<9x4x128xbf16, #tpu.memory_space<vmem>>, vector<1x4x128xbf16>
    %6 = vector.shape_cast %5 : vector<1x4x128xbf16> to vector<4x128xbf16>
    %cst_9 = arith.constant dense<0.000000e+00> : vector<288x128xf32>
    %7 = tpu.matmul %3, %6, %cst_9 {dimension_numbers = #tpu.dot_dimension_numbers<[1], [0], [0], [1], [0, 0, 1, 1], [], []>} : vector<288x4xbf16>, vector<4x128xbf16>, vector<288x128xf32> -> vector<288x128xf32>
    %8 = arith.addf %4, %7 : vector<288x128xf32>
    %c0_10 = arith.constant 0 : index
    %c0_11 = arith.constant 0 : index
    %9 = vector.load %arg6[%c0_10, %c0_11] : memref<288x128xf32, #tpu.memory_space<vmem>>, vector<288x128xf32>
    tpu.vector_store %arg6[%c0_10, %c0_11], %8 {strides = array<i32>} : memref<288x128xf32, #tpu.memory_space<vmem>>, vector<288x128xf32>,
    %c0_12 = arith.constant 0 : index
    %c1 = arith.constant 1 : index
    %c0_13 = arith.constant 0 : index
    %10 = vector.load %arg2[%c0_12, %c1, %c0_13] : memref<1x342x4xbf16, #tpu.memory_space<vmem>>, vector<1x288x4xbf16>
    %11 = vector.shape_cast %10 : vector<1x288x4xbf16> to vector<288x4xbf16>
    %c0_14 = arith.constant 0 : index
    %c0_15 = arith.constant 0 : index
    %12 = vector.load %arg6[%c0_14, %c0_15] : memref<288x128xf32, #tpu.memory_space<vmem>>, vector<288x128xf32>
    %c1_16 = arith.constant 1 : index
    %c0_17 = arith.constant 0 : index
    %c0_18 = arith.constant 0 : index
    %13 = vector.load %arg3[%c1_16, %c0_17, %c0_18] : memref<9x4x128xbf16, #tpu.memory_space<vmem>>, vector<1x4x128xbf16>
    %14 = vector.shape_cast %13 : vector<1x4x128xbf16> to vector<4x128xbf16>
    %cst_19 = arith.constant dense<0.000000e+00> : vector<288x128xf32>
    %15 = tpu.matmul %11, %14, %cst_19 {dimension_numbers = #tpu.dot_dimension_numbers<[1], [0], [0], [1], [0, 0, 1, 1], [], []>} : vector<288x4xbf16>, vector<4x128xbf16>, vector<288x128xf32> -> vector<288x128xf32>
    %16 = arith.addf %12, %15 : vector<288x128xf32>
    %c0_20 = arith.constant 0 : index
    %c0_21 = arith.constant 0 : index
    %17 = vector.load %arg6[%c0_20, %c0_21] : memref<288x128xf32, #tpu.memory_space<vmem>>, vector<288x128xf32>
    tpu.vector_store %arg6[%c0_20, %c0_21], %16 {strides = array<i32>} : memref<288x128xf32, #tpu.memory_space<vmem>>, vector<288x128xf32>,
    %c0_22 = arith.constant 0 : index
    %c2 = arith.constant 2 : index
    %c0_23 = arith.constant 0 : index
    %18 = vector.load %arg2[%c0_22, %c2, %c0_23] : memref<1x342x4xbf16, #tpu.memory_space<vmem>>, vector<1x288x4xbf16>
    %19 = vector.shape_cast %18 : vector<1x288x4xbf16> to vector<288x4xbf16>
    %c0_24 = arith.constant 0 : index
    %c0_25 = arith.constant 0 : index
    %20 = vector.load %arg6[%c0_24, %c0_25] : memref<288x128xf32, #tpu.memory_space<vmem>>, vector<288x128xf32>
    %c2_26 = arith.constant 2 : index
    %c0_27 = arith.constant 0 : index
    %c0_28 = arith.constant 0 : index
    %21 = vector.load %arg3[%c2_26, %c0_27, %c0_28] : memref<9x4x128xbf16, #tpu.memory_space<vmem>>, vector<1x4x128xbf16>
    %22 = vector.shape_cast %21 : vector<1x4x128xbf16> to vector<4x128xbf16>
    %cst_29 = arith.constant dense<0.000000e+00> : vector<288x128xf32>
    %23 = tpu.matmul %19, %22, %cst_29 {dimension_numbers = #tpu.dot_dimension_numbers<[1], [0], [0], [1], [0, 0, 1, 1], [], []>} : vector<288x4xbf16>, vector<4x128xbf16>, vector<288x128xf32> -> vector<288x128xf32>
    %24 = arith.addf %20, %23 : vector<288x128xf32>
    %c0_30 = arith.constant 0 : index
    %c0_31 = arith.constant 0 : index
    %25 = vector.load %arg6[%c0_30, %c0_31] : memref<288x128xf32, #tpu.memory_space<vmem>>, vector<288x128xf32>
    tpu.vector_store %arg6[%c0_30, %c0_31], %24 {strides = array<i32>} : memref<288x128xf32, #tpu.memory_space<vmem>>, vector<288x128xf32>,
    %c0_32 = arith.constant 0 : index
    %c18 = arith.constant 18 : index
    %c0_33 = arith.constant 0 : index
    %26 = vector.load %arg2[%c0_32, %c18, %c0_33] : memref<1x342x4xbf16, #tpu.memory_space<vmem>>, vector<1x288x4xbf16>
    %27 = vector.shape_cast %26 : vector<1x288x4xbf16> to vector<288x4xbf16>
    %c0_34 = arith.constant 0 : index
    %c0_35 = arith.constant 0 : index
    %28 = vector.load %arg6[%c0_34, %c0_35] : memref<288x128xf32, #tpu.memory_space<vmem>>, vector<288x128xf32>
    %c3 = arith.constant 3 : index
    %c0_36 = arith.constant 0 : index
    %c0_37 = arith.constant 0 : index
    %29 = vector.load %arg3[%c3, %c0_36, %c0_37] : memref<9x4x128xbf16, #tpu.memory_space<vmem>>, vector<1x4x128xbf16>
    %30 = vector.shape_cast %29 : vector<1x4x128xbf16> to vector<4x128xbf16>
    %cst_38 = arith.constant dense<0.000000e+00> : vector<288x128xf32>
    %31 = tpu.matmul %27, %30, %cst_38 {dimension_numbers = #tpu.dot_dimension_numbers<[1], [0], [0], [1], [0, 0, 1, 1], [], []>} : vector<288x4xbf16>, vector<4x128xbf16>, vector<288x128xf32> -> vector<288x128xf32>
    %32 = arith.addf %28, %31 : vector<288x128xf32>
    %c0_39 = arith.constant 0 : index
    %c0_40 = arith.constant 0 : index
    %33 = vector.load %arg6[%c0_39, %c0_40] : memref<288x128xf32, #tpu.memory_space<vmem>>, vector<288x128xf32>
    tpu.vector_store %arg6[%c0_39, %c0_40], %32 {strides = array<i32>} : memref<288x128xf32, #tpu.memory_space<vmem>>, vector<288x128xf32>,
    %c0_41 = arith.constant 0 : index
    %c19 = arith.constant 19 : index
    %c0_42 = arith.constant 0 : index
    %34 = vector.load %arg2[%c0_41, %c19, %c0_42] : memref<1x342x4xbf16, #tpu.memory_space<vmem>>, vector<1x288x4xbf16>
    %35 = vector.shape_cast %34 : vector<1x288x4xbf16> to vector<288x4xbf16>
    %c0_43 = arith.constant 0 : index
    %c0_44 = arith.constant 0 : index
    %36 = vector.load %arg6[%c0_43, %c0_44] : memref<288x128xf32, #tpu.memory_space<vmem>>, vector<288x128xf32>
    %c4 = arith.constant 4 : index
    %c0_45 = arith.constant 0 : index
    %c0_46 = arith.constant 0 : index
    %37 = vector.load %arg3[%c4, %c0_45, %c0_46] : memref<9x4x128xbf16, #tpu.memory_space<vmem>>, vector<1x4x128xbf16>
    %38 = vector.shape_cast %37 : vector<1x4x128xbf16> to vector<4x128xbf16>
    %cst_47 = arith.constant dense<0.000000e+00> : vector<288x128xf32>
    %39 = tpu.matmul %35, %38, %cst_47 {dimension_numbers = #tpu.dot_dimension_numbers<[1], [0], [0], [1], [0, 0, 1, 1], [], []>} : vector<288x4xbf16>, vector<4x128xbf16>, vector<288x128xf32> -> vector<288x128xf32>
    %40 = arith.addf %36, %39 : vector<288x128xf32>
    %c0_48 = arith.constant 0 : index
    %c0_49 = arith.constant 0 : index
    %41 = vector.load %arg6[%c0_48, %c0_49] : memref<288x128xf32, #tpu.memory_space<vmem>>, vector<288x128xf32>
    tpu.vector_store %arg6[%c0_48, %c0_49], %40 {strides = array<i32>} : memref<288x128xf32, #tpu.memory_space<vmem>>, vector<288x128xf32>,
    %c0_50 = arith.constant 0 : index
    %c20 = arith.constant 20 : index
    %c0_51 = arith.constant 0 : index
    %42 = vector.load %arg2[%c0_50, %c20, %c0_51] : memref<1x342x4xbf16, #tpu.memory_space<vmem>>, vector<1x288x4xbf16>
    %43 = vector.shape_cast %42 : vector<1x288x4xbf16> to vector<288x4xbf16>
    %c0_52 = arith.constant 0 : index
    %c0_53 = arith.constant 0 : index
    %44 = vector.load %arg6[%c0_52, %c0_53] : memref<288x128xf32, #tpu.memory_space<vmem>>, vector<288x128xf32>
    %c5 = arith.constant 5 : index
    %c0_54 = arith.constant 0 : index
    %c0_55 = arith.constant 0 : index
    %45 = vector.load %arg3[%c5, %c0_54, %c0_55] : memref<9x4x128xbf16, #tpu.memory_space<vmem>>, vector<1x4x128xbf16>
    %46 = vector.shape_cast %45 : vector<1x4x128xbf16> to vector<4x128xbf16>
    %cst_56 = arith.constant dense<0.000000e+00> : vector<288x128xf32>
    %47 = tpu.matmul %43, %46, %cst_56 {dimension_numbers = #tpu.dot_dimension_numbers<[1], [0], [0], [1], [0, 0, 1, 1], [], []>} : vector<288x4xbf16>, vector<4x128xbf16>, vector<288x128xf32> -> vector<288x128xf32>
    %48 = arith.addf %44, %47 : vector<288x128xf32>
    %c0_57 = arith.constant 0 : index
    %c0_58 = arith.constant 0 : index
    %49 = vector.load %arg6[%c0_57, %c0_58] : memref<288x128xf32, #tpu.memory_space<vmem>>, vector<288x128xf32>
    tpu.vector_store %arg6[%c0_57, %c0_58], %48 {strides = array<i32>} : memref<288x128xf32, #tpu.memory_space<vmem>>, vector<288x128xf32>,
    %c0_59 = arith.constant 0 : index
    %c36 = arith.constant 36 : index
    %c0_60 = arith.constant 0 : index
    %50 = vector.load %arg2[%c0_59, %c36, %c0_60] : memref<1x342x4xbf16, #tpu.memory_space<vmem>>, vector<1x288x4xbf16>
    %51 = vector.shape_cast %50 : vector<1x288x4xbf16> to vector<288x4xbf16>
    %c0_61 = arith.constant 0 : index
    %c0_62 = arith.constant 0 : index
    %52 = vector.load %arg6[%c0_61, %c0_62] : memref<288x128xf32, #tpu.memory_space<vmem>>, vector<288x128xf32>
    %c6 = arith.constant 6 : index
    %c0_63 = arith.constant 0 : index
    %c0_64 = arith.constant 0 : index
    %53 = vector.load %arg3[%c6, %c0_63, %c0_64] : memref<9x4x128xbf16, #tpu.memory_space<vmem>>, vector<1x4x128xbf16>
    %54 = vector.shape_cast %53 : vector<1x4x128xbf16> to vector<4x128xbf16>
    %cst_65 = arith.constant dense<0.000000e+00> : vector<288x128xf32>
    %55 = tpu.matmul %51, %54, %cst_65 {dimension_numbers = #tpu.dot_dimension_numbers<[1], [0], [0], [1], [0, 0, 1, 1], [], []>} : vector<288x4xbf16>, vector<4x128xbf16>, vector<288x128xf32> -> vector<288x128xf32>
    %56 = arith.addf %52, %55 : vector<288x128xf32>
    %c0_66 = arith.constant 0 : index
    %c0_67 = arith.constant 0 : index
    %57 = vector.load %arg6[%c0_66, %c0_67] : memref<288x128xf32, #tpu.memory_space<vmem>>, vector<288x128xf32>
    tpu.vector_store %arg6[%c0_66, %c0_67], %56 {strides = array<i32>} : memref<288x128xf32, #tpu.memory_space<vmem>>, vector<288x128xf32>,
    %c0_68 = arith.constant 0 : index
    %c37 = arith.constant 37 : index
    %c0_69 = arith.constant 0 : index
    %58 = vector.load %arg2[%c0_68, %c37, %c0_69] : memref<1x342x4xbf16, #tpu.memory_space<vmem>>, vector<1x288x4xbf16>
    %59 = vector.shape_cast %58 : vector<1x288x4xbf16> to vector<288x4xbf16>
    %c0_70 = arith.constant 0 : index
    %c0_71 = arith.constant 0 : index
    %60 = vector.load %arg6[%c0_70, %c0_71] : memref<288x128xf32, #tpu.memory_space<vmem>>, vector<288x128xf32>
    %c7 = arith.constant 7 : index
    %c0_72 = arith.constant 0 : index
    %c0_73 = arith.constant 0 : index
    %61 = vector.load %arg3[%c7, %c0_72, %c0_73] : memref<9x4x128xbf16, #tpu.memory_space<vmem>>, vector<1x4x128xbf16>
    %62 = vector.shape_cast %61 : vector<1x4x128xbf16> to vector<4x128xbf16>
    %cst_74 = arith.constant dense<0.000000e+00> : vector<288x128xf32>
    %63 = tpu.matmul %59, %62, %cst_74 {dimension_numbers = #tpu.dot_dimension_numbers<[1], [0], [0], [1], [0, 0, 1, 1], [], []>} : vector<288x4xbf16>, vector<4x128xbf16>, vector<288x128xf32> -> vector<288x128xf32>
    %64 = arith.addf %60, %63 : vector<288x128xf32>
    %c0_75 = arith.constant 0 : index
    %c0_76 = arith.constant 0 : index
    %65 = vector.load %arg6[%c0_75, %c0_76] : memref<288x128xf32, #tpu.memory_space<vmem>>, vector<288x128xf32>
    tpu.vector_store %arg6[%c0_75, %c0_76], %64 {strides = array<i32>} : memref<288x128xf32, #tpu.memory_space<vmem>>, vector<288x128xf32>,
    %c0_77 = arith.constant 0 : index
    %c38 = arith.constant 38 : index
    %c0_78 = arith.constant 0 : index
    %66 = vector.load %arg2[%c0_77, %c38, %c0_78] : memref<1x342x4xbf16, #tpu.memory_space<vmem>>, vector<1x288x4xbf16>
    %67 = vector.shape_cast %66 : vector<1x288x4xbf16> to vector<288x4xbf16>
    %c0_79 = arith.constant 0 : index
    %c0_80 = arith.constant 0 : index
    %68 = vector.load %arg6[%c0_79, %c0_80] : memref<288x128xf32, #tpu.memory_space<vmem>>, vector<288x128xf32>
    %c8 = arith.constant 8 : index
    %c0_81 = arith.constant 0 : index
    %c0_82 = arith.constant 0 : index
    %69 = vector.load %arg3[%c8, %c0_81, %c0_82] : memref<9x4x128xbf16, #tpu.memory_space<vmem>>, vector<1x4x128xbf16>
    %70 = vector.shape_cast %69 : vector<1x4x128xbf16> to vector<4x128xbf16>
    %cst_83 = arith.constant dense<0.000000e+00> : vector<288x128xf32>
    %71 = tpu.matmul %67, %70, %cst_83 {dimension_numbers = #tpu.dot_dimension_numbers<[1], [0], [0], [1], [0, 0, 1, 1], [], []>} : vector<288x4xbf16>, vector<4x128xbf16>, vector<288x128xf32> -> vector<288x128xf32>
    %72 = arith.addf %68, %71 : vector<288x128xf32>
    %c0_84 = arith.constant 0 : index
    %c0_85 = arith.constant 0 : index
    %73 = vector.load %arg6[%c0_84, %c0_85] : memref<288x128xf32, #tpu.memory_space<vmem>>, vector<288x128xf32>
    tpu.vector_store %arg6[%c0_84, %c0_85], %72 {strides = array<i32>} : memref<288x128xf32, #tpu.memory_space<vmem>>, vector<288x128xf32>,
    %c0_86 = arith.constant 0 : index
    %c0_87 = arith.constant 0 : index
    %74 = vector.load %arg6[%c0_86, %c0_87] : memref<288x128xf32, #tpu.memory_space<vmem>>, vector<288x128xf32>
    %c0_88 = arith.constant 0 : index
    %c0_89 = arith.constant 0 : index
    %75 = vector.load %arg4[%c0_88, %c0_89] : memref<1x128xf32, #tpu.memory_space<vmem>>, vector<1x128xf32>
    %76 = vector.broadcast %75 : vector<1x128xf32> to vector<288x128xf32>
    %77 = arith.addf %74, %76 : vector<288x128xf32>
    %c0_90 = arith.constant 0 : index
    %c0_91 = arith.constant 0 : index
    %c0_92 = arith.constant 0 : index
    %78 = vector.load %arg5[%c0_90, %c0_91, %c0_92] : memref<1x288x128xf32, #tpu.memory_space<vmem>>, vector<1x288x128xf32>
    %79 = vector.shape_cast %78 : vector<1x288x128xf32> to vector<288x128xf32>
    %80 = vector.shape_cast %77 : vector<288x128xf32> to vector<1x288x128xf32>
    tpu.vector_store %arg5[%c0_90, %c0_91, %c0_92], %80 {strides = array<i32>} : memref<1x288x128xf32, #tpu.memory_space<vmem>>, vector<1x288x128xf32>,
    return
  }
  func.func @transform_0(%arg0: i32, %arg1: i32) -> (i32, i32, i32) {
    %c0_i32 = arith.constant 0 : i32
    %c0_i32_0 = arith.constant 0 : i32
    %c0_i32_1 = arith.constant 0 : i32
    return %arg0, %c0_i32, %c0_i32_0 : i32, i32, i32
  }
  func.func @transform_1(%arg0: i32, %arg1: i32) -> (i32, i32, i32) {
    %c0_i32 = arith.constant 0 : i32
    %c0_i32_0 = arith.constant 0 : i32
    %c0_i32_1 = arith.constant 0 : i32
    return %c0_i32, %c0_i32_0, %arg1 : i32, i32, i32
  }
  func.func @transform_2(%arg0: i32, %arg1: i32) -> (i32, i32) {
    %c0_i32 = arith.constant 0 : i32
    %c0_i32_0 = arith.constant 0 : i32
    return %c0_i32, %arg1 : i32, i32
  }
  func.func @transform_3(%arg0: i32, %arg1: i32) -> (i32, i32, i32) {
    %c0_i32 = arith.constant 0 : i32
    %c0_i32_0 = arith.constant 0 : i32
    return %arg0, %c0_i32, %arg1 : i32, i32, i32
  }
}

</mosaic_0001>

<llo_original>
// kernel: conv2d_forward.1
$region0: #{conv2d_forward.1}
  #allocation0 [shape = 'u32[]', space=smem, size = 0x4, offset = 0x4, fixed_abs, tag = 'smem constant byte address 0x4 - core index']
  #allocation1 [shape = 'u32[144,128]{1,0:T(1,128)}', space=vmem, size = 0x12000, scoped, tag = 'internal scratch']
  #allocation2 [shape = 'f32[288,128]{1,0:T(8,128)}', space=vmem, size = 0x24000, scoped, tag = 'scratch operand']
  %s0 = inlined_call_operand.vmem [shape: bf16[2,342,4], index: 0, kind: input, shape index: {}]
  %s1 = inlined_call_operand.vmem [shape: bf16[9,4,128], index: 1, kind: input, shape index: {}]
  %s2 = inlined_call_operand.vmem [shape: f32[1,128], index: 2, kind: input, shape index: {}]
  %s3 = inlined_call_operand.vmem [shape: f32[2,288,128], index: 3, kind: output, shape index: {}]
  %s4 = sld [smem:[#allocation0]]
  $region45: #{conv2d_forward.1} parent=0
    _
  %s6 = ssub.s32 1, %s4
  %s7 = scalar_select 0, %s6, %s4
  loop: start=0, step=1, limit=4
  $region2: #{conv2d_forward.1} parent=0 // loop_pre_header
    _
  $region3: #{conv2d_forward.1} parent=0 // loop_header
    %s9 = sphi 0, %s13
    %p10 = scmp.ge.s32.totalorder %s9, 4
    %s16 = sphi 0, %s28
    %s17 = sphi 0, %s24
    %s18 = sphi 0, %s16
    %s19 = sphi 0, %s17
    %s20 = sphi 0, %s18
    %s21 = sphi 0, %s19
    %s31 = sphi 0, %s33
    %s34 = sphi 0, %s31
    %s35 = sphi 0, %s34
    %s51 = sphi 0, %s35
    %s57 = sphi 0, %s59
    %s60 = sphi 0, %s57
    %s61 = sphi 0, %s60
    %s77 = sphi 0, %s61
    %s83 = sphi 0, %s85
    %s86 = sphi 0, %s83
    %s87 = sphi 0, %s86
    %s103 = sphi 0, %s87
    %s111 = sphi 0, %s113
    %s114 = sphi 0, %s111
    %s115 = sphi 0, %s114
    %s131 = sphi 0, %s115
  $region4: #{conv2d_forward.1} parent=0 // loop_header_branch
    %12 = sbr.rel (%p10) target = $region8
  $region5: #{conv2d_forward.1} parent=0 // loop_body
    %s14 = ssub.s32 %s9, 1
    %s15 = ssub.s32 %s9, 2
    %s22 = sadd.s32 1, %s17
    %p23 = scmp.ge.s32.totalorder %s22, 1
    %s24 = scalar_select %p23, 0, %s22
    %s25 = sadd.s32 1, %s16
    %s26 = scalar_select %p23, %s25, %s16
    %p27 = scmp.ge.s32.totalorder %s26, 2
    %s28 = scalar_select %p27, 0, %s26
    %s29 = ssub.s32 %s16, %s28
    %p30 = scmp.eq.s32.totalorder %s29, 0
    %s32 = sadd.s32 %s31, 1
    %s33 = scalar_select %p30, %s31, %s32
    %p36 = pneg %p30
    %p37 = scmp.eq.s32.totalorder %s9, 1
    %p38 = por %p36, %p37
    %p39 = scmp.ne.s32.totalorder %s31, %s34
    %p40 = scmp.eq.s32.totalorder %s9, 0
    %p41 = por %p39, %p40
    %p42 = scmp.ne.s32.totalorder %s31, %s34
    %p43 = scmp.eq.s32.totalorder %s14, 1
    %p44 = por %p42, %p43
    %p45 = scmp.ne.s32.totalorder %s34, %s35
    %p46 = scmp.eq.s32.totalorder %s14, 0
    %p47 = por %p45, %p46
    %p48 = scmp.ne.s32.totalorder %s34, %s35
    %p49 = scmp.eq.s32.totalorder %s15, 1
    %p50 = por %p48, %p49
    %p52 = scmp.ne.s32.totalorder %s35, %s51
    %p53 = scmp.eq.s32.totalorder %s15, 0
    %p54 = por %p52, %p53
    %s55 = ssub.s32 %s17, %s24
    %p56 = scmp.eq.s32.totalorder %s55, 0
    %s58 = sadd.s32 %s57, 1
    %s59 = scalar_select %p56, %s57, %s58
    %p62 = pneg %p56
    %p63 = scmp.eq.s32.totalorder %s9, 1
    %p64 = por %p62, %p63
    %p65 = scmp.ne.s32.totalorder %s57, %s60
    %p66 = scmp.eq.s32.totalorder %s9, 0
    %p67 = por %p65, %p66
    %p68 = scmp.ne.s32.totalorder %s57, %s60
    %p69 = scmp.eq.s32.totalorder %s14, 1
    %p70 = por %p68, %p69
    %p71 = scmp.ne.s32.totalorder %s60, %s61
    %p72 = scmp.eq.s32.totalorder %s14, 0
    %p73 = por %p71, %p72
    %p74 = scmp.ne.s32.totalorder %s60, %s61
    %p75 = scmp.eq.s32.totalorder %s15, 1
    %p76 = por %p74, %p75
    %p78 = scmp.ne.s32.totalorder %s61, %s77
    %p79 = scmp.eq.s32.totalorder %s15, 0
    %p80 = por %p78, %p79
    %s81 = ssub.s32 %s17, %s24
    %p82 = scmp.eq.s32.totalorder %s81, 0
    %s84 = sadd.s32 %s83, 1
    %s85 = scalar_select %p82, %s83, %s84
    %p88 = pneg %p82
    %p89 = scmp.eq.s32.totalorder %s9, 1
    %p90 = por %p88, %p89
    %p91 = scmp.ne.s32.totalorder %s83, %s86
    %p92 = scmp.eq.s32.totalorder %s9, 0
    %p93 = por %p91, %p92
    %p94 = scmp.ne.s32.totalorder %s83, %s86
    %p95 = scmp.eq.s32.totalorder %s14, 1
    %p96 = por %p94, %p95
    %p97 = scmp.ne.s32.totalorder %s86, %s87
    %p98 = scmp.eq.s32.totalorder %s14, 0
    %p99 = por %p97, %p98
    %p100 = scmp.ne.s32.totalorder %s86, %s87
    %p101 = scmp.eq.s32.totalorder %s15, 1
    %p102 = por %p100, %p101
    %p104 = scmp.ne.s32.totalorder %s87, %s103
    %p105 = scmp.eq.s32.totalorder %s15, 0
    %p106 = por %p104, %p105
    %s107 = ssub.s32 %s16, %s28
    %s108 = ssub.s32 %s17, %s24
    %s109 = sor.u32 %s107, %s108
    %p110 = scmp.eq.s32.totalorder %s109, 0
    %s112 = sadd.s32 %s111, 1
    %s113 = scalar_select %p110, %s111, %s112
    %p116 = pneg %p110
    %p117 = scmp.eq.s32.totalorder %s9, 1
    %p118 = por %p116, %p117
    %p119 = scmp.ne.s32.totalorder %s111, %s114
    %p120 = scmp.eq.s32.totalorder %s9, 0
    %p121 = por %p119, %p120
    %p122 = scmp.ne.s32.totalorder %s111, %s114
    %p123 = scmp.eq.s32.totalorder %s14, 1
    %p124 = por %p122, %p123
    %p125 = scmp.ne.s32.totalorder %s114, %s115
    %p126 = scmp.eq.s32.totalorder %s14, 0
    %p127 = por %p125, %p126
    %p128 = scmp.ne.s32.totalorder %s114, %s115
    %p129 = scmp.eq.s32.totalorder %s15, 1
    %p130 = por %p128, %p129
    %p132 = scmp.ne.s32.totalorder %s115, %s131
    %p133 = scmp.eq.s32.totalorder %s15, 0
    %p134 = por %p132, %p133
    %p135 = scmp.le.s32.totalorder 1, %s9
    %p136 = scmp.lt.s32.totalorder %s9, 3
    %p137 = pnand %p135, %p136
    %p138 = pneg %p137
    // Predicated region
    $region9: #{conv2d_forward.1} parent=5 // pred_check
      _
    $region10: #{conv2d_forward.1} parent=5 // pred_check_branch
      %140 = sbr.rel (%p137) target = $region12
    $region11: #{conv2d_forward.1} parent=5 // pred_region
      %s141 = ssub.s32 %s9, 1
      // Predicated region
      $region13: #{conv2d_forward.1} parent=11 // pred_check
        %p142 = pneg %p73
      $region14: #{conv2d_forward.1} parent=11 // pred_check_branch
        %144 = sbr.rel (%p142) target = $region16
      $region15: #{conv2d_forward.1} parent=11 // pred_region
        %p145 = scmp.lt.s32.totalorder %s19, 0
        %s146 = scalar_select %p145, %s19, 0
        %s147 = smul.addr %s146, 2
        %s148 = scalar_lea.vmem %s1, %s147
      $region16: #{conv2d_forward.1} parent=11 // pred_fallthru
        _
      // Predicated region
      $region17: #{conv2d_forward.1} parent=11 // pred_check
        %p149 = pneg %p99
      $region18: #{conv2d_forward.1} parent=11 // pred_check_branch
        %151 = sbr.rel (%p149) target = $region20
      $region19: #{conv2d_forward.1} parent=11 // pred_region
        %p152 = scmp.lt.s32.totalorder %s19, 0
        %s153 = scalar_select %p152, %s19, 0
        %s154 = scalar_lea.vmem %s2, %s153
      $region20: #{conv2d_forward.1} parent=11 // pred_fallthru
        _
    $region12: #{conv2d_forward.1} parent=5 // pred_fallthru
      _
    %p155 = scmp.lt.s32.totalorder %s9, 2
    // Predicated region
    $region21: #{conv2d_forward.1} parent=5 // pred_check
      %p156 = pneg %p155
    $region22: #{conv2d_forward.1} parent=5 // pred_check_branch
      %158 = sbr.rel (%p156) target = $region24
    $region23: #{conv2d_forward.1} parent=5 // pred_region
      // Predicated region
      $region25: #{conv2d_forward.1} parent=23 // pred_check
        %p159 = pneg %p41
      $region26: #{conv2d_forward.1} parent=23 // pred_check_branch
        %161 = sbr.rel (%p159) target = $region28
      $region27: #{conv2d_forward.1} parent=23 // pred_region
        %p162 = scmp.lt.s32.totalorder %s16, 1
        %s163 = scalar_select %p162, %s16, 1
        %s164 = smul.addr %s163, 43
        %s165 = smul.addr %s164, 4
        %s166 = scalar_lea.vmem %s0, %s165
      $region28: #{conv2d_forward.1} parent=23 // pred_fallthru
        _
    $region24: #{conv2d_forward.1} parent=5 // pred_fallthru
      _
    %p167 = scmp.le.s32.totalorder 1, %s9
    %p168 = scmp.lt.s32.totalorder %s9, 3
    %p169 = pnand %p167, %p168
    %p170 = pneg %p169
    // Predicated region
    $region29: #{conv2d_forward.1} parent=5 // pred_check
      _
    $region30: #{conv2d_forward.1} parent=5 // pred_check_branch
      %172 = sbr.rel (%p169) target = $region32
    $region31: #{conv2d_forward.1} parent=5 // pred_region
      %s173 = ssub.s32 %s9, 1
      %p174 = scmp.lt.s32.totalorder %s18, 1
      %s175 = scalar_select %p174, %s18, 1
      %s176 = smul.addr %s175, 43
      %s177 = smul.addr %s176, 4
      %s178 = scalar_lea.vmem %s0, %s177
      %p179 = pneg %p47
      %p180 = pneg %p44
      %p181 = scmp.lt.s32.totalorder %s19, 0
      %s182 = scalar_select %p181, %s19, 0
      %s183 = smul.addr %s182, 2
      %s184 = scalar_lea.vmem %s1, %s183
      %p185 = pneg %p73
      %p186 = pneg %p70
      %p187 = scmp.lt.s32.totalorder %s19, 0
      %s188 = scalar_select %p187, %s19, 0
      %s189 = scalar_lea.vmem %s2, %s188
      %p190 = pneg %p99
      %p191 = pneg %p96
      %p192 = pneg %p127
      %p193 = pneg %p124
      %p194 = scmp.lt.s32.totalorder %s18, 1
      %s195 = scalar_select %p194, %s18, 1
      %p196 = scmp.lt.s32.totalorder %s19, 0
      %s197 = scalar_select %p196, %s19, 0
      %s198 = smul.addr %s195, 36
      %s199 = sadd.s32 %s197, %s198
      %s200 = smul.addr %s199, 8
      %s201 = scalar_lea.vmem %s3, %s200
      %p202 = scmp.lt.s32.totalorder %s18, 1
      %s203 = scalar_select %p202, %s18, 1
      %s204 = smul.addr %s203, 43
      %s205 = smul.addr %s204, 4
      %s206 = scalar_lea.vmem %s0, %s205
      %p207 = scmp.lt.s32.totalorder %s19, 0
      %s208 = scalar_select %p207, %s19, 0
      %s209 = smul.addr %s208, 2
      %s210 = scalar_lea.vmem %s1, %s209
      %p211 = scmp.lt.s32.totalorder %s19, 0
      %s212 = scalar_select %p211, %s19, 0
      %s213 = scalar_lea.vmem %s2, %s212
      %p214 = scmp.lt.s32.totalorder %s18, 1
      %s215 = scalar_select %p214, %s18, 1
      %p216 = scmp.lt.s32.totalorder %s19, 0
      %s217 = scalar_select %p216, %s19, 0
      %s218 = smul.addr %s215, 36
      %s219 = sadd.s32 %s217, %s218
      %s220 = smul.addr %s219, 8
      %s221 = scalar_lea.vmem %s3, %s220
      %223 = vst [vmem:[#allocation2] sm:$0xff] 0.0
      %224 = vst [vmem:[#allocation2 + $0x8] sm:$0xff] 0.0
      %225 = vst [vmem:[#allocation2 + $0x10] sm:$0xff] 0.0
      %226 = vst [vmem:[#allocation2 + $0x18] sm:$0xff] 0.0
      %227 = vst [vmem:[#allocation2 + $0x20] sm:$0xff] 0.0
      %228 = vst [vmem:[#allocation2 + $0x28] sm:$0xff] 0.0
      %229 = vst [vmem:[#allocation2 + $0x30] sm:$0xff] 0.0
      %230 = vst [vmem:[#allocation2 + $0x38] sm:$0xff] 0.0
      %231 = vst [vmem:[#allocation2 + $0x40] sm:$0xff] 0.0
      %232 = vst [vmem:[#allocation2 + $0x48] sm:$0xff] 0.0
      %233 = vst [vmem:[#allocation2 + $0x50] sm:$0xff] 0.0
      %234 = vst [vmem:[#allocation2 + $0x58] sm:$0xff] 0.0
      %235 = vst [vmem:[#allocation2 + $0x60] sm:$0xff] 0.0
      %236 = vst [vmem:[#allocation2 + $0x68] sm:$0xff] 0.0
      %237 = vst [vmem:[#allocation2 + $0x70] sm:$0xff] 0.0
      %238 = vst [vmem:[#allocation2 + $0x78] sm:$0xff] 0.0
      %239 = vst [vmem:[#allocation2 + $0x80] sm:$0xff] 0.0
      %240 = vst [vmem:[#allocation2 + $0x88] sm:$0xff] 0.0
      %241 = vst [vmem:[#allocation2 + $0x90] sm:$0xff] 0.0
      %242 = vst [vmem:[#allocation2 + $0x98] sm:$0xff] 0.0
      %243 = vst [vmem:[#allocation2 + $0xa0] sm:$0xff] 0.0
      %244 = vst [vmem:[#allocation2 + $0xa8] sm:$0xff] 0.0
      %245 = vst [vmem:[#allocation2 + $0xb0] sm:$0xff] 0.0
      %246 = vst [vmem:[#allocation2 + $0xb8] sm:$0xff] 0.0
      %247 = vst [vmem:[#allocation2 + $0xc0] sm:$0xff] 0.0
      %248 = vst [vmem:[#allocation2 + $0xc8] sm:$0xff] 0.0
      %249 = vst [vmem:[#allocation2 + $0xd0] sm:$0xff] 0.0
      %250 = vst [vmem:[#allocation2 + $0xd8] sm:$0xff] 0.0
      %251 = vst [vmem:[#allocation2 + $0xe0] sm:$0xff] 0.0
      %252 = vst [vmem:[#allocation2 + $0xe8] sm:$0xff] 0.0
      %253 = vst [vmem:[#allocation2 + $0xf0] sm:$0xff] 0.0
      %254 = vst [vmem:[#allocation2 + $0xf8] sm:$0xff] 0.0
      %255 = vst [vmem:[#allocation2 + $0x100] sm:$0xff] 0.0
      %256 = vst [vmem:[#allocation2 + $0x108] sm:$0xff] 0.0
      %257 = vst [vmem:[#allocation2 + $0x110] sm:$0xff] 0.0
      %258 = vst [vmem:[#allocation2 + $0x118] sm:$0xff] 0.0
      %v259 = vld [vmem:[%s206] sm:$0xf]
      %v260 = vld [vmem:[%s206 + $0x4] sm:$0xf]
      %v261 = vld [vmem:[%s206 + $0x8] sm:$0xf]
      %v262 = vld [vmem:[%s206 + $0xc] sm:$0xf]
      %v263 = vld [vmem:[%s206 + $0x10] sm:$0xf]
      %v264 = vld [vmem:[%s206 + $0x14] sm:$0xf]
      %v265 = vld [vmem:[%s206 + $0x18] sm:$0xf]
      %v266 = vld [vmem:[%s206 + $0x1c] sm:$0xf]
      %v267 = vld [vmem:[%s206 + $0x20] sm:$0xf]
      %v268 = vld [vmem:[%s206 + $0x24] sm:$0xf]
      %v269 = vld [vmem:[%s206 + $0x28] sm:$0xf]
      %v270 = vld [vmem:[%s206 + $0x2c] sm:$0xf]
      %v271 = vld [vmem:[%s206 + $0x30] sm:$0xf]
      %v272 = vld [vmem:[%s206 + $0x34] sm:$0xf]
      %v273 = vld [vmem:[%s206 + $0x38] sm:$0xf]
      %v274 = vld [vmem:[%s206 + $0x3c] sm:$0xf]
      %v275 = vld [vmem:[%s206 + $0x40] sm:$0xf]
      %v276 = vld [vmem:[%s206 + $0x44] sm:$0xf]
      %v277 = vld [vmem:[%s206 + $0x48] sm:$0xf]
      %v278 = vld [vmem:[%s206 + $0x4c] sm:$0xf]
      %v279 = vld [vmem:[%s206 + $0x50] sm:$0xf]
      %v280 = vld [vmem:[%s206 + $0x54] sm:$0xf]
      %v281 = vld [vmem:[%s206 + $0x58] sm:$0xf]
      %v282 = vld [vmem:[%s206 + $0x5c] sm:$0xf]
      %v283 = vld [vmem:[%s206 + $0x60] sm:$0xf]
      %v284 = vld [vmem:[%s206 + $0x64] sm:$0xf]
      %v285 = vld [vmem:[%s206 + $0x68] sm:$0xf]
      %v286 = vld [vmem:[%s206 + $0x6c] sm:$0xf]
      %v287 = vld [vmem:[%s206 + $0x70] sm:$0xf]
      %v288 = vld [vmem:[%s206 + $0x74] sm:$0xf]
      %v289 = vld [vmem:[%s206 + $0x78] sm:$0xf]
      %v290 = vld [vmem:[%s206 + $0x7c] sm:$0xf]
      %v291 = vld [vmem:[%s206 + $0x80] sm:$0xf]
      %v292 = vld [vmem:[%s206 + $0x84] sm:$0xf]
      %v293 = vld [vmem:[%s206 + $0x88] sm:$0xf]
      %v294 = vld [vmem:[%s206 + $0x8c] sm:$0xf]
      %v295 = vld [vmem:[#allocation2] sm:$0xff]
      %v296 = vld [vmem:[#allocation2 + $0x8] sm:$0xff]
      %v297 = vld [vmem:[#allocation2 + $0x10] sm:$0xff]
      %v298 = vld [vmem:[#allocation2 + $0x18] sm:$0xff]
      %v299 = vld [vmem:[#allocation2 + $0x20] sm:$0xff]
      %v300 = vld [vmem:[#allocation2 + $0x28] sm:$0xff]
      %v301 = vld [vmem:[#allocation2 + $0x30] sm:$0xff]
      %v302 = vld [vmem:[#allocation2 + $0x38] sm:$0xff]
      %v303 = vld [vmem:[#allocation2 + $0x40] sm:$0xff]
      %v304 = vld [vmem:[#allocation2 + $0x48] sm:$0xff]
      %v305 = vld [vmem:[#allocation2 + $0x50] sm:$0xff]
      %v306 = vld [vmem:[#allocation2 + $0x58] sm:$0xff]
      %v307 = vld [vmem:[#allocation2 + $0x60] sm:$0xff]
      %v308 = vld [vmem:[#allocation2 + $0x68] sm:$0xff]
      %v309 = vld [vmem:[#allocation2 + $0x70] sm:$0xff]
      %v310 = vld [vmem:[#allocation2 + $0x78] sm:$0xff]
      %v311 = vld [vmem:[#allocation2 + $0x80] sm:$0xff]
      %v312 = vld [vmem:[#allocation2 + $0x88] sm:$0xff]
      %v313 = vld [vmem:[#allocation2 + $0x90] sm:$0xff]
      %v314 = vld [vmem:[#allocation2 + $0x98] sm:$0xff]
      %v315 = vld [vmem:[#allocation2 + $0xa0] sm:$0xff]
      %v316 = vld [vmem:[#allocation2 + $0xa8] sm:$0xff]
      %v317 = vld [vmem:[#allocation2 + $0xb0] sm:$0xff]
      %v318 = vld [vmem:[#allocation2 + $0xb8] sm:$0xff]
      %v319 = vld [vmem:[#allocation2 + $0xc0] sm:$0xff]
      %v320 = vld [vmem:[#allocation2 + $0xc8] sm:$0xff]
      %v321 = vld [vmem:[#allocation2 + $0xd0] sm:$0xff]
      %v322 = vld [vmem:[#allocation2 + $0xd8] sm:$0xff]
      %v323 = vld [vmem:[#allocation2 + $0xe0] sm:$0xff]
      %v324 = vld [vmem:[#allocation2 + $0xe8] sm:$0xff]
      %v325 = vld [vmem:[#allocation2 + $0xf0] sm:$0xff]
      %v326 = vld [vmem:[#allocation2 + $0xf8] sm:$0xff]
      %v327 = vld [vmem:[#allocation2 + $0x100] sm:$0xff]
      %v328 = vld [vmem:[#allocation2 + $0x108] sm:$0xff]
      %v329 = vld [vmem:[#allocation2 + $0x110] sm:$0xff]
      %v330 = vld [vmem:[#allocation2 + $0x118] sm:$0xff]
      %v331 = vld [vmem:[%s210] sm:$0x3]
      %v368 = vunpack.c.l.b16 %v259
      %v369 = vunpack.c.l.b16 %v260
      %v370 = vunpack.c.l.b16 %v261
      %v371 = vunpack.c.l.b16 %v262
      %v372 = vunpack.c.l.b16 %v263
      %v373 = vunpack.c.l.b16 %v264
      %v374 = vunpack.c.l.b16 %v265
      %v375 = vunpack.c.l.b16 %v266
      %v376 = vunpack.c.l.b16 %v267
      %v377 = vunpack.c.l.b16 %v268
      %v378 = vunpack.c.l.b16 %v269
      %v379 = vunpack.c.l.b16 %v270
      %v380 = vunpack.c.l.b16 %v271
      %v381 = vunpack.c.l.b16 %v272
      %v382 = vunpack.c.l.b16 %v273
      %v383 = vunpack.c.l.b16 %v274
      %v384 = vunpack.c.l.b16 %v275
      %v385 = vunpack.c.l.b16 %v276
      %v386 = vunpack.c.l.b16 %v277
      %v387 = vunpack.c.l.b16 %v278
      %v388 = vunpack.c.l.b16 %v279
      %v389 = vunpack.c.l.b16 %v280
      %v390 = vunpack.c.l.b16 %v281
      %v391 = vunpack.c.l.b16 %v282
      %v392 = vunpack.c.l.b16 %v283
      %v393 = vunpack.c.l.b16 %v284
      %v394 = vunpack.c.l.b16 %v285
      %v395 = vunpack.c.l.b16 %v286
      %v396 = vunpack.c.l.b16 %v287
      %v397 = vunpack.c.l.b16 %v288
      %v398 = vunpack.c.l.b16 %v289
      %v399 = vunpack.c.l.b16 %v290
      %v400 = vunpack.c.l.b16 %v291
      %v401 = vunpack.c.l.b16 %v292
      %v402 = vunpack.c.l.b16 %v293
      %v403 = vunpack.c.l.b16 %v294
      %v404 = vpack.c.b16 %v369, %v368
      %v405 = vpack.c.b16 %v371, %v370
      %v406 = vpack.c.b16 %v373, %v372
      %v407 = vpack.c.b16 %v375, %v374
      %v408 = vpack.c.b16 %v377, %v376
      %v409 = vpack.c.b16 %v379, %v378
      %v410 = vpack.c.b16 %v381, %v380
      %v411 = vpack.c.b16 %v383, %v382
      %v412 = vpack.c.b16 %v385, %v384
      %v413 = vpack.c.b16 %v387, %v386
      %v414 = vpack.c.b16 %v389, %v388
      %v415 = vpack.c.b16 %v391, %v390
      %v416 = vpack.c.b16 %v393, %v392
      %v417 = vpack.c.b16 %v395, %v394
      %v418 = vpack.c.b16 %v397, %v396
      %v419 = vpack.c.b16 %v399, %v398
      %v420 = vpack.c.b16 %v401, %v400
      %v421 = vpack.c.b16 %v403, %v402
      %vm422 = vcmask 31744
      %v424 = vsel %vm422, %v404, 0
      %v427 = vsel %vm422, %v405, 0
      %v430 = vsel %vm422, %v406, 0
      %v433 = vsel %vm422, %v407, 0
      %v436 = vsel %vm422, %v408, 0
      %v439 = vsel %vm422, %v409, 0
      %v442 = vsel %vm422, %v410, 0
      %v445 = vsel %vm422, %v411, 0
      %v448 = vsel %vm422, %v412, 0
      %v451 = vsel %vm422, %v413, 0
      %v454 = vsel %vm422, %v414, 0
      %v457 = vsel %vm422, %v415, 0
      %v460 = vsel %vm422, %v416, 0
      %v463 = vsel %vm422, %v417, 0
      %v466 = vsel %vm422, %v418, 0
      %v469 = vsel %vm422, %v419, 0
      %v472 = vsel %vm422, %v420, 0
      %v475 = vsel %vm422, %v421, 0
      %vm477 = vcmask 1041408
      %v479 = vsel %vm477, %v331, 0
      %481 = vmatprep.subr.bf16.mxu0 0
      %482 = vmatpush1.bf16.msra.mxu0 %v479
      %483 = vmatprep.subr.bf16.mxu0 0
      %484 = vmatpush1.bf16.msra.mxu0 0
      %485 = vmatprep.subr.bf16.mxu0 0
      %486 = vmatpush1.bf16.msra.mxu0 0
      %487 = vmatprep.subr.bf16.mxu0 0
      %488 = vmatpush1.bf16.msra.mxu0 0
      %489 = vmatprep.subr.bf16.mxu0 0
      %490 = vmatpush1.bf16.msra.mxu0 0
      %491 = vmatprep.subr.bf16.mxu0 0
      %492 = vmatpush1.bf16.msra.mxu0 0
      %493 = vmatprep.subr.bf16.mxu0 0
      %494 = vmatpush1.bf16.msra.mxu0 0
      %495 = vmatprep.subr.bf16.mxu0 0
      %496 = vmatpush1.bf16.msra.mxu0 0
      %497 = vmatprep.subr.bf16.mxu0 0
      %498 = vmatpush1.bf16.msra.mxu0 0
      %499 = vmatprep.subr.bf16.mxu0 0
      %500 = vmatpush1.bf16.msra.mxu0 0
      %501 = vmatprep.subr.bf16.mxu0 0
      %502 = vmatpush1.bf16.msra.mxu0 0
      %503 = vmatprep.subr.bf16.mxu0 0
      %504 = vmatpush1.bf16.msra.mxu0 0
      %505 = vmatprep.subr.bf16.mxu0 0
      %506 = vmatpush1.bf16.msra.mxu0 0
      %507 = vmatprep.subr.bf16.mxu0 0
      %508 = vmatpush1.bf16.msra.mxu0 0
      %509 = vmatprep.subr.bf16.mxu0 0
      %510 = vmatpush1.bf16.msra.mxu0 0
      %511 = vmatprep.subr.bf16.mxu0 0
      %512 = vmatpush1.bf16.msra.mxu0 0
      %513 = vmatprep.mubr.bf16.mxu0 0
      %514 = vmatmul.mubr.bf16.gmra.mrb[0].mxu0 %v424
      %v515 = vpop.f32.mrb[0].mxu0
      %v516 = vadd.f32 0.0, %v515
      %v517 = vpop.f32.mrb[0].mxu0
      %v518 = vpop.f32.mrb[0].mxu0
      %v519 = vadd.f32 0.0, %v518
      %v520 = vpop.f32.mrb[0].mxu0
      %521 = vmatprep.mubr.bf16.mxu0 0
      %522 = vmatmul.mubr.bf16.gmra.mrb[0].mxu0 %v427
      %v523 = vpop.f32.mrb[0].mxu0
      %v524 = vadd.f32 0.0, %v523
      %v525 = vpop.f32.mrb[0].mxu0
      %v526 = vpop.f32.mrb[0].mxu0
      %v527 = vadd.f32 0.0, %v526
      %v528 = vpop.f32.mrb[0].mxu0
      %529 = vmatprep.mubr.bf16.mxu0 0
      %530 = vmatmul.mubr.bf16.gmra.mrb[0].mxu0 %v430
      %v531 = vpop.f32.mrb[0].mxu0
      %v532 = vadd.f32 0.0, %v531
      %v533 = vpop.f32.mrb[0].mxu0
      %v534 = vpop.f32.mrb[0].mxu0
      %v535 = vadd.f32 0.0, %v534
      %v536 = vpop.f32.mrb[0].mxu0
      %537 = vmatprep.mubr.bf16.mxu0 0
      %538 = vmatmul.mubr.bf16.gmra.mrb[0].mxu0 %v433
      %v539 = vpop.f32.mrb[0].mxu0
      %v540 = vadd.f32 0.0, %v539
      %v541 = vpop.f32.mrb[0].mxu0
      %v542 = vpop.f32.mrb[0].mxu0
      %v543 = vadd.f32 0.0, %v542
      %v544 = vpop.f32.mrb[0].mxu0
      %545 = vmatprep.mubr.bf16.mxu0 0
      %546 = vmatmul.mubr.bf16.gmra.mrb[0].mxu0 %v436
      %v547 = vpop.f32.mrb[0].mxu0
      %v548 = vadd.f32 0.0, %v547
      %v549 = vpop.f32.mrb[0].mxu0
      %v550 = vpop.f32.mrb[0].mxu0
      %v551 = vadd.f32 0.0, %v550
      %v552 = vpop.f32.mrb[0].mxu0
      %553 = vmatprep.mubr.bf16.mxu0 0
      %554 = vmatmul.mubr.bf16.gmra.mrb[0].mxu0 %v439
      %v555 = vpop.f32.mrb[0].mxu0
      %v556 = vadd.f32 0.0, %v555
      %v557 = vpop.f32.mrb[0].mxu0
      %v558 = vpop.f32.mrb[0].mxu0
      %v559 = vadd.f32 0.0, %v558
      %v560 = vpop.f32.mrb[0].mxu0
      %561 = vmatprep.mubr.bf16.mxu0 0
      %562 = vmatmul.mubr.bf16.gmra.mrb[0].mxu0 %v442
      %v563 = vpop.f32.mrb[0].mxu0
      %v564 = vadd.f32 0.0, %v563
      %v565 = vpop.f32.mrb[0].mxu0
      %v566 = vpop.f32.mrb[0].mxu0
      %v567 = vadd.f32 0.0, %v566
      %v568 = vpop.f32.mrb[0].mxu0
      %569 = vmatprep.mubr.bf16.mxu0 0
      %570 = vmatmul.mubr.bf16.gmra.mrb[0].mxu0 %v445
      %v571 = vpop.f32.mrb[0].mxu0
      %v572 = vadd.f32 0.0, %v571
      %v573 = vpop.f32.mrb[0].mxu0
      %v574 = vpop.f32.mrb[0].mxu0
      %v575 = vadd.f32 0.0, %v574
      %v576 = vpop.f32.mrb[0].mxu0
      %577 = vmatprep.mubr.bf16.mxu0 0
      %578 = vmatmul.mubr.bf16.gmra.mrb[0].mxu0 %v448
      %v579 = vpop.f32.mrb[0].mxu0
      %v580 = vadd.f32 0.0, %v579
      %v581 = vpop.f32.mrb[0].mxu0
      %v582 = vpop.f32.mrb[0].mxu0
      %v583 = vadd.f32 0.0, %v582
      %v584 = vpop.f32.mrb[0].mxu0
      %585 = vmatprep.mubr.bf16.mxu0 0
      %586 = vmatmul.mubr.bf16.gmra.mrb[0].mxu0 %v451
      %v587 = vpop.f32.mrb[0].mxu0
      %v588 = vadd.f32 0.0, %v587
      %v589 = vpop.f32.mrb[0].mxu0
      %v590 = vpop.f32.mrb[0].mxu0
      %v591 = vadd.f32 0.0, %v590
      %v592 = vpop.f32.mrb[0].mxu0
      %593 = vmatprep.mubr.bf16.mxu0 0
      %594 = vmatmul.mubr.bf16.gmra.mrb[0].mxu0 %v454
      %v595 = vpop.f32.mrb[0].mxu0
      %v596 = vadd.f32 0.0, %v595
      %v597 = vpop.f32.mrb[0].mxu0
      %v598 = vpop.f32.mrb[0].mxu0
      %v599 = vadd.f32 0.0, %v598
      %v600 = vpop.f32.mrb[0].mxu0
      %601 = vmatprep.mubr.bf16.mxu0 0
      %602 = vmatmul.mubr.bf16.gmra.mrb[0].mxu0 %v457
      %v603 = vpop.f32.mrb[0].mxu0
      %v604 = vadd.f32 0.0, %v603
      %v605 = vpop.f32.mrb[0].mxu0
      %v606 = vpop.f32.mrb[0].mxu0
      %v607 = vadd.f32 0.0, %v606
      %v608 = vpop.f32.mrb[0].mxu0
      %609 = vmatprep.mubr.bf16.mxu0 0
      %610 = vmatmul.mubr.bf16.gmra.mrb[0].mxu0 %v460
      %v611 = vpop.f32.mrb[0].mxu0
      %v612 = vadd.f32 0.0, %v611
      %v613 = vpop.f32.mrb[0].mxu0
      %v614 = vpop.f32.mrb[0].mxu0
      %v615 = vadd.f32 0.0, %v614
      %v616 = vpop.f32.mrb[0].mxu0
      %617 = vmatprep.mubr.bf16.mxu0 0
      %618 = vmatmul.mubr.bf16.gmra.mrb[0].mxu0 %v463
      %v619 = vpop.f32.mrb[0].mxu0
      %v620 = vadd.f32 0.0, %v619
      %v621 = vpop.f32.mrb[0].mxu0
      %v622 = vpop.f32.mrb[0].mxu0
      %v623 = vadd.f32 0.0, %v622
      %v624 = vpop.f32.mrb[0].mxu0
      %625 = vmatprep.mubr.bf16.mxu0 0
      %626 = vmatmul.mubr.bf16.gmra.mrb[0].mxu0 %v466
      %v627 = vpop.f32.mrb[0].mxu0
      %v628 = vadd.f32 0.0, %v627
      %v629 = vpop.f32.mrb[0].mxu0
      %v630 = vpop.f32.mrb[0].mxu0
      %v631 = vadd.f32 0.0, %v630
      %v632 = vpop.f32.mrb[0].mxu0
      %633 = vmatprep.mubr.bf16.mxu0 0
      %634 = vmatmul.mubr.bf16.gmra.mrb[0].mxu0 %v469
      %v635 = vpop.f32.mrb[0].mxu0
      %v636 = vadd.f32 0.0, %v635
      %v637 = vpop.f32.mrb[0].mxu0
      %v638 = vpop.f32.mrb[0].mxu0
      %v639 = vadd.f32 0.0, %v638
      %v640 = vpop.f32.mrb[0].mxu0
      %641 = vmatprep.mubr.bf16.mxu0 0
      %642 = vmatmul.mubr.bf16.gmra.mrb[0].mxu0 %v472
      %v643 = vpop.f32.mrb[0].mxu0
      %v644 = vadd.f32 0.0, %v643
      %v645 = vpop.f32.mrb[0].mxu0
      %v646 = vpop.f32.mrb[0].mxu0
      %v647 = vadd.f32 0.0, %v646
      %v648 = vpop.f32.mrb[0].mxu0
      %649 = vmatprep.mubr.bf16.mxu0 0
      %650 = vmatmul.mubr.bf16.gmra.mrb[0].mxu0 %v475
      %v651 = vpop.f32.mrb[0].mxu0
      %v652 = vadd.f32 0.0, %v651
      %v653 = vpop.f32.mrb[0].mxu0
      %v654 = vpop.f32.mrb[0].mxu0
      %v655 = vadd.f32 0.0, %v654
      %v656 = vpop.f32.mrb[0].mxu0
      %657 = vdwg.mxu0
      %v658 = vadd.f32 %v295, %v516
      %v659 = vadd.f32 %v296, %v519
      %v660 = vadd.f32 %v297, %v524
      %v661 = vadd.f32 %v298, %v527
      %v662 = vadd.f32 %v299, %v532
      %v663 = vadd.f32 %v300, %v535
      %v664 = vadd.f32 %v301, %v540
      %v665 = vadd.f32 %v302, %v543
      %v666 = vadd.f32 %v303, %v548
      %v667 = vadd.f32 %v304, %v551
      %v668 = vadd.f32 %v305, %v556
      %v669 = vadd.f32 %v306, %v559
      %v670 = vadd.f32 %v307, %v564
      %v671 = vadd.f32 %v308, %v567
      %v672 = vadd.f32 %v309, %v572
      %v673 = vadd.f32 %v310, %v575
      %v674 = vadd.f32 %v311, %v580
      %v675 = vadd.f32 %v312, %v583
      %v676 = vadd.f32 %v313, %v588
      %v677 = vadd.f32 %v314, %v591
      %v678 = vadd.f32 %v315, %v596
      %v679 = vadd.f32 %v316, %v599
      %v680 = vadd.f32 %v317, %v604
      %v681 = vadd.f32 %v318, %v607
      %v682 = vadd.f32 %v319, %v612
      %v683 = vadd.f32 %v320, %v615
      %v684 = vadd.f32 %v321, %v620
      %v685 = vadd.f32 %v322, %v623
      %v686 = vadd.f32 %v323, %v628
      %v687 = vadd.f32 %v324, %v631
      %v688 = vadd.f32 %v325, %v636
      %v689 = vadd.f32 %v326, %v639
      %v690 = vadd.f32 %v327, %v644
      %v691 = vadd.f32 %v328, %v647
      %v692 = vadd.f32 %v329, %v652
      %v693 = vadd.f32 %v330, %v655
      %694 = vst [vmem:[#allocation2] sm:$0xff] %v658
      %695 = vst [vmem:[#allocation2 + $0x8] sm:$0xff] %v659
      %696 = vst [vmem:[#allocation2 + $0x10] sm:$0xff] %v660
      %697 = vst [vmem:[#allocation2 + $0x18] sm:$0xff] %v661
      %698 = vst [vmem:[#allocation2 + $0x20] sm:$0xff] %v662
      %699 = vst [vmem:[#allocation2 + $0x28] sm:$0xff] %v663
      %700 = vst [vmem:[#allocation2 + $0x30] sm:$0xff] %v664
      %701 = vst [vmem:[#allocation2 + $0x38] sm:$0xff] %v665
      %702 = vst [vmem:[#allocation2 + $0x40] sm:$0xff] %v666
      %703 = vst [vmem:[#allocation2 + $0x48] sm:$0xff] %v667
      %704 = vst [vmem:[#allocation2 + $0x50] sm:$0xff] %v668
      %705 = vst [vmem:[#allocation2 + $0x58] sm:$0xff] %v669
      %706 = vst [vmem:[#allocation2 + $0x60] sm:$0xff] %v670
      %707 = vst [vmem:[#allocation2 + $0x68] sm:$0xff] %v671
      %708 = vst [vmem:[#allocation2 + $0x70] sm:$0xff] %v672
      %709 = vst [vmem:[#allocation2 + $0x78] sm:$0xff] %v673
      %710 = vst [vmem:[#allocation2 + $0x80] sm:$0xff] %v674
      %711 = vst [vmem:[#allocation2 + $0x88] sm:$0xff] %v675
      %712 = vst [vmem:[#allocation2 + $0x90] sm:$0xff] %v676
      %713 = vst [vmem:[#allocation2 + $0x98] sm:$0xff] %v677
      %714 = vst [vmem:[#allocation2 + $0xa0] sm:$0xff] %v678
      %715 = vst [vmem:[#allocation2 + $0xa8] sm:$0xff] %v679
      %716 = vst [vmem:[#allocation2 + $0xb0] sm:$0xff] %v680
      %717 = vst [vmem:[#allocation2 + $0xb8] sm:$0xff] %v681
      %718 = vst [vmem:[#allocation2 + $0xc0] sm:$0xff] %v682
      %719 = vst [vmem:[#allocation2 + $0xc8] sm:$0xff] %v683
      %720 = vst [vmem:[#allocation2 + $0xd0] sm:$0xff] %v684
      %721 = vst [vmem:[#allocation2 + $0xd8] sm:$0xff] %v685
      %722 = vst [vmem:[#allocation2 + $0xe0] sm:$0xff] %v686
      %723 = vst [vmem:[#allocation2 + $0xe8] sm:$0xff] %v687
      %724 = vst [vmem:[#allocation2 + $0xf0] sm:$0xff] %v688
      %725 = vst [vmem:[#allocation2 + $0xf8] sm:$0xff] %v689
      %726 = vst [vmem:[#allocation2 + $0x100] sm:$0xff] %v690
      %727 = vst [vmem:[#allocation2 + $0x108] sm:$0xff] %v691
      %728 = vst [vmem:[#allocation2 + $0x110] sm:$0xff] %v692
      %729 = vst [vmem:[#allocation2 + $0x118] sm:$0xff] %v693
      %v730 = vld [vmem:[%s206] sm:$0xf]
      %v731 = vld [vmem:[%s206 + $0x4] sm:$0xf]
      %v732 = vld [vmem:[%s206 + $0x8] sm:$0xf]
      %v733 = vld [vmem:[%s206 + $0xc] sm:$0xf]
      %v734 = vld [vmem:[%s206 + $0x10] sm:$0xf]
      %v735 = vld [vmem:[%s206 + $0x14] sm:$0xf]
      %v736 = vld [vmem:[%s206 + $0x18] sm:$0xf]
      %v737 = vld [vmem:[%s206 + $0x1c] sm:$0xf]
      %v738 = vld [vmem:[%s206 + $0x20] sm:$0xf]
      %v739 = vld [vmem:[%s206 + $0x24] sm:$0xf]
      %v740 = vld [vmem:[%s206 + $0x28] sm:$0xf]
      %v741 = vld [vmem:[%s206 + $0x2c] sm:$0xf]
      %v742 = vld [vmem:[%s206 + $0x30] sm:$0xf]
      %v743 = vld [vmem:[%s206 + $0x34] sm:$0xf]
      %v744 = vld [vmem:[%s206 + $0x38] sm:$0xf]
      %v745 = vld [vmem:[%s206 + $0x3c] sm:$0xf]
      %v746 = vld [vmem:[%s206 + $0x40] sm:$0xf]
      %v747 = vld [vmem:[%s206 + $0x44] sm:$0xf]
      %v748 = vld [vmem:[%s206 + $0x48] sm:$0xf]
      %v749 = vld [vmem:[%s206 + $0x4c] sm:$0xf]
      %v750 = vld [vmem:[%s206 + $0x50] sm:$0xf]
      %v751 = vld [vmem:[%s206 + $0x54] sm:$0xf]
      %v752 = vld [vmem:[%s206 + $0x58] sm:$0xf]
      %v753 = vld [vmem:[%s206 + $0x5c] sm:$0xf]
      %v754 = vld [vmem:[%s206 + $0x60] sm:$0xf]
      %v755 = vld [vmem:[%s206 + $0x64] sm:$0xf]
      %v756 = vld [vmem:[%s206 + $0x68] sm:$0xf]
      %v757 = vld [vmem:[%s206 + $0x6c] sm:$0xf]
      %v758 = vld [vmem:[%s206 + $0x70] sm:$0xf]
      %v759 = vld [vmem:[%s206 + $0x74] sm:$0xf]
      %v760 = vld [vmem:[%s206 + $0x78] sm:$0xf]
      %v761 = vld [vmem:[%s206 + $0x7c] sm:$0xf]
      %v762 = vld [vmem:[%s206 + $0x80] sm:$0xf]
      %v763 = vld [vmem:[%s206 + $0x84] sm:$0xf]
      %v764 = vld [vmem:[%s206 + $0x88] sm:$0xf]
      %v765 = vld [vmem:[%s206 + $0x8c] sm:$0xf]
      %v766 = vld [vmem:[%s206 + $0x90] sm:$0x1]
      %v767 = vld [vmem:[#allocation2] sm:$0xff]
      %v768 = vld [vmem:[#allocation2 + $0x8] sm:$0xff]
      %v769 = vld [vmem:[#allocation2 + $0x10] sm:$0xff]
      %v770 = vld [vmem:[#allocation2 + $0x18] sm:$0xff]
      %v771 = vld [vmem:[#allocation2 + $0x20] sm:$0xff]
      %v772 = vld [vmem:[#allocation2 + $0x28] sm:$0xff]
      %v773 = vld [vmem:[#allocation2 + $0x30] sm:$0xff]
      %v774 = vld [vmem:[#allocation2 + $0x38] sm:$0xff]
      %v775 = vld [vmem:[#allocation2 + $0x40] sm:$0xff]
      %v776 = vld [vmem:[#allocation2 + $0x48] sm:$0xff]
      %v777 = vld [vmem:[#allocation2 + $0x50] sm:$0xff]
      %v778 = vld [vmem:[#allocation2 + $0x58] sm:$0xff]
      %v779 = vld [vmem:[#allocation2 + $0x60] sm:$0xff]
      %v780 = vld [vmem:[#allocation2 + $0x68] sm:$0xff]
      %v781 = vld [vmem:[#allocation2 + $0x70] sm:$0xff]
      %v782 = vld [vmem:[#allocation2 + $0x78] sm:$0xff]
      %v783 = vld [vmem:[#allocation2 + $0x80] sm:$0xff]
      %v784 = vld [vmem:[#allocation2 + $0x88] sm:$0xff]
      %v785 = vld [vmem:[#allocation2 + $0x90] sm:$0xff]
      %v786 = vld [vmem:[#allocation2 + $0x98] sm:$0xff]
      %v787 = vld [vmem:[#allocation2 + $0xa0] sm:$0xff]
      %v788 = vld [vmem:[#allocation2 + $0xa8] sm:$0xff]
      %v789 = vld [vmem:[#allocation2 + $0xb0] sm:$0xff]
      %v790 = vld [vmem:[#allocation2 + $0xb8] sm:$0xff]
      %v791 = vld [vmem:[#allocation2 + $0xc0] sm:$0xff]
      %v792 = vld [vmem:[#allocation2 + $0xc8] sm:$0xff]
      %v793 = vld [vmem:[#allocation2 + $0xd0] sm:$0xff]
      %v794 = vld [vmem:[#allocation2 + $0xd8] sm:$0xff]
      %v795 = vld [vmem:[#allocation2 + $0xe0] sm:$0xff]
      %v796 = vld [vmem:[#allocation2 + $0xe8] sm:$0xff]
      %v797 = vld [vmem:[#allocation2 + $0xf0] sm:$0xff]
      %v798 = vld [vmem:[#allocation2 + $0xf8] sm:$0xff]
      %v799 = vld [vmem:[#allocation2 + $0x100] sm:$0xff]
      %v800 = vld [vmem:[#allocation2 + $0x108] sm:$0xff]
      %v801 = vld [vmem:[#allocation2 + $0x110] sm:$0xff]
      %v802 = vld [vmem:[#allocation2 + $0x118] sm:$0xff]
      %s803 = scalar_lea.vmem %s210, 2
      %v804 = vld [vmem:[%s803] sm:$0x3]
      %v842 = vunpack.c.l.b16 %v730
      %v843 = vunpack.c.l.b16 %v731
      %v844 = vunpack.c.l.b16 %v732
      %v845 = vunpack.c.l.b16 %v733
      %v846 = vunpack.c.l.b16 %v734
      %v847 = vunpack.c.l.b16 %v735
      %v848 = vunpack.c.l.b16 %v736
      %v849 = vunpack.c.l.b16 %v737
      %v850 = vunpack.c.l.b16 %v738
      %v851 = vunpack.c.l.b16 %v739
      %v852 = vunpack.c.l.b16 %v740
      %v853 = vunpack.c.l.b16 %v741
      %v854 = vunpack.c.l.b16 %v742
      %v855 = vunpack.c.l.b16 %v743
      %v856 = vunpack.c.l.b16 %v744
      %v857 = vunpack.c.l.b16 %v745
      %v858 = vunpack.c.l.b16 %v746
      %v859 = vunpack.c.l.b16 %v747
      %v860 = vunpack.c.l.b16 %v748
      %v861 = vunpack.c.l.b16 %v749
      %v862 = vunpack.c.l.b16 %v750
      %v863 = vunpack.c.l.b16 %v751
      %v864 = vunpack.c.l.b16 %v752
      %v865 = vunpack.c.l.b16 %v753
      %v866 = vunpack.c.l.b16 %v754
      %v867 = vunpack.c.l.b16 %v755
      %v868 = vunpack.c.l.b16 %v756
      %v869 = vunpack.c.l.b16 %v757
      %v870 = vunpack.c.l.b16 %v758
      %v871 = vunpack.c.l.b16 %v759
      %v872 = vunpack.c.l.b16 %v760
      %v873 = vunpack.c.l.b16 %v761
      %v874 = vunpack.c.l.b16 %v762
      %v875 = vunpack.c.l.b16 %v763
      %v876 = vunpack.c.l.b16 %v764
      %v877 = vunpack.c.l.b16 %v765
      %v878 = vunpack.c.l.b16 %v766
      %v879 = vpack.c.b16 %v843, %v842
      %v880 = vpack.c.b16 %v845, %v844
      %v881 = vpack.c.b16 %v847, %v846
      %v882 = vpack.c.b16 %v849, %v848
      %v883 = vpack.c.b16 %v851, %v850
      %v884 = vpack.c.b16 %v853, %v852
      %v885 = vpack.c.b16 %v855, %v854
      %v886 = vpack.c.b16 %v857, %v856
      %v887 = vpack.c.b16 %v859, %v858
      %v888 = vpack.c.b16 %v861, %v860
      %v889 = vpack.c.b16 %v863, %v862
      %v890 = vpack.c.b16 %v865, %v864
      %v891 = vpack.c.b16 %v867, %v866
      %v892 = vpack.c.b16 %v869, %v868
      %v893 = vpack.c.b16 %v871, %v870
      %v894 = vpack.c.b16 %v873, %v872
      %v895 = vpack.c.b16 %v875, %v874
      %v896 = vpack.c.b16 %v877, %v876
      %v897 = vpack.c.b16 %v878, %v878
      %vm898 = vsmask.f32 7424
      %v900 = vshrl.u32 %v879, 16
      %v902 = vshll.u32 %v879, 16
      %v904 = vrot.slane %v902, 1
      %v905 = vor.u32 %v900, %v904
      %v907 = vshll.u32 %v880, 16
      %v909 = vrot.slane %v907, 1
      %v910 = vsel %vm898, %v905, %v909
      %v911 = vshrl.u32 %v880, 16
      %v913 = vor.u32 %v911, %v909
      %v915 = vshll.u32 %v881, 16
      %v917 = vrot.slane %v915, 1
      %v918 = vsel %vm898, %v913, %v917
      %v919 = vshrl.u32 %v881, 16
      %v921 = vor.u32 %v919, %v917
      %v923 = vshll.u32 %v882, 16
      %v925 = vrot.slane %v923, 1
      %v926 = vsel %vm898, %v921, %v925
      %v927 = vshrl.u32 %v882, 16
      %v929 = vor.u32 %v927, %v925
      %v931 = vshll.u32 %v883, 16
      %v933 = vrot.slane %v931, 1
      %v934 = vsel %vm898, %v929, %v933
      %v935 = vshrl.u32 %v883, 16
      %v937 = vor.u32 %v935, %v933
      %v939 = vshll.u32 %v884, 16
      %v941 = vrot.slane %v939, 1
      %v942 = vsel %vm898, %v937, %v941
      %v943 = vshrl.u32 %v884, 16
      %v945 = vor.u32 %v943, %v941
      %v947 = vshll.u32 %v885, 16
      %v949 = vrot.slane %v947, 1
      %v950 = vsel %vm898, %v945, %v949
      %v951 = vshrl.u32 %v885, 16
      %v953 = vor.u32 %v951, %v949
      %v955 = vshll.u32 %v886, 16
      %v957 = vrot.slane %v955, 1
      %v958 = vsel %vm898, %v953, %v957
      %v959 = vshrl.u32 %v886, 16
      %v961 = vor.u32 %v959, %v957
      %v963 = vshll.u32 %v887, 16
      %v965 = vrot.slane %v963, 1
      %v966 = vsel %vm898, %v961, %v965
      %v967 = vshrl.u32 %v887, 16
      %v969 = vor.u32 %v967, %v965
      %v971 = vshll.u32 %v888, 16
      %v973 = vrot.slane %v971, 1
      %v974 = vsel %vm898, %v969, %v973
      %v975 = vshrl.u32 %v888, 16
      %v977 = vor.u32 %v975, %v973
      %v979 = vshll.u32 %v889, 16
      %v981 = vrot.slane %v979, 1
      %v982 = vsel %vm898, %v977, %v981
      %v983 = vshrl.u32 %v889, 16
      %v985 = vor.u32 %v983, %v981
      %v987 = vshll.u32 %v890, 16
      %v989 = vrot.slane %v987, 1
      %v990 = vsel %vm898, %v985, %v989
      %v991 = vshrl.u32 %v890, 16
      %v993 = vor.u32 %v991, %v989
      %v995 = vshll.u32 %v891, 16
      %v997 = vrot.slane %v995, 1
      %v998 = vsel %vm898, %v993, %v997
      %v999 = vshrl.u32 %v891, 16
      %v1001 = vor.u32 %v999, %v997
      %v1003 = vshll.u32 %v892, 16
      %v1005 = vrot.slane %v1003, 1
      %v1006 = vsel %vm898, %v1001, %v1005
      %v1007 = vshrl.u32 %v892, 16
      %v1009 = vor.u32 %v1007, %v1005
      %v1011 = vshll.u32 %v893, 16
      %v1013 = vrot.slane %v1011, 1
      %v1014 = vsel %vm898, %v1009, %v1013
      %v1015 = vshrl.u32 %v893, 16
      %v1017 = vor.u32 %v1015, %v1013
      %v1019 = vshll.u32 %v894, 16
      %v1021 = vrot.slane %v1019, 1
      %v1022 = vsel %vm898, %v1017, %v1021
      %v1023 = vshrl.u32 %v894, 16
      %v1025 = vor.u32 %v1023, %v1021
      %v1027 = vshll.u32 %v895, 16
      %v1029 = vrot.slane %v1027, 1
      %v1030 = vsel %vm898, %v1025, %v1029
      %v1031 = vshrl.u32 %v895, 16
      %v1033 = vor.u32 %v1031, %v1029
      %v1035 = vshll.u32 %v896, 16
      %v1037 = vrot.slane %v1035, 1
      %v1038 = vsel %vm898, %v1033, %v1037
      %v1039 = vshrl.u32 %v896, 16
      %v1041 = vor.u32 %v1039, %v1037
      %v1043 = vshll.u32 %v897, 16
      %v1045 = vrot.slane %v1043, 1
      %v1046 = vsel %vm898, %v1041, %v1045
      %v1048 = vsel %vm422, %v910, 0
      %v1051 = vsel %vm422, %v918, 0
      %v1054 = vsel %vm422, %v926, 0
      %v1057 = vsel %vm422, %v934, 0
      %v1060 = vsel %vm422, %v942, 0
      %v1063 = vsel %vm422, %v950, 0
      %v1066 = vsel %vm422, %v958, 0
      %v1069 = vsel %vm422, %v966, 0
      %v1072 = vsel %vm422, %v974, 0
      %v1075 = vsel %vm422, %v982, 0
      %v1078 = vsel %vm422, %v990, 0
      %v1081 = vsel %vm422, %v998, 0
      %v1084 = vsel %vm422, %v1006, 0
      %v1087 = vsel %vm422, %v1014, 0
      %v1090 = vsel %vm422, %v1022, 0
      %v1093 = vsel %vm422, %v1030, 0
      %v1096 = vsel %vm422, %v1038, 0
      %v1099 = vsel %vm422, %v1046, 0
      %v1102 = vsel %vm477, %v804, 0
      %1104 = vmatprep.subr.bf16.mxu0 0
      %1105 = vmatpush1.bf16.msra.mxu0 %v1102
      %1106 = vmatprep.subr.bf16.mxu0 0
      %1107 = vmatpush1.bf16.msra.mxu0 0
      %1108 = vmatprep.subr.bf16.mxu0 0
      %1109 = vmatpush1.bf16.msra.mxu0 0
      %1110 = vmatprep.subr.bf16.mxu0 0
      %1111 = vmatpush1.bf16.msra.mxu0 0
      %1112 = vmatprep.subr.bf16.mxu0 0
      %1113 = vmatpush1.bf16.msra.mxu0 0
      %1114 = vmatprep.subr.bf16.mxu0 0
      %1115 = vmatpush1.bf16.msra.mxu0 0
      %1116 = vmatprep.subr.bf16.mxu0 0
      %1117 = vmatpush1.bf16.msra.mxu0 0
      %1118 = vmatprep.subr.bf16.mxu0 0
      %1119 = vmatpush1.bf16.msra.mxu0 0
      %1120 = vmatprep.subr.bf16.mxu0 0
      %1121 = vmatpush1.bf16.msra.mxu0 0
      %1122 = vmatprep.subr.bf16.mxu0 0
      %1123 = vmatpush1.bf16.msra.mxu0 0
      %1124 = vmatprep.subr.bf16.mxu0 0
      %1125 = vmatpush1.bf16.msra.mxu0 0
      %1126 = vmatprep.subr.bf16.mxu0 0
      %1127 = vmatpush1.bf16.msra.mxu0 0
      %1128 = vmatprep.subr.bf16.mxu0 0
      %1129 = vmatpush1.bf16.msra.mxu0 0
      %1130 = vmatprep.subr.bf16.mxu0 0
      %1131 = vmatpush1.bf16.msra.mxu0 0
      %1132 = vmatprep.subr.bf16.mxu0 0
      %1133 = vmatpush1.bf16.msra.mxu0 0
      %1134 = vmatprep.subr.bf16.mxu0 0
      %1135 = vmatpush1.bf16.msra.mxu0 0
      %1136 = vmatprep.mubr.bf16.mxu0 0
      %1137 = vmatmul.mubr.bf16.gmra.mrb[0].mxu0 %v1048
      %v1138 = vpop.f32.mrb[0].mxu0
      %v1139 = vadd.f32 0.0, %v1138
      %v1140 = vpop.f32.mrb[0].mxu0
      %v1141 = vpop.f32.mrb[0].mxu0
      %v1142 = vadd.f32 0.0, %v1141
      %v1143 = vpop.f32.mrb[0].mxu0
      %1144 = vmatprep.mubr.bf16.mxu0 0
      %1145 = vmatmul.mubr.bf16.gmra.mrb[0].mxu0 %v1051
      %v1146 = vpop.f32.mrb[0].mxu0
      %v1147 = vadd.f32 0.0, %v1146
      %v1148 = vpop.f32.mrb[0].mxu0
      %v1149 = vpop.f32.mrb[0].mxu0
      %v1150 = vadd.f32 0.0, %v1149
      %v1151 = vpop.f32.mrb[0].mxu0
      %1152 = vmatprep.mubr.bf16.mxu0 0
      %1153 = vmatmul.mubr.bf16.gmra.mrb[0].mxu0 %v1054
      %v1154 = vpop.f32.mrb[0].mxu0
      %v1155 = vadd.f32 0.0, %v1154
      %v1156 = vpop.f32.mrb[0].mxu0
      %v1157 = vpop.f32.mrb[0].mxu0
      %v1158 = vadd.f32 0.0, %v1157
      %v1159 = vpop.f32.mrb[0].mxu0
      %1160 = vmatprep.mubr.bf16.mxu0 0
      %1161 = vmatmul.mubr.bf16.gmra.mrb[0].mxu0 %v1057
      %v1162 = vpop.f32.mrb[0].mxu0
      %v1163 = vadd.f32 0.0, %v1162
      %v1164 = vpop.f32.mrb[0].mxu0
      %v1165 = vpop.f32.mrb[0].mxu0
      %v1166 = vadd.f32 0.0, %v1165
      %v1167 = vpop.f32.mrb[0].mxu0
      %1168 = vmatprep.mubr.bf16.mxu0 0
      %1169 = vmatmul.mubr.bf16.gmra.mrb[0].mxu0 %v1060
      %v1170 = vpop.f32.mrb[0].mxu0
      %v1171 = vadd.f32 0.0, %v1170
      %v1172 = vpop.f32.mrb[0].mxu0
      %v1173 = vpop.f32.mrb[0].mxu0
      %v1174 = vadd.f32 0.0, %v1173
      %v1175 = vpop.f32.mrb[0].mxu0
      %1176 = vmatprep.mubr.bf16.mxu0 0
      %1177 = vmatmul.mubr.bf16.gmra.mrb[0].mxu0 %v1063
      %v1178 = vpop.f32.mrb[0].mxu0
      %v1179 = vadd.f32 0.0, %v1178
      %v1180 = vpop.f32.mrb[0].mxu0
      %v1181 = vpop.f32.mrb[0].mxu0
      %v1182 = vadd.f32 0.0, %v1181
      %v1183 = vpop.f32.mrb[0].mxu0
      %1184 = vmatprep.mubr.bf16.mxu0 0
      %1185 = vmatmul.mubr.bf16.gmra.mrb[0].mxu0 %v1066
      %v1186 = vpop.f32.mrb[0].mxu0
      %v1187 = vadd.f32 0.0, %v1186
      %v1188 = vpop.f32.mrb[0].mxu0
      %v1189 = vpop.f32.mrb[0].mxu0
      %v1190 = vadd.f32 0.0, %v1189
      %v1191 = vpop.f32.mrb[0].mxu0
      %1192 = vmatprep.mubr.bf16.mxu0 0
      %1193 = vmatmul.mubr.bf16.gmra.mrb[0].mxu0 %v1069
      %v1194 = vpop.f32.mrb[0].mxu0
      %v1195 = vadd.f32 0.0, %v1194
      %v1196 = vpop.f32.mrb[0].mxu0
      %v1197 = vpop.f32.mrb[0].mxu0
      %v1198 = vadd.f32 0.0, %v1197
      %v1199 = vpop.f32.mrb[0].mxu0
      %1200 = vmatprep.mubr.bf16.mxu0 0
      %1201 = vmatmul.mubr.bf16.gmra.mrb[0].mxu0 %v1072
      %v1202 = vpop.f32.mrb[0].mxu0
      %v1203 = vadd.f32 0.0, %v1202
      %v1204 = vpop.f32.mrb[0].mxu0
      %v1205 = vpop.f32.mrb[0].mxu0
      %v1206 = vadd.f32 0.0, %v1205
      %v1207 = vpop.f32.mrb[0].mxu0
      %1208 = vmatprep.mubr.bf16.mxu0 0
      %1209 = vmatmul.mubr.bf16.gmra.mrb[0].mxu0 %v1075
      %v1210 = vpop.f32.mrb[0].mxu0
      %v1211 = vadd.f32 0.0, %v1210
      %v1212 = vpop.f32.mrb[0].mxu0
      %v1213 = vpop.f32.mrb[0].mxu0
      %v1214 = vadd.f32 0.0, %v1213
      %v1215 = vpop.f32.mrb[0].mxu0
      %1216 = vmatprep.mubr.bf16.mxu0 0
      %1217 = vmatmul.mubr.bf16.gmra.mrb[0].mxu0 %v1078
      %v1218 = vpop.f32.mrb[0].mxu0
      %v1219 = vadd.f32 0.0, %v1218
      %v1220 = vpop.f32.mrb[0].mxu0
      %v1221 = vpop.f32.mrb[0].mxu0
      %v1222 = vadd.f32 0.0, %v1221
      %v1223 = vpop.f32.mrb[0].mxu0
      %1224 = vmatprep.mubr.bf16.mxu0 0
      %1225 = vmatmul.mubr.bf16.gmra.mrb[0].mxu0 %v1081
      %v1226 = vpop.f32.mrb[0].mxu0
      %v1227 = vadd.f32 0.0, %v1226
      %v1228 = vpop.f32.mrb[0].mxu0
      %v1229 = vpop.f32.mrb[0].mxu0
      %v1230 = vadd.f32 0.0, %v1229
      %v1231 = vpop.f32.mrb[0].mxu0
      %1232 = vmatprep.mubr.bf16.mxu0 0
      %1233 = vmatmul.mubr.bf16.gmra.mrb[0].mxu0 %v1084
      %v1234 = vpop.f32.mrb[0].mxu0
      %v1235 = vadd.f32 0.0, %v1234
      %v1236 = vpop.f32.mrb[0].mxu0
      %v1237 = vpop.f32.mrb[0].mxu0
      %v1238 = vadd.f32 0.0, %v1237
      %v1239 = vpop.f32.mrb[0].mxu0
      %1240 = vmatprep.mubr.bf16.mxu0 0
      %1241 = vmatmul.mubr.bf16.gmra.mrb[0].mxu0 %v1087
      %v1242 = vpop.f32.mrb[0].mxu0
      %v1243 = vadd.f32 0.0, %v1242
      %v1244 = vpop.f32.mrb[0].mxu0
      %v1245 = vpop.f32.mrb[0].mxu0
      %v1246 = vadd.f32 0.0, %v1245
      %v1247 = vpop.f32.mrb[0].mxu0
      %1248 = vmatprep.mubr.bf16.mxu0 0
      %1249 = vmatmul.mubr.bf16.gmra.mrb[0].mxu0 %v1090
      %v1250 = vpop.f32.mrb[0].mxu0
      %v1251 = vadd.f32 0.0, %v1250
      %v1252 = vpop.f32.mrb[0].mxu0
      %v1253 = vpop.f32.mrb[0].mxu0
      %v1254 = vadd.f32 0.0, %v1253
      %v1255 = vpop.f32.mrb[0].mxu0
      %1256 = vmatprep.mubr.bf16.mxu0 0
      %1257 = vmatmul.mubr.bf16.gmra.mrb[0].mxu0 %v1093
      %v1258 = vpop.f32.mrb[0].mxu0
      %v1259 = vadd.f32 0.0, %v1258
      %v1260 = vpop.f32.mrb[0].mxu0
      %v1261 = vpop.f32.mrb[0].mxu0
      %v1262 = vadd.f32 0.0, %v1261
      %v1263 = vpop.f32.mrb[0].mxu0
      %1264 = vmatprep.mubr.bf16.mxu0 0
      %1265 = vmatmul.mubr.bf16.gmra.mrb[0].mxu0 %v1096
      %v1266 = vpop.f32.mrb[0].mxu0
      %v1267 = vadd.f32 0.0, %v1266
      %v1268 = vpop.f32.mrb[0].mxu0
      %v1269 = vpop.f32.mrb[0].mxu0
      %v1270 = vadd.f32 0.0, %v1269
      %v1271 = vpop.f32.mrb[0].mxu0
      %1272 = vmatprep.mubr.bf16.mxu0 0
      %1273 = vmatmul.mubr.bf16.gmra.mrb[0].mxu0 %v1099
      %v1274 = vpop.f32.mrb[0].mxu0
      %v1275 = vadd.f32 0.0, %v1274
      %v1276 = vpop.f32.mrb[0].mxu0
      %v1277 = vpop.f32.mrb[0].mxu0
      %v1278 = vadd.f32 0.0, %v1277
      %v1279 = vpop.f32.mrb[0].mxu0
      %1280 = vdwg.mxu0
      %v1281 = vadd.f32 %v767, %v1139
      %v1282 = vadd.f32 %v768, %v1142
      %v1283 = vadd.f32 %v769, %v1147
      %v1284 = vadd.f32 %v770, %v1150
      %v1285 = vadd.f32 %v771, %v1155
      %v1286 = vadd.f32 %v772, %v1158
      %v1287 = vadd.f32 %v773, %v1163
      %v1288 = vadd.f32 %v774, %v1166
      %v1289 = vadd.f32 %v775, %v1171
      %v1290 = vadd.f32 %v776, %v1174
      %v1291 = vadd.f32 %v777, %v1179
      %v1292 = vadd.f32 %v778, %v1182
      %v1293 = vadd.f32 %v779, %v1187
      %v1294 = vadd.f32 %v780, %v1190
      %v1295 = vadd.f32 %v781, %v1195
      %v1296 = vadd.f32 %v782, %v1198
      %v1297 = vadd.f32 %v783, %v1203
      %v1298 = vadd.f32 %v784, %v1206
      %v1299 = vadd.f32 %v785, %v1211
      %v1300 = vadd.f32 %v786, %v1214
      %v1301 = vadd.f32 %v787, %v1219
      %v1302 = vadd.f32 %v788, %v1222
      %v1303 = vadd.f32 %v789, %v1227
      %v1304 = vadd.f32 %v790, %v1230
      %v1305 = vadd.f32 %v791, %v1235
      %v1306 = vadd.f32 %v792, %v1238
      %v1307 = vadd.f32 %v793, %v1243
      %v1308 = vadd.f32 %v794, %v1246
      %v1309 = vadd.f32 %v795, %v1251
      %v1310 = vadd.f32 %v796, %v1254
      %v1311 = vadd.f32 %v797, %v1259
      %v1312 = vadd.f32 %v798, %v1262
      %v1313 = vadd.f32 %v799, %v1267
      %v1314 = vadd.f32 %v800, %v1270
      %v1315 = vadd.f32 %v801, %v1275
      %v1316 = vadd.f32 %v802, %v1278
      %1317 = vst [vmem:[#allocation2] sm:$0xff] %v1281
      %1318 = vst [vmem:[#allocation2 + $0x8] sm:$0xff] %v1282
      %1319 = vst [vmem:[#allocation2 + $0x10] sm:$0xff] %v1283
      %1320 = vst [vmem:[#allocation2 + $0x18] sm:$0xff] %v1284
      %1321 = vst [vmem:[#allocation2 + $0x20] sm:$0xff] %v1285
      %1322 = vst [vmem:[#allocation2 + $0x28] sm:$0xff] %v1286
      %1323 = vst [vmem:[#allocation2 + $0x30] sm:$0xff] %v1287
      %1324 = vst [vmem:[#allocation2 + $0x38] sm:$0xff] %v1288
      %1325 = vst [vmem:[#allocation2 + $0x40] sm:$0xff] %v1289
      %1326 = vst [vmem:[#allocation2 + $0x48] sm:$0xff] %v1290
      %1327 = vst [vmem:[#allocation2 + $0x50] sm:$0xff] %v1291
      %1328 = vst [vmem:[#allocation2 + $0x58] sm:$0xff] %v1292
      %1329 = vst [vmem:[#allocation2 + $0x60] sm:$0xff] %v1293
      %1330 = vst [vmem:[#allocation2 + $0x68] sm:$0xff] %v1294
      %1331 = vst [vmem:[#allocation2 + $0x70] sm:$0xff] %v1295
      %1332 = vst [vmem:[#allocation2 + $0x78] sm:$0xff] %v1296
      %1333 = vst [vmem:[#allocation2 + $0x80] sm:$0xff] %v1297
      %1334 = vst [vmem:[#allocation2 + $0x88] sm:$0xff] %v1298
      %1335 = vst [vmem:[#allocation2 + $0x90] sm:$0xff] %v1299
      %1336 = vst [vmem:[#allocation2 + $0x98] sm:$0xff] %v1300
      %1337 = vst [vmem:[#allocation2 + $0xa0] sm:$0xff] %v1301
      %1338 = vst [vmem:[#allocation2 + $0xa8] sm:$0xff] %v1302
      %1339 = vst [vmem:[#allocation2 + $0xb0] sm:$0xff] %v1303
      %1340 = vst [vmem:[#allocation2 + $0xb8] sm:$0xff] %v1304
      %1341 = vst [vmem:[#allocation2 + $0xc0] sm:$0xff] %v1305
      %1342 = vst [vmem:[#allocation2 + $0xc8] sm:$0xff] %v1306
      %1343 = vst [vmem:[#allocation2 + $0xd0] sm:$0xff] %v1307
      %1344 = vst [vmem:[#allocation2 + $0xd8] sm:$0xff] %v1308
      %1345 = vst [vmem:[#allocation2 + $0xe0] sm:$0xff] %v1309
      %1346 = vst [vmem:[#allocation2 + $0xe8] sm:$0xff] %v1310
      %1347 = vst [vmem:[#allocation2 + $0xf0] sm:$0xff] %v1311
      %1348 = vst [vmem:[#allocation2 + $0xf8] sm:$0xff] %v1312
      %1349 = vst [vmem:[#allocation2 + $0x100] sm:$0xff] %v1313
      %1350 = vst [vmem:[#allocation2 + $0x108] sm:$0xff] %v1314
      %1351 = vst [vmem:[#allocation2 + $0x110] sm:$0xff] %v1315
      %1352 = vst [vmem:[#allocation2 + $0x118] sm:$0xff] %v1316
      %v1353 = vld [vmem:[%s206] sm:$0xe]
      %v1354 = vld [vmem:[%s206 + $0x4] sm:$0xf]
      %v1355 = vld [vmem:[%s206 + $0x8] sm:$0xf]
      %v1356 = vld [vmem:[%s206 + $0xc] sm:$0xf]
      %v1357 = vld [vmem:[%s206 + $0x10] sm:$0xf]
      %v1358 = vld [vmem:[%s206 + $0x14] sm:$0xf]
      %v1359 = vld [vmem:[%s206 + $0x18] sm:$0xf]
      %v1360 = vld [vmem:[%s206 + $0x1c] sm:$0xf]
      %v1361 = vld [vmem:[%s206 + $0x20] sm:$0xf]
      %v1362 = vld [vmem:[%s206 + $0x24] sm:$0xf]
      %v1363 = vld [vmem:[%s206 + $0x28] sm:$0xf]
      %v1364 = vld [vmem:[%s206 + $0x2c] sm:$0xf]
      %v1365 = vld [vmem:[%s206 + $0x30] sm:$0xf]
      %v1366 = vld [vmem:[%s206 + $0x34] sm:$0xf]
      %v1367 = vld [vmem:[%s206 + $0x38] sm:$0xf]
      %v1368 = vld [vmem:[%s206 + $0x3c] sm:$0xf]
      %v1369 = vld [vmem:[%s206 + $0x40] sm:$0xf]
      %v1370 = vld [vmem:[%s206 + $0x44] sm:$0xf]
      %v1371 = vld [vmem:[%s206 + $0x48] sm:$0xf]
      %v1372 = vld [vmem:[%s206 + $0x4c] sm:$0xf]
      %v1373 = vld [vmem:[%s206 + $0x50] sm:$0xf]
      %v1374 = vld [vmem:[%s206 + $0x54] sm:$0xf]
      %v1375 = vld [vmem:[%s206 + $0x58] sm:$0xf]
      %v1376 = vld [vmem:[%s206 + $0x5c] sm:$0xf]
      %v1377 = vld [vmem:[%s206 + $0x60] sm:$0xf]
      %v1378 = vld [vmem:[%s206 + $0x64] sm:$0xf]
      %v1379 = vld [vmem:[%s206 + $0x68] sm:$0xf]
      %v1380 = vld [vmem:[%s206 + $0x6c] sm:$0xf]
      %v1381 = vld [vmem:[%s206 + $0x70] sm:$0xf]
      %v1382 = vld [vmem:[%s206 + $0x74] sm:$0xf]
      %v1383 = vld [vmem:[%s206 + $0x78] sm:$0xf]
      %v1384 = vld [vmem:[%s206 + $0x7c] sm:$0xf]
      %v1385 = vld [vmem:[%s206 + $0x80] sm:$0xf]
      %v1386 = vld [vmem:[%s206 + $0x84] sm:$0xf]
      %v1387 = vld [vmem:[%s206 + $0x88] sm:$0xf]
      %v1388 = vld [vmem:[%s206 + $0x8c] sm:$0xf]
      %v1389 = vld [vmem:[%s206 + $0x90] sm:$0x1]
      %v1390 = vld [vmem:[#allocation2] sm:$0xff]
      %v1391 = vld [vmem:[#allocation2 + $0x8] sm:$0xff]
      %v1392 = vld [vmem:[#allocation2 + $0x10] sm:$0xff]
      %v1393 = vld [vmem:[#allocation2 + $0x18] sm:$0xff]
      %v1394 = vld [vmem:[#allocation2 + $0x20] sm:$0xff]
      %v1395 = vld [vmem:[#allocation2 + $0x28] sm:$0xff]
      %v1396 = vld [vmem:[#allocation2 + $0x30] sm:$0xff]
      %v1397 = vld [vmem:[#allocation2 + $0x38] sm:$0xff]
      %v1398 = vld [vmem:[#allocation2 + $0x40] sm:$0xff]
      %v1399 = vld [vmem:[#allocation2 + $0x48] sm:$0xff]
      %v1400 = vld [vmem:[#allocation2 + $0x50] sm:$0xff]
      %v1401 = vld [vmem:[#allocation2 + $0x58] sm:$0xff]
      %v1402 = vld [vmem:[#allocation2 + $0x60] sm:$0xff]
      %v1403 = vld [vmem:[#allocation2 + $0x68] sm:$0xff]
      %v1404 = vld [vmem:[#allocation2 + $0x70] sm:$0xff]
      %v1405 = vld [vmem:[#allocation2 + $0x78] sm:$0xff]
      %v1406 = vld [vmem:[#allocation2 + $0x80] sm:$0xff]
      %v1407 = vld [vmem:[#allocation2 + $0x88] sm:$0xff]
      %v1408 = vld [vmem:[#allocation2 + $0x90] sm:$0xff]
      %v1409 = vld [vmem:[#allocation2 + $0x98] sm:$0xff]
      %v1410 = vld [vmem:[#allocation2 + $0xa0] sm:$0xff]
      %v1411 = vld [vmem:[#allocation2 + $0xa8] sm:$0xff]
      %v1412 = vld [vmem:[#allocation2 + $0xb0] sm:$0xff]
      %v1413 = vld [vmem:[#allocation2 + $0xb8] sm:$0xff]
      %v1414 = vld [vmem:[#allocation2 + $0xc0] sm:$0xff]
      %v1415 = vld [vmem:[#allocation2 + $0xc8] sm:$0xff]
      %v1416 = vld [vmem:[#allocation2 + $0xd0] sm:$0xff]
      %v1417 = vld [vmem:[#allocation2 + $0xd8] sm:$0xff]
      %v1418 = vld [vmem:[#allocation2 + $0xe0] sm:$0xff]
      %v1419 = vld [vmem:[#allocation2 + $0xe8] sm:$0xff]
      %v1420 = vld [vmem:[#allocation2 + $0xf0] sm:$0xff]
      %v1421 = vld [vmem:[#allocation2 + $0xf8] sm:$0xff]
      %v1422 = vld [vmem:[#allocation2 + $0x100] sm:$0xff]
      %v1423 = vld [vmem:[#allocation2 + $0x108] sm:$0xff]
      %v1424 = vld [vmem:[#allocation2 + $0x110] sm:$0xff]
      %v1425 = vld [vmem:[#allocation2 + $0x118] sm:$0xff]
      %s1426 = scalar_lea.vmem %s210, 4
      %v1427 = vld [vmem:[%s1426] sm:$0x3]
      %v1465 = vunpack.c.l.b16 %v1353
      %v1466 = vunpack.c.l.b16 %v1354
      %v1467 = vunpack.c.l.b16 %v1355
      %v1468 = vunpack.c.l.b16 %v1356
      %v1469 = vunpack.c.l.b16 %v1357
      %v1470 = vunpack.c.l.b16 %v1358
      %v1471 = vunpack.c.l.b16 %v1359
      %v1472 = vunpack.c.l.b16 %v1360
      %v1473 = vunpack.c.l.b16 %v1361
      %v1474 = vunpack.c.l.b16 %v1362
      %v1475 = vunpack.c.l.b16 %v1363
      %v1476 = vunpack.c.l.b16 %v1364
      %v1477 = vunpack.c.l.b16 %v1365
      %v1478 = vunpack.c.l.b16 %v1366
      %v1479 = vunpack.c.l.b16 %v1367
      %v1480 = vunpack.c.l.b16 %v1368
      %v1481 = vunpack.c.l.b16 %v1369
      %v1482 = vunpack.c.l.b16 %v1370
      %v1483 = vunpack.c.l.b16 %v1371
      %v1484 = vunpack.c.l.b16 %v1372
      %v1485 = vunpack.c.l.b16 %v1373
      %v1486 = vunpack.c.l.b16 %v1374
      %v1487 = vunpack.c.l.b16 %v1375
      %v1488 = vunpack.c.l.b16 %v1376
      %v1489 = vunpack.c.l.b16 %v1377
      %v1490 = vunpack.c.l.b16 %v1378
      %v1491 = vunpack.c.l.b16 %v1379
      %v1492 = vunpack.c.l.b16 %v1380
      %v1493 = vunpack.c.l.b16 %v1381
      %v1494 = vunpack.c.l.b16 %v1382
      %v1495 = vunpack.c.l.b16 %v1383
      %v1496 = vunpack.c.l.b16 %v1384
      %v1497 = vunpack.c.l.b16 %v1385
      %v1498 = vunpack.c.l.b16 %v1386
      %v1499 = vunpack.c.l.b16 %v1387
      %v1500 = vunpack.c.l.b16 %v1388
      %v1501 = vunpack.c.l.b16 %v1389
      %v1502 = vpack.c.b16 %v1466, %v1465
      %v1503 = vpack.c.b16 %v1468, %v1467
      %v1504 = vpack.c.b16 %v1470, %v1469
      %v1505 = vpack.c.b16 %v1472, %v1471
      %v1506 = vpack.c.b16 %v1474, %v1473
      %v1507 = vpack.c.b16 %v1476, %v1475
      %v1508 = vpack.c.b16 %v1478, %v1477
      %v1509 = vpack.c.b16 %v1480, %v1479
      %v1510 = vpack.c.b16 %v1482, %v1481
      %v1511 = vpack.c.b16 %v1484, %v1483
      %v1512 = vpack.c.b16 %v1486, %v1485
      %v1513 = vpack.c.b16 %v1488, %v1487
      %v1514 = vpack.c.b16 %v1490, %v1489
      %v1515 = vpack.c.b16 %v1492, %v1491
      %v1516 = vpack.c.b16 %v1494, %v1493
      %v1517 = vpack.c.b16 %v1496, %v1495
      %v1518 = vpack.c.b16 %v1498, %v1497
      %v1519 = vpack.c.b16 %v1500, %v1499
      %v1520 = vpack.c.b16 %v1501, %v1501
      %vm1521 = vcmask 1046528
      %v1522 = vrot.slane %v1502, 1
      %v1523 = vrot.slane %v1503, 1
      %v1524 = vsel %vm1521, %v1522, %v1523
      %v1525 = vrot.slane %v1504, 1
      %v1526 = vsel %vm1521, %v1523, %v1525
      %v1527 = vrot.slane %v1505, 1
      %v1528 = vsel %vm1521, %v1525, %v1527
      %v1529 = vrot.slane %v1506, 1
      %v1530 = vsel %vm1521, %v1527, %v1529
      %v1531 = vrot.slane %v1507, 1
      %v1532 = vsel %vm1521, %v1529, %v1531
      %v1533 = vrot.slane %v1508, 1
      %v1534 = vsel %vm1521, %v1531, %v1533
      %v1535 = vrot.slane %v1509, 1
      %v1536 = vsel %vm1521, %v1533, %v1535
      %v1537 = vrot.slane %v1510, 1
      %v1538 = vsel %vm1521, %v1535, %v1537
      %v1539 = vrot.slane %v1511, 1
      %v1540 = vsel %vm1521, %v1537, %v1539
      %v1541 = vrot.slane %v1512, 1
      %v1542 = vsel %vm1521, %v1539, %v1541
      %v1543 = vrot.slane %v1513, 1
      %v1544 = vsel %vm1521, %v1541, %v1543
      %v1545 = vrot.slane %v1514, 1
      %v1546 = vsel %vm1521, %v1543, %v1545
      %v1547 = vrot.slane %v1515, 1
      %v1548 = vsel %vm1521, %v1545, %v1547
      %v1549 = vrot.slane %v1516, 1
      %v1550 = vsel %vm1521, %v1547, %v1549
      %v1551 = vrot.slane %v1517, 1
      %v1552 = vsel %vm1521, %v1549, %v1551
      %v1553 = vrot.slane %v1518, 1
      %v1554 = vsel %vm1521, %v1551, %v1553
      %v1555 = vrot.slane %v1519, 1
      %v1556 = vsel %vm1521, %v1553, %v1555
      %v1557 = vrot.slane %v1520, 1
      %v1558 = vsel %vm1521, %v1555, %v1557
      %v1560 = vsel %vm422, %v1524, 0
      %v1563 = vsel %vm422, %v1526, 0
      %v1566 = vsel %vm422, %v1528, 0
      %v1569 = vsel %vm422, %v1530, 0
      %v1572 = vsel %vm422, %v1532, 0
      %v1575 = vsel %vm422, %v1534, 0
      %v1578 = vsel %vm422, %v1536, 0
      %v1581 = vsel %vm422, %v1538, 0
      %v1584 = vsel %vm422, %v1540, 0
      %v1587 = vsel %vm422, %v1542, 0
      %v1590 = vsel %vm422, %v1544, 0
      %v1593 = vsel %vm422, %v1546, 0
      %v1596 = vsel %vm422, %v1548, 0
      %v1599 = vsel %vm422, %v1550, 0
      %v1602 = vsel %vm422, %v1552, 0
      %v1605 = vsel %vm422, %v1554, 0
      %v1608 = vsel %vm422, %v1556, 0
      %v1611 = vsel %vm422, %v1558, 0
      %v1614 = vsel %vm477, %v1427, 0
      %1616 = vmatprep.subr.bf16.mxu0 0
      %1617 = vmatpush1.bf16.msra.mxu0 %v1614
      %1618 = vmatprep.subr.bf16.mxu0 0
      %1619 = vmatpush1.bf16.msra.mxu0 0
      %1620 = vmatprep.subr.bf16.mxu0 0
      %1621 = vmatpush1.bf16.msra.mxu0 0
      %1622 = vmatprep.subr.bf16.mxu0 0
      %1623 = vmatpush1.bf16.msra.mxu0 0
      %1624 = vmatprep.subr.bf16.mxu0 0
      %1625 = vmatpush1.bf16.msra.mxu0 0
      %1626 = vmatprep.subr.bf16.mxu0 0
      %1627 = vmatpush1.bf16.msra.mxu0 0
      %1628 = vmatprep.subr.bf16.mxu0 0
      %1629 = vmatpush1.bf16.msra.mxu0 0
      %1630 = vmatprep.subr.bf16.mxu0 0
      %1631 = vmatpush1.bf16.msra.mxu0 0
      %1632 = vmatprep.subr.bf16.mxu0 0
      %1633 = vmatpush1.bf16.msra.mxu0 0
      %1634 = vmatprep.subr.bf16.mxu0 0
      %1635 = vmatpush1.bf16.msra.mxu0 0
      %1636 = vmatprep.subr.bf16.mxu0 0
      %1637 = vmatpush1.bf16.msra.mxu0 0
      %1638 = vmatprep.subr.bf16.mxu0 0
      %1639 = vmatpush1.bf16.msra.mxu0 0
      %1640 = vmatprep.subr.bf16.mxu0 0
      %1641 = vmatpush1.bf16.msra.mxu0 0
      %1642 = vmatprep.subr.bf16.mxu0 0
      %1643 = vmatpush1.bf16.msra.mxu0 0
      %1644 = vmatprep.subr.bf16.mxu0 0
      %1645 = vmatpush1.bf16.msra.mxu0 0
      %1646 = vmatprep.subr.bf16.mxu0 0
      %1647 = vmatpush1.bf16.msra.mxu0 0
      %1648 = vmatprep.mubr.bf16.mxu0 0
      %1649 = vmatmul.mubr.bf16.gmra.mrb[0].mxu0 %v1560
      %v1650 = vpop.f32.mrb[0].mxu0
      %v1651 = vadd.f32 0.0, %v1650
      %v1652 = vpop.f32.mrb[0].mxu0
      %v1653 = vpop.f32.mrb[0].mxu0
      %v1654 = vadd.f32 0.0, %v1653
      %v1655 = vpop.f32.mrb[0].mxu0
      %1656 = vmatprep.mubr.bf16.mxu0 0
      %1657 = vmatmul.mubr.bf16.gmra.mrb[0].mxu0 %v1563
      %v1658 = vpop.f32.mrb[0].mxu0
      %v1659 = vadd.f32 0.0, %v1658
      %v1660 = vpop.f32.mrb[0].mxu0
      %v1661 = vpop.f32.mrb[0].mxu0
      %v1662 = vadd.f32 0.0, %v1661
      %v1663 = vpop.f32.mrb[0].mxu0
      %1664 = vmatprep.mubr.bf16.mxu0 0
      %1665 = vmatmul.mubr.bf16.gmra.mrb[0].mxu0 %v1566
      %v1666 = vpop.f32.mrb[0].mxu0
      %v1667 = vadd.f32 0.0, %v1666
      %v1668 = vpop.f32.mrb[0].mxu0
      %v1669 = vpop.f32.mrb[0].mxu0
      %v1670 = vadd.f32 0.0, %v1669
      %v1671 = vpop.f32.mrb[0].mxu0
      %1672 = vmatprep.mubr.bf16.mxu0 0
      %1673 = vmatmul.mubr.bf16.gmra.mrb[0].mxu0 %v1569
      %v1674 = vpop.f32.mrb[0].mxu0
      %v1675 = vadd.f32 0.0, %v1674
      %v1676 = vpop.f32.mrb[0].mxu0
      %v1677 = vpop.f32.mrb[0].mxu0
      %v1678 = vadd.f32 0.0, %v1677
      %v1679 = vpop.f32.mrb[0].mxu0
      %1680 = vmatprep.mubr.bf16.mxu0 0
      %1681 = vmatmul.mubr.bf16.gmra.mrb[0].mxu0 %v1572
      %v1682 = vpop.f32.mrb[0].mxu0
      %v1683 = vadd.f32 0.0, %v1682
      %v1684 = vpop.f32.mrb[0].mxu0
      %v1685 = vpop.f32.mrb[0].mxu0
      %v1686 = vadd.f32 0.0, %v1685
      %v1687 = vpop.f32.mrb[0].mxu0
      %1688 = vmatprep.mubr.bf16.mxu0 0
      %1689 = vmatmul.mubr.bf16.gmra.mrb[0].mxu0 %v1575
      %v1690 = vpop.f32.mrb[0].mxu0
      %v1691 = vadd.f32 0.0, %v1690
      %v1692 = vpop.f32.mrb[0].mxu0
      %v1693 = vpop.f32.mrb[0].mxu0
      %v1694 = vadd.f32 0.0, %v1693
      %v1695 = vpop.f32.mrb[0].mxu0
      %1696 = vmatprep.mubr.bf16.mxu0 0
      %1697 = vmatmul.mubr.bf16.gmra.mrb[0].mxu0 %v1578
      %v1698 = vpop.f32.mrb[0].mxu0
      %v1699 = vadd.f32 0.0, %v1698
      %v1700 = vpop.f32.mrb[0].mxu0
      %v1701 = vpop.f32.mrb[0].mxu0
      %v1702 = vadd.f32 0.0, %v1701
      %v1703 = vpop.f32.mrb[0].mxu0
      %1704 = vmatprep.mubr.bf16.mxu0 0
      %1705 = vmatmul.mubr.bf16.gmra.mrb[0].mxu0 %v1581
      %v1706 = vpop.f32.mrb[0].mxu0
      %v1707 = vadd.f32 0.0, %v1706
      %v1708 = vpop.f32.mrb[0].mxu0
      %v1709 = vpop.f32.mrb[0].mxu0
      %v1710 = vadd.f32 0.0, %v1709
      %v1711 = vpop.f32.mrb[0].mxu0
      %1712 = vmatprep.mubr.bf16.mxu0 0
      %1713 = vmatmul.mubr.bf16.gmra.mrb[0].mxu0 %v1584
      %v1714 = vpop.f32.mrb[0].mxu0
      %v1715 = vadd.f32 0.0, %v1714
      %v1716 = vpop.f32.mrb[0].mxu0
      %v1717 = vpop.f32.mrb[0].mxu0
      %v1718 = vadd.f32 0.0, %v1717
      %v1719 = vpop.f32.mrb[0].mxu0
      %1720 = vmatprep.mubr.bf16.mxu0 0
      %1721 = vmatmul.mubr.bf16.gmra.mrb[0].mxu0 %v1587
      %v1722 = vpop.f32.mrb[0].mxu0
      %v1723 = vadd.f32 0.0, %v1722
      %v1724 = vpop.f32.mrb[0].mxu0
      %v1725 = vpop.f32.mrb[0].mxu0
      %v1726 = vadd.f32 0.0, %v1725
      %v1727 = vpop.f32.mrb[0].mxu0
      %1728 = vmatprep.mubr.bf16.mxu0 0
      %1729 = vmatmul.mubr.bf16.gmra.mrb[0].mxu0 %v1590
      %v1730 = vpop.f32.mrb[0].mxu0
      %v1731 = vadd.f32 0.0, %v1730
      %v1732 = vpop.f32.mrb[0].mxu0
      %v1733 = vpop.f32.mrb[0].mxu0
      %v1734 = vadd.f32 0.0, %v1733
      %v1735 = vpop.f32.mrb[0].mxu0
      %1736 = vmatprep.mubr.bf16.mxu0 0
      %1737 = vmatmul.mubr.bf16.gmra.mrb[0].mxu0 %v1593
      %v1738 = vpop.f32.mrb[0].mxu0
      %v1739 = vadd.f32 0.0, %v1738
      %v1740 = vpop.f32.mrb[0].mxu0
      %v1741 = vpop.f32.mrb[0].mxu0
      %v1742 = vadd.f32 0.0, %v1741
      %v1743 = vpop.f32.mrb[0].mxu0
      %1744 = vmatprep.mubr.bf16.mxu0 0
      %1745 = vmatmul.mubr.bf16.gmra.mrb[0].mxu0 %v1596
      %v1746 = vpop.f32.mrb[0].mxu0
      %v1747 = vadd.f32 0.0, %v1746
      %v1748 = vpop.f32.mrb[0].mxu0
      %v1749 = vpop.f32.mrb[0].mxu0
      %v1750 = vadd.f32 0.0, %v1749
      %v1751 = vpop.f32.mrb[0].mxu0
      %1752 = vmatprep.mubr.bf16.mxu0 0
      %1753 = vmatmul.mubr.bf16.gmra.mrb[0].mxu0 %v1599
      %v1754 = vpop.f32.mrb[0].mxu0
      %v1755 = vadd.f32 0.0, %v1754
      %v1756 = vpop.f32.mrb[0].mxu0
      %v1757 = vpop.f32.mrb[0].mxu0
      %v1758 = vadd.f32 0.0, %v1757
      %v1759 = vpop.f32.mrb[0].mxu0
      %1760 = vmatprep.mubr.bf16.mxu0 0
      %1761 = vmatmul.mubr.bf16.gmra.mrb[0].mxu0 %v1602
      %v1762 = vpop.f32.mrb[0].mxu0
      %v1763 = vadd.f32 0.0, %v1762
      %v1764 = vpop.f32.mrb[0].mxu0
      %v1765 = vpop.f32.mrb[0].mxu0
      %v1766 = vadd.f32 0.0, %v1765
      %v1767 = vpop.f32.mrb[0].mxu0
      %1768 = vmatprep.mubr.bf16.mxu0 0
      %1769 = vmatmul.mubr.bf16.gmra.mrb[0].mxu0 %v1605
      %v1770 = vpop.f32.mrb[0].mxu0
      %v1771 = vadd.f32 0.0, %v1770
      %v1772 = vpop.f32.mrb[0].mxu0
      %v1773 = vpop.f32.mrb[0].mxu0
      %v1774 = vadd.f32 0.0, %v1773
      %v1775 = vpop.f32.mrb[0].mxu0
      %1776 = vmatprep.mubr.bf16.mxu0 0
      %1777 = vmatmul.mubr.bf16.gmra.mrb[0].mxu0 %v1608
      %v1778 = vpop.f32.mrb[0].mxu0
      %v1779 = vadd.f32 0.0, %v1778
      %v1780 = vpop.f32.mrb[0].mxu0
      %v1781 = vpop.f32.mrb[0].mxu0
      %v1782 = vadd.f32 0.0, %v1781
      %v1783 = vpop.f32.mrb[0].mxu0
      %1784 = vmatprep.mubr.bf16.mxu0 0
      %1785 = vmatmul.mubr.bf16.gmra.mrb[0].mxu0 %v1611
      %v1786 = vpop.f32.mrb[0].mxu0
      %v1787 = vadd.f32 0.0, %v1786
      %v1788 = vpop.f32.mrb[0].mxu0
      %v1789 = vpop.f32.mrb[0].mxu0
      %v1790 = vadd.f32 0.0, %v1789
      %v1791 = vpop.f32.mrb[0].mxu0
      %1792 = vdwg.mxu0
      %v1793 = vadd.f32 %v1390, %v1651
      %v1794 = vadd.f32 %v1391, %v1654
      %v1795 = vadd.f32 %v1392, %v1659
      %v1796 = vadd.f32 %v1393, %v1662
      %v1797 = vadd.f32 %v1394, %v1667
      %v1798 = vadd.f32 %v1395, %v1670
      %v1799 = vadd.f32 %v1396, %v1675
      %v1800 = vadd.f32 %v1397, %v1678
      %v1801 = vadd.f32 %v1398, %v1683
      %v1802 = vadd.f32 %v1399, %v1686
      %v1803 = vadd.f32 %v1400, %v1691
      %v1804 = vadd.f32 %v1401, %v1694
      %v1805 = vadd.f32 %v1402, %v1699
      %v1806 = vadd.f32 %v1403, %v1702
      %v1807 = vadd.f32 %v1404, %v1707
      %v1808 = vadd.f32 %v1405, %v1710
      %v1809 = vadd.f32 %v1406, %v1715
      %v1810 = vadd.f32 %v1407, %v1718
      %v1811 = vadd.f32 %v1408, %v1723
      %v1812 = vadd.f32 %v1409, %v1726
      %v1813 = vadd.f32 %v1410, %v1731
      %v1814 = vadd.f32 %v1411, %v1734
      %v1815 = vadd.f32 %v1412, %v1739
      %v1816 = vadd.f32 %v1413, %v1742
      %v1817 = vadd.f32 %v1414, %v1747
      %v1818 = vadd.f32 %v1415, %v1750
      %v1819 = vadd.f32 %v1416, %v1755
      %v1820 = vadd.f32 %v1417, %v1758
      %v1821 = vadd.f32 %v1418, %v1763
      %v1822 = vadd.f32 %v1419, %v1766
      %v1823 = vadd.f32 %v1420, %v1771
      %v1824 = vadd.f32 %v1421, %v1774
      %v1825 = vadd.f32 %v1422, %v1779
      %v1826 = vadd.f32 %v1423, %v1782
      %v1827 = vadd.f32 %v1424, %v1787
      %v1828 = vadd.f32 %v1425, %v1790
      %1829 = vst [vmem:[#allocation2] sm:$0xff] %v1793
      %1830 = vst [vmem:[#allocation2 + $0x8] sm:$0xff] %v1794
      %1831 = vst [vmem:[#allocation2 + $0x10] sm:$0xff] %v1795
      %1832 = vst [vmem:[#allocation2 + $0x18] sm:$0xff] %v1796
      %1833 = vst [vmem:[#allocation2 + $0x20] sm:$0xff] %v1797
      %1834 = vst [vmem:[#allocation2 + $0x28] sm:$0xff] %v1798
      %1835 = vst [vmem:[#allocation2 + $0x30] sm:$0xff] %v1799
      %1836 = vst [vmem:[#allocation2 + $0x38] sm:$0xff] %v1800
      %1837 = vst [vmem:[#allocation2 + $0x40] sm:$0xff] %v1801
      %1838 = vst [vmem:[#allocation2 + $0x48] sm:$0xff] %v1802
      %1839 = vst [vmem:[#allocation2 + $0x50] sm:$0xff] %v1803
      %1840 = vst [vmem:[#allocation2 + $0x58] sm:$0xff] %v1804
      %1841 = vst [vmem:[#allocation2 + $0x60] sm:$0xff] %v1805
      %1842 = vst [vmem:[#allocation2 + $0x68] sm:$0xff] %v1806
      %1843 = vst [vmem:[#allocation2 + $0x70] sm:$0xff] %v1807
      %1844 = vst [vmem:[#allocation2 + $0x78] sm:$0xff] %v1808
      %1845 = vst [vmem:[#allocation2 + $0x80] sm:$0xff] %v1809
      %1846 = vst [vmem:[#allocation2 + $0x88] sm:$0xff] %v1810
      %1847 = vst [vmem:[#allocation2 + $0x90] sm:$0xff] %v1811
      %1848 = vst [vmem:[#allocation2 + $0x98] sm:$0xff] %v1812
      %1849 = vst [vmem:[#allocation2 + $0xa0] sm:$0xff] %v1813
      %1850 = vst [vmem:[#allocation2 + $0xa8] sm:$0xff] %v1814
      %1851 = vst [vmem:[#allocation2 + $0xb0] sm:$0xff] %v1815
      %1852 = vst [vmem:[#allocation2 + $0xb8] sm:$0xff] %v1816
      %1853 = vst [vmem:[#allocation2 + $0xc0] sm:$0xff] %v1817
      %1854 = vst [vmem:[#allocation2 + $0xc8] sm:$0xff] %v1818
      %1855 = vst [vmem:[#allocation2 + $0xd0] sm:$0xff] %v1819
      %1856 = vst [vmem:[#allocation2 + $0xd8] sm:$0xff] %v1820
      %1857 = vst [vmem:[#allocation2 + $0xe0] sm:$0xff] %v1821
      %1858 = vst [vmem:[#allocation2 + $0xe8] sm:$0xff] %v1822
      %1859 = vst [vmem:[#allocation2 + $0xf0] sm:$0xff] %v1823
      %1860 = vst [vmem:[#allocation2 + $0xf8] sm:$0xff] %v1824
      %1861 = vst [vmem:[#allocation2 + $0x100] sm:$0xff] %v1825
      %1862 = vst [vmem:[#allocation2 + $0x108] sm:$0xff] %v1826
      %1863 = vst [vmem:[#allocation2 + $0x110] sm:$0xff] %v1827
      %1864 = vst [vmem:[#allocation2 + $0x118] sm:$0xff] %v1828
      %v1865 = vld [vmem:[%s206 + $0x8] sm:$0xe]
      %v1866 = vld [vmem:[%s206 + $0xc] sm:$0xf]
      %v1867 = vld [vmem:[%s206 + $0x10] sm:$0xf]
      %v1868 = vld [vmem:[%s206 + $0x14] sm:$0xf]
      %v1869 = vld [vmem:[%s206 + $0x18] sm:$0xf]
      %v1870 = vld [vmem:[%s206 + $0x1c] sm:$0xf]
      %v1871 = vld [vmem:[%s206 + $0x20] sm:$0xf]
      %v1872 = vld [vmem:[%s206 + $0x24] sm:$0xf]
      %v1873 = vld [vmem:[%s206 + $0x28] sm:$0xf]
      %v1874 = vld [vmem:[%s206 + $0x2c] sm:$0xf]
      %v1875 = vld [vmem:[%s206 + $0x30] sm:$0xf]
      %v1876 = vld [vmem:[%s206 + $0x34] sm:$0xf]
      %v1877 = vld [vmem:[%s206 + $0x38] sm:$0xf]
      %v1878 = vld [vmem:[%s206 + $0x3c] sm:$0xf]
      %v1879 = vld [vmem:[%s206 + $0x40] sm:$0xf]
      %v1880 = vld [vmem:[%s206 + $0x44] sm:$0xf]
      %v1881 = vld [vmem:[%s206 + $0x48] sm:$0xf]
      %v1882 = vld [vmem:[%s206 + $0x4c] sm:$0xf]
      %v1883 = vld [vmem:[%s206 + $0x50] sm:$0xf]
      %v1884 = vld [vmem:[%s206 + $0x54] sm:$0xf]
      %v1885 = vld [vmem:[%s206 + $0x58] sm:$0xf]
      %v1886 = vld [vmem:[%s206 + $0x5c] sm:$0xf]
      %v1887 = vld [vmem:[%s206 + $0x60] sm:$0xf]
      %v1888 = vld [vmem:[%s206 + $0x64] sm:$0xf]
      %v1889 = vld [vmem:[%s206 + $0x68] sm:$0xf]
      %v1890 = vld [vmem:[%s206 + $0x6c] sm:$0xf]
      %v1891 = vld [vmem:[%s206 + $0x70] sm:$0xf]
      %v1892 = vld [vmem:[%s206 + $0x74] sm:$0xf]
      %v1893 = vld [vmem:[%s206 + $0x78] sm:$0xf]
      %v1894 = vld [vmem:[%s206 + $0x7c] sm:$0xf]
      %v1895 = vld [vmem:[%s206 + $0x80] sm:$0xf]
      %v1896 = vld [vmem:[%s206 + $0x84] sm:$0xf]
      %v1897 = vld [vmem:[%s206 + $0x88] sm:$0xf]
      %v1898 = vld [vmem:[%s206 + $0x8c] sm:$0xf]
      %v1899 = vld [vmem:[%s206 + $0x90] sm:$0xf]
      %v1900 = vld [vmem:[%s206 + $0x94] sm:$0xf]
      %v1901 = vld [vmem:[%s206 + $0x98] sm:$0x1]
      %v1902 = vld [vmem:[#allocation2] sm:$0xff]
      %v1903 = vld [vmem:[#allocation2 + $0x8] sm:$0xff]
      %v1904 = vld [vmem:[#allocation2 + $0x10] sm:$0xff]
      %v1905 = vld [vmem:[#allocation2 + $0x18] sm:$0xff]
      %v1906 = vld [vmem:[#allocation2 + $0x20] sm:$0xff]
      %v1907 = vld [vmem:[#allocation2 + $0x28] sm:$0xff]
      %v1908 = vld [vmem:[#allocation2 + $0x30] sm:$0xff]
      %v1909 = vld [vmem:[#allocation2 + $0x38] sm:$0xff]
      %v1910 = vld [vmem:[#allocation2 + $0x40] sm:$0xff]
      %v1911 = vld [vmem:[#allocation2 + $0x48] sm:$0xff]
      %v1912 = vld [vmem:[#allocation2 + $0x50] sm:$0xff]
      %v1913 = vld [vmem:[#allocation2 + $0x58] sm:$0xff]
      %v1914 = vld [vmem:[#allocation2 + $0x60] sm:$0xff]
      %v1915 = vld [vmem:[#allocation2 + $0x68] sm:$0xff]
      %v1916 = vld [vmem:[#allocation2 + $0x70] sm:$0xff]
      %v1917 = vld [vmem:[#allocation2 + $0x78] sm:$0xff]
      %v1918 = vld [vmem:[#allocation2 + $0x80] sm:$0xff]
      %v1919 = vld [vmem:[#allocation2 + $0x88] sm:$0xff]
      %v1920 = vld [vmem:[#allocation2 + $0x90] sm:$0xff]
      %v1921 = vld [vmem:[#allocation2 + $0x98] sm:$0xff]
      %v1922 = vld [vmem:[#allocation2 + $0xa0] sm:$0xff]
      %v1923 = vld [vmem:[#allocation2 + $0xa8] sm:$0xff]
      %v1924 = vld [vmem:[#allocation2 + $0xb0] sm:$0xff]
      %v1925 = vld [vmem:[#allocation2 + $0xb8] sm:$0xff]
      %v1926 = vld [vmem:[#allocation2 + $0xc0] sm:$0xff]
      %v1927 = vld [vmem:[#allocation2 + $0xc8] sm:$0xff]
      %v1928 = vld [vmem:[#allocation2 + $0xd0] sm:$0xff]
      %v1929 = vld [vmem:[#allocation2 + $0xd8] sm:$0xff]
      %v1930 = vld [vmem:[#allocation2 + $0xe0] sm:$0xff]
      %v1931 = vld [vmem:[#allocation2 + $0xe8] sm:$0xff]
      %v1932 = vld [vmem:[#allocation2 + $0xf0] sm:$0xff]
      %v1933 = vld [vmem:[#allocation2 + $0xf8] sm:$0xff]
      %v1934 = vld [vmem:[#allocation2 + $0x100] sm:$0xff]
      %v1935 = vld [vmem:[#allocation2 + $0x108] sm:$0xff]
      %v1936 = vld [vmem:[#allocation2 + $0x110] sm:$0xff]
      %v1937 = vld [vmem:[#allocation2 + $0x118] sm:$0xff]
      %s1938 = scalar_lea.vmem %s210, 6
      %v1939 = vld [vmem:[%s1938] sm:$0x3]
      %v1977 = vunpack.c.l.b16 %v1865
      %v1978 = vunpack.c.l.b16 %v1866
      %v1979 = vunpack.c.l.b16 %v1867
      %v1980 = vunpack.c.l.b16 %v1868
      %v1981 = vunpack.c.l.b16 %v1869
      %v1982 = vunpack.c.l.b16 %v1870
      %v1983 = vunpack.c.l.b16 %v1871
      %v1984 = vunpack.c.l.b16 %v1872
      %v1985 = vunpack.c.l.b16 %v1873
      %v1986 = vunpack.c.l.b16 %v1874
      %v1987 = vunpack.c.l.b16 %v1875
      %v1988 = vunpack.c.l.b16 %v1876
      %v1989 = vunpack.c.l.b16 %v1877
      %v1990 = vunpack.c.l.b16 %v1878
      %v1991 = vunpack.c.l.b16 %v1879
      %v1992 = vunpack.c.l.b16 %v1880
      %v1993 = vunpack.c.l.b16 %v1881
      %v1994 = vunpack.c.l.b16 %v1882
      %v1995 = vunpack.c.l.b16 %v1883
      %v1996 = vunpack.c.l.b16 %v1884
      %v1997 = vunpack.c.l.b16 %v1885
      %v1998 = vunpack.c.l.b16 %v1886
      %v1999 = vunpack.c.l.b16 %v1887
      %v2000 = vunpack.c.l.b16 %v1888
      %v2001 = vunpack.c.l.b16 %v1889
      %v2002 = vunpack.c.l.b16 %v1890
      %v2003 = vunpack.c.l.b16 %v1891
      %v2004 = vunpack.c.l.b16 %v1892
      %v2005 = vunpack.c.l.b16 %v1893
      %v2006 = vunpack.c.l.b16 %v1894
      %v2007 = vunpack.c.l.b16 %v1895
      %v2008 = vunpack.c.l.b16 %v1896
      %v2009 = vunpack.c.l.b16 %v1897
      %v2010 = vunpack.c.l.b16 %v1898
      %v2011 = vunpack.c.l.b16 %v1899
      %v2012 = vunpack.c.l.b16 %v1900
      %v2013 = vunpack.c.l.b16 %v1901
      %v2014 = vpack.c.b16 %v1978, %v1977
      %v2015 = vpack.c.b16 %v1980, %v1979
      %v2016 = vpack.c.b16 %v1982, %v1981
      %v2017 = vpack.c.b16 %v1984, %v1983
      %v2018 = vpack.c.b16 %v1986, %v1985
      %v2019 = vpack.c.b16 %v1988, %v1987
      %v2020 = vpack.c.b16 %v1990, %v1989
      %v2021 = vpack.c.b16 %v1992, %v1991
      %v2022 = vpack.c.b16 %v1994, %v1993
      %v2023 = vpack.c.b16 %v1996, %v1995
      %v2024 = vpack.c.b16 %v1998, %v1997
      %v2025 = vpack.c.b16 %v2000, %v1999
      %v2026 = vpack.c.b16 %v2002, %v2001
      %v2027 = vpack.c.b16 %v2004, %v2003
      %v2028 = vpack.c.b16 %v2006, %v2005
      %v2029 = vpack.c.b16 %v2008, %v2007
      %v2030 = vpack.c.b16 %v2010, %v2009
      %v2031 = vpack.c.b16 %v2012, %v2011
      %v2032 = vpack.c.b16 %v2013, %v2013
      %v2033 = vrot.slane %v2014, 1
      %v2034 = vrot.slane %v2015, 1
      %v2035 = vsel %vm1521, %v2033, %v2034
      %v2036 = vrot.slane %v2016, 1
      %v2037 = vsel %vm1521, %v2034, %v2036
      %v2038 = vrot.slane %v2017, 1
      %v2039 = vsel %vm1521, %v2036, %v2038
      %v2040 = vrot.slane %v2018, 1
      %v2041 = vsel %vm1521, %v2038, %v2040
      %v2042 = vrot.slane %v2019, 1
      %v2043 = vsel %vm1521, %v2040, %v2042
      %v2044 = vrot.slane %v2020, 1
      %v2045 = vsel %vm1521, %v2042, %v2044
      %v2046 = vrot.slane %v2021, 1
      %v2047 = vsel %vm1521, %v2044, %v2046
      %v2048 = vrot.slane %v2022, 1
      %v2049 = vsel %vm1521, %v2046, %v2048
      %v2050 = vrot.slane %v2023, 1
      %v2051 = vsel %vm1521, %v2048, %v2050
      %v2052 = vrot.slane %v2024, 1
      %v2053 = vsel %vm1521, %v2050, %v2052
      %v2054 = vrot.slane %v2025, 1
      %v2055 = vsel %vm1521, %v2052, %v2054
      %v2056 = vrot.slane %v2026, 1
      %v2057 = vsel %vm1521, %v2054, %v2056
      %v2058 = vrot.slane %v2027, 1
      %v2059 = vsel %vm1521, %v2056, %v2058
      %v2060 = vrot.slane %v2028, 1
      %v2061 = vsel %vm1521, %v2058, %v2060
      %v2062 = vrot.slane %v2029, 1
      %v2063 = vsel %vm1521, %v2060, %v2062
      %v2064 = vrot.slane %v2030, 1
      %v2065 = vsel %vm1521, %v2062, %v2064
      %v2066 = vrot.slane %v2031, 1
      %v2067 = vsel %vm1521, %v2064, %v2066
      %v2068 = vrot.slane %v2032, 1
      %v2069 = vsel %vm1521, %v2066, %v2068
      %v2071 = vsel %vm422, %v2035, 0
      %v2074 = vsel %vm422, %v2037, 0
      %v2077 = vsel %vm422, %v2039, 0
      %v2080 = vsel %vm422, %v2041, 0
      %v2083 = vsel %vm422, %v2043, 0
      %v2086 = vsel %vm422, %v2045, 0
      %v2089 = vsel %vm422, %v2047, 0
      %v2092 = vsel %vm422, %v2049, 0
      %v2095 = vsel %vm422, %v2051, 0
      %v2098 = vsel %vm422, %v2053, 0
      %v2101 = vsel %vm422, %v2055, 0
      %v2104 = vsel %vm422, %v2057, 0
      %v2107 = vsel %vm422, %v2059, 0
      %v2110 = vsel %vm422, %v2061, 0
      %v2113 = vsel %vm422, %v2063, 0
      %v2116 = vsel %vm422, %v2065, 0
      %v2119 = vsel %vm422, %v2067, 0
      %v2122 = vsel %vm422, %v2069, 0
      %v2125 = vsel %vm477, %v1939, 0
      %2127 = vmatprep.subr.bf16.mxu0 0
      %2128 = vmatpush1.bf16.msra.mxu0 %v2125
      %2129 = vmatprep.subr.bf16.mxu0 0
      %2130 = vmatpush1.bf16.msra.mxu0 0
      %2131 = vmatprep.subr.bf16.mxu0 0
      %2132 = vmatpush1.bf16.msra.mxu0 0
      %2133 = vmatprep.subr.bf16.mxu0 0
      %2134 = vmatpush1.bf16.msra.mxu0 0
      %2135 = vmatprep.subr.bf16.mxu0 0
      %2136 = vmatpush1.bf16.msra.mxu0 0
      %2137 = vmatprep.subr.bf16.mxu0 0
      %2138 = vmatpush1.bf16.msra.mxu0 0
      %2139 = vmatprep.subr.bf16.mxu0 0
      %2140 = vmatpush1.bf16.msra.mxu0 0
      %2141 = vmatprep.subr.bf16.mxu0 0
      %2142 = vmatpush1.bf16.msra.mxu0 0
      %2143 = vmatprep.subr.bf16.mxu0 0
      %2144 = vmatpush1.bf16.msra.mxu0 0
      %2145 = vmatprep.subr.bf16.mxu0 0
      %2146 = vmatpush1.bf16.msra.mxu0 0
      %2147 = vmatprep.subr.bf16.mxu0 0
      %2148 = vmatpush1.bf16.msra.mxu0 0
      %2149 = vmatprep.subr.bf16.mxu0 0
      %2150 = vmatpush1.bf16.msra.mxu0 0
      %2151 = vmatprep.subr.bf16.mxu0 0
      %2152 = vmatpush1.bf16.msra.mxu0 0
      %2153 = vmatprep.subr.bf16.mxu0 0
      %2154 = vmatpush1.bf16.msra.mxu0 0
      %2155 = vmatprep.subr.bf16.mxu0 0
      %2156 = vmatpush1.bf16.msra.mxu0 0
      %2157 = vmatprep.subr.bf16.mxu0 0
      %2158 = vmatpush1.bf16.msra.mxu0 0
      %2159 = vmatprep.mubr.bf16.mxu0 0
      %2160 = vmatmul.mubr.bf16.gmra.mrb[0].mxu0 %v2071
      %v2161 = vpop.f32.mrb[0].mxu0
      %v2162 = vadd.f32 0.0, %v2161
      %v2163 = vpop.f32.mrb[0].mxu0
      %v2164 = vpop.f32.mrb[0].mxu0
      %v2165 = vadd.f32 0.0, %v2164
      %v2166 = vpop.f32.mrb[0].mxu0
      %2167 = vmatprep.mubr.bf16.mxu0 0
      %2168 = vmatmul.mubr.bf16.gmra.mrb[0].mxu0 %v2074
      %v2169 = vpop.f32.mrb[0].mxu0
      %v2170 = vadd.f32 0.0, %v2169
      %v2171 = vpop.f32.mrb[0].mxu0
      %v2172 = vpop.f32.mrb[0].mxu0
      %v2173 = vadd.f32 0.0, %v2172
      %v2174 = vpop.f32.mrb[0].mxu0
      %2175 = vmatprep.mubr.bf16.mxu0 0
      %2176 = vmatmul.mubr.bf16.gmra.mrb[0].mxu0 %v2077
      %v2177 = vpop.f32.mrb[0].mxu0
      %v2178 = vadd.f32 0.0, %v2177
      %v2179 = vpop.f32.mrb[0].mxu0
      %v2180 = vpop.f32.mrb[0].mxu0
      %v2181 = vadd.f32 0.0, %v2180
      %v2182 = vpop.f32.mrb[0].mxu0
      %2183 = vmatprep.mubr.bf16.mxu0 0
      %2184 = vmatmul.mubr.bf16.gmra.mrb[0].mxu0 %v2080
      %v2185 = vpop.f32.mrb[0].mxu0
      %v2186 = vadd.f32 0.0, %v2185
      %v2187 = vpop.f32.mrb[0].mxu0
      %v2188 = vpop.f32.mrb[0].mxu0
      %v2189 = vadd.f32 0.0, %v2188
      %v2190 = vpop.f32.mrb[0].mxu0
      %2191 = vmatprep.mubr.bf16.mxu0 0
      %2192 = vmatmul.mubr.bf16.gmra.mrb[0].mxu0 %v2083
      %v2193 = vpop.f32.mrb[0].mxu0
      %v2194 = vadd.f32 0.0, %v2193
      %v2195 = vpop.f32.mrb[0].mxu0
      %v2196 = vpop.f32.mrb[0].mxu0
      %v2197 = vadd.f32 0.0, %v2196
      %v2198 = vpop.f32.mrb[0].mxu0
      %2199 = vmatprep.mubr.bf16.mxu0 0
      %2200 = vmatmul.mubr.bf16.gmra.mrb[0].mxu0 %v2086
      %v2201 = vpop.f32.mrb[0].mxu0
      %v2202 = vadd.f32 0.0, %v2201
      %v2203 = vpop.f32.mrb[0].mxu0
      %v2204 = vpop.f32.mrb[0].mxu0
      %v2205 = vadd.f32 0.0, %v2204
      %v2206 = vpop.f32.mrb[0].mxu0
      %2207 = vmatprep.mubr.bf16.mxu0 0
      %2208 = vmatmul.mubr.bf16.gmra.mrb[0].mxu0 %v2089
      %v2209 = vpop.f32.mrb[0].mxu0
      %v2210 = vadd.f32 0.0, %v2209
      %v2211 = vpop.f32.mrb[0].mxu0
      %v2212 = vpop.f32.mrb[0].mxu0
      %v2213 = vadd.f32 0.0, %v2212
      %v2214 = vpop.f32.mrb[0].mxu0
      %2215 = vmatprep.mubr.bf16.mxu0 0
      %2216 = vmatmul.mubr.bf16.gmra.mrb[0].mxu0 %v2092
      %v2217 = vpop.f32.mrb[0].mxu0
      %v2218 = vadd.f32 0.0, %v2217
      %v2219 = vpop.f32.mrb[0].mxu0
      %v2220 = vpop.f32.mrb[0].mxu0
      %v2221 = vadd.f32 0.0, %v2220
      %v2222 = vpop.f32.mrb[0].mxu0
      %2223 = vmatprep.mubr.bf16.mxu0 0
      %2224 = vmatmul.mubr.bf16.gmra.mrb[0].mxu0 %v2095
      %v2225 = vpop.f32.mrb[0].mxu0
      %v2226 = vadd.f32 0.0, %v2225
      %v2227 = vpop.f32.mrb[0].mxu0
      %v2228 = vpop.f32.mrb[0].mxu0
      %v2229 = vadd.f32 0.0, %v2228
      %v2230 = vpop.f32.mrb[0].mxu0
      %2231 = vmatprep.mubr.bf16.mxu0 0
      %2232 = vmatmul.mubr.bf16.gmra.mrb[0].mxu0 %v2098
      %v2233 = vpop.f32.mrb[0].mxu0
      %v2234 = vadd.f32 0.0, %v2233
      %v2235 = vpop.f32.mrb[0].mxu0
      %v2236 = vpop.f32.mrb[0].mxu0
      %v2237 = vadd.f32 0.0, %v2236
      %v2238 = vpop.f32.mrb[0].mxu0
      %2239 = vmatprep.mubr.bf16.mxu0 0
      %2240 = vmatmul.mubr.bf16.gmra.mrb[0].mxu0 %v2101
      %v2241 = vpop.f32.mrb[0].mxu0
      %v2242 = vadd.f32 0.0, %v2241
      %v2243 = vpop.f32.mrb[0].mxu0
      %v2244 = vpop.f32.mrb[0].mxu0
      %v2245 = vadd.f32 0.0, %v2244
      %v2246 = vpop.f32.mrb[0].mxu0
      %2247 = vmatprep.mubr.bf16.mxu0 0
      %2248 = vmatmul.mubr.bf16.gmra.mrb[0].mxu0 %v2104
      %v2249 = vpop.f32.mrb[0].mxu0
      %v2250 = vadd.f32 0.0, %v2249
      %v2251 = vpop.f32.mrb[0].mxu0
      %v2252 = vpop.f32.mrb[0].mxu0
      %v2253 = vadd.f32 0.0, %v2252
      %v2254 = vpop.f32.mrb[0].mxu0
      %2255 = vmatprep.mubr.bf16.mxu0 0
      %2256 = vmatmul.mubr.bf16.gmra.mrb[0].mxu0 %v2107
      %v2257 = vpop.f32.mrb[0].mxu0
      %v2258 = vadd.f32 0.0, %v2257
      %v2259 = vpop.f32.mrb[0].mxu0
      %v2260 = vpop.f32.mrb[0].mxu0
      %v2261 = vadd.f32 0.0, %v2260
      %v2262 = vpop.f32.mrb[0].mxu0
      %2263 = vmatprep.mubr.bf16.mxu0 0
      %2264 = vmatmul.mubr.bf16.gmra.mrb[0].mxu0 %v2110
      %v2265 = vpop.f32.mrb[0].mxu0
      %v2266 = vadd.f32 0.0, %v2265
      %v2267 = vpop.f32.mrb[0].mxu0
      %v2268 = vpop.f32.mrb[0].mxu0
      %v2269 = vadd.f32 0.0, %v2268
      %v2270 = vpop.f32.mrb[0].mxu0
      %2271 = vmatprep.mubr.bf16.mxu0 0
      %2272 = vmatmul.mubr.bf16.gmra.mrb[0].mxu0 %v2113
      %v2273 = vpop.f32.mrb[0].mxu0
      %v2274 = vadd.f32 0.0, %v2273
      %v2275 = vpop.f32.mrb[0].mxu0
      %v2276 = vpop.f32.mrb[0].mxu0
      %v2277 = vadd.f32 0.0, %v2276
      %v2278 = vpop.f32.mrb[0].mxu0
      %2279 = vmatprep.mubr.bf16.mxu0 0
      %2280 = vmatmul.mubr.bf16.gmra.mrb[0].mxu0 %v2116
      %v2281 = vpop.f32.mrb[0].mxu0
      %v2282 = vadd.f32 0.0, %v2281
      %v2283 = vpop.f32.mrb[0].mxu0
      %v2284 = vpop.f32.mrb[0].mxu0
      %v2285 = vadd.f32 0.0, %v2284
      %v2286 = vpop.f32.mrb[0].mxu0
      %2287 = vmatprep.mubr.bf16.mxu0 0
      %2288 = vmatmul.mubr.bf16.gmra.mrb[0].mxu0 %v2119
      %v2289 = vpop.f32.mrb[0].mxu0
      %v2290 = vadd.f32 0.0, %v2289
      %v2291 = vpop.f32.mrb[0].mxu0
      %v2292 = vpop.f32.mrb[0].mxu0
      %v2293 = vadd.f32 0.0, %v2292
      %v2294 = vpop.f32.mrb[0].mxu0
      %2295 = vmatprep.mubr.bf16.mxu0 0
      %2296 = vmatmul.mubr.bf16.gmra.mrb[0].mxu0 %v2122
      %v2297 = vpop.f32.mrb[0].mxu0
      %v2298 = vadd.f32 0.0, %v2297
      %v2299 = vpop.f32.mrb[0].mxu0
      %v2300 = vpop.f32.mrb[0].mxu0
      %v2301 = vadd.f32 0.0, %v2300
      %v2302 = vpop.f32.mrb[0].mxu0
      %2303 = vdwg.mxu0
      %v2304 = vadd.f32 %v1902, %v2162
      %v2305 = vadd.f32 %v1903, %v2165
      %v2306 = vadd.f32 %v1904, %v2170
      %v2307 = vadd.f32 %v1905, %v2173
      %v2308 = vadd.f32 %v1906, %v2178
      %v2309 = vadd.f32 %v1907, %v2181
      %v2310 = vadd.f32 %v1908, %v2186
      %v2311 = vadd.f32 %v1909, %v2189
      %v2312 = vadd.f32 %v1910, %v2194
      %v2313 = vadd.f32 %v1911, %v2197
      %v2314 = vadd.f32 %v1912, %v2202
      %v2315 = vadd.f32 %v1913, %v2205
      %v2316 = vadd.f32 %v1914, %v2210
      %v2317 = vadd.f32 %v1915, %v2213
      %v2318 = vadd.f32 %v1916, %v2218
      %v2319 = vadd.f32 %v1917, %v2221
      %v2320 = vadd.f32 %v1918, %v2226
      %v2321 = vadd.f32 %v1919, %v2229
      %v2322 = vadd.f32 %v1920, %v2234
      %v2323 = vadd.f32 %v1921, %v2237
      %v2324 = vadd.f32 %v1922, %v2242
      %v2325 = vadd.f32 %v1923, %v2245
      %v2326 = vadd.f32 %v1924, %v2250
      %v2327 = vadd.f32 %v1925, %v2253
      %v2328 = vadd.f32 %v1926, %v2258
      %v2329 = vadd.f32 %v1927, %v2261
      %v2330 = vadd.f32 %v1928, %v2266
      %v2331 = vadd.f32 %v1929, %v2269
      %v2332 = vadd.f32 %v1930, %v2274
      %v2333 = vadd.f32 %v1931, %v2277
      %v2334 = vadd.f32 %v1932, %v2282
      %v2335 = vadd.f32 %v1933, %v2285
      %v2336 = vadd.f32 %v1934, %v2290
      %v2337 = vadd.f32 %v1935, %v2293
      %v2338 = vadd.f32 %v1936, %v2298
      %v2339 = vadd.f32 %v1937, %v2301
      %2340 = vst [vmem:[#allocation2] sm:$0xff] %v2304
      %2341 = vst [vmem:[#allocation2 + $0x8] sm:$0xff] %v2305
      %2342 = vst [vmem:[#allocation2 + $0x10] sm:$0xff] %v2306
      %2343 = vst [vmem:[#allocation2 + $0x18] sm:$0xff] %v2307
      %2344 = vst [vmem:[#allocation2 + $0x20] sm:$0xff] %v2308
      %2345 = vst [vmem:[#allocation2 + $0x28] sm:$0xff] %v2309
      %2346 = vst [vmem:[#allocation2 + $0x30] sm:$0xff] %v2310
      %2347 = vst [vmem:[#allocation2 + $0x38] sm:$0xff] %v2311
      %2348 = vst [vmem:[#allocation2 + $0x40] sm:$0xff] %v2312
      %2349 = vst [vmem:[#allocation2 + $0x48] sm:$0xff] %v2313
      %2350 = vst [vmem:[#allocation2 + $0x50] sm:$0xff] %v2314
      %2351 = vst [vmem:[#allocation2 + $0x58] sm:$0xff] %v2315
      %2352 = vst [vmem:[#allocation2 + $0x60] sm:$0xff] %v2316
      %2353 = vst [vmem:[#allocation2 + $0x68] sm:$0xff] %v2317
      %2354 = vst [vmem:[#allocation2 + $0x70] sm:$0xff] %v2318
      %2355 = vst [vmem:[#allocation2 + $0x78] sm:$0xff] %v2319
      %2356 = vst [vmem:[#allocation2 + $0x80] sm:$0xff] %v2320
      %2357 = vst [vmem:[#allocation2 + $0x88] sm:$0xff] %v2321
      %2358 = vst [vmem:[#allocation2 + $0x90] sm:$0xff] %v2322
      %2359 = vst [vmem:[#allocation2 + $0x98] sm:$0xff] %v2323
      %2360 = vst [vmem:[#allocation2 + $0xa0] sm:$0xff] %v2324
      %2361 = vst [vmem:[#allocation2 + $0xa8] sm:$0xff] %v2325
      %2362 = vst [vmem:[#allocation2 + $0xb0] sm:$0xff] %v2326
      %2363 = vst [vmem:[#allocation2 + $0xb8] sm:$0xff] %v2327
      %2364 = vst [vmem:[#allocation2 + $0xc0] sm:$0xff] %v2328
      %2365 = vst [vmem:[#allocation2 + $0xc8] sm:$0xff] %v2329
      %2366 = vst [vmem:[#allocation2 + $0xd0] sm:$0xff] %v2330
      %2367 = vst [vmem:[#allocation2 + $0xd8] sm:$0xff] %v2331
      %2368 = vst [vmem:[#allocation2 + $0xe0] sm:$0xff] %v2332
      %2369 = vst [vmem:[#allocation2 + $0xe8] sm:$0xff] %v2333
      %2370 = vst [vmem:[#allocation2 + $0xf0] sm:$0xff] %v2334
      %2371 = vst [vmem:[#allocation2 + $0xf8] sm:$0xff] %v2335
      %2372 = vst [vmem:[#allocation2 + $0x100] sm:$0xff] %v2336
      %2373 = vst [vmem:[#allocation2 + $0x108] sm:$0xff] %v2337
      %2374 = vst [vmem:[#allocation2 + $0x110] sm:$0xff] %v2338
      %2375 = vst [vmem:[#allocation2 + $0x118] sm:$0xff] %v2339
      %v2376 = vld [vmem:[%s206 + $0x8] sm:$0xe]
      %v2377 = vld [vmem:[%s206 + $0xc] sm:$0xf]
      %v2378 = vld [vmem:[%s206 + $0x10] sm:$0xf]
      %v2379 = vld [vmem:[%s206 + $0x14] sm:$0xf]
      %v2380 = vld [vmem:[%s206 + $0x18] sm:$0xf]
      %v2381 = vld [vmem:[%s206 + $0x1c] sm:$0xf]
      %v2382 = vld [vmem:[%s206 + $0x20] sm:$0xf]
      %v2383 = vld [vmem:[%s206 + $0x24] sm:$0xf]
      %v2384 = vld [vmem:[%s206 + $0x28] sm:$0xf]
      %v2385 = vld [vmem:[%s206 + $0x2c] sm:$0xf]
      %v2386 = vld [vmem:[%s206 + $0x30] sm:$0xf]
      %v2387 = vld [vmem:[%s206 + $0x34] sm:$0xf]
      %v2388 = vld [vmem:[%s206 + $0x38] sm:$0xf]
      %v2389 = vld [vmem:[%s206 + $0x3c] sm:$0xf]
      %v2390 = vld [vmem:[%s206 + $0x40] sm:$0xf]
      %v2391 = vld [vmem:[%s206 + $0x44] sm:$0xf]
      %v2392 = vld [vmem:[%s206 + $0x48] sm:$0xf]
      %v2393 = vld [vmem:[%s206 + $0x4c] sm:$0xf]
      %v2394 = vld [vmem:[%s206 + $0x50] sm:$0xf]
      %v2395 = vld [vmem:[%s206 + $0x54] sm:$0xf]
      %v2396 = vld [vmem:[%s206 + $0x58] sm:$0xf]
      %v2397 = vld [vmem:[%s206 + $0x5c] sm:$0xf]
      %v2398 = vld [vmem:[%s206 + $0x60] sm:$0xf]
      %v2399 = vld [vmem:[%s206 + $0x64] sm:$0xf]
      %v2400 = vld [vmem:[%s206 + $0x68] sm:$0xf]
      %v2401 = vld [vmem:[%s206 + $0x6c] sm:$0xf]
      %v2402 = vld [vmem:[%s206 + $0x70] sm:$0xf]
      %v2403 = vld [vmem:[%s206 + $0x74] sm:$0xf]
      %v2404 = vld [vmem:[%s206 + $0x78] sm:$0xf]
      %v2405 = vld [vmem:[%s206 + $0x7c] sm:$0xf]
      %v2406 = vld [vmem:[%s206 + $0x80] sm:$0xf]
      %v2407 = vld [vmem:[%s206 + $0x84] sm:$0xf]
      %v2408 = vld [vmem:[%s206 + $0x88] sm:$0xf]
      %v2409 = vld [vmem:[%s206 + $0x8c] sm:$0xf]
      %v2410 = vld [vmem:[%s206 + $0x90] sm:$0xf]
      %v2411 = vld [vmem:[%s206 + $0x94] sm:$0xf]
      %v2412 = vld [vmem:[%s206 + $0x98] sm:$0x3]
      %v2413 = vld [vmem:[#allocation2] sm:$0xff]
      %v2414 = vld [vmem:[#allocation2 + $0x8] sm:$0xff]
      %v2415 = vld [vmem:[#allocation2 + $0x10] sm:$0xff]
      %v2416 = vld [vmem:[#allocation2 + $0x18] sm:$0xff]
      %v2417 = vld [vmem:[#allocation2 + $0x20] sm:$0xff]
      %v2418 = vld [vmem:[#allocation2 + $0x28] sm:$0xff]
      %v2419 = vld [vmem:[#allocation2 + $0x30] sm:$0xff]
      %v2420 = vld [vmem:[#allocation2 + $0x38] sm:$0xff]
      %v2421 = vld [vmem:[#allocation2 + $0x40] sm:$0xff]
      %v2422 = vld [vmem:[#allocation2 + $0x48] sm:$0xff]
      %v2423 = vld [vmem:[#allocation2 + $0x50] sm:$0xff]
      %v2424 = vld [vmem:[#allocation2 + $0x58] sm:$0xff]
      %v2425 = vld [vmem:[#allocation2 + $0x60] sm:$0xff]
      %v2426 = vld [vmem:[#allocation2 + $0x68] sm:$0xff]
      %v2427 = vld [vmem:[#allocation2 + $0x70] sm:$0xff]
      %v2428 = vld [vmem:[#allocation2 + $0x78] sm:$0xff]
      %v2429 = vld [vmem:[#allocation2 + $0x80] sm:$0xff]
      %v2430 = vld [vmem:[#allocation2 + $0x88] sm:$0xff]
      %v2431 = vld [vmem:[#allocation2 + $0x90] sm:$0xff]
      %v2432 = vld [vmem:[#allocation2 + $0x98] sm:$0xff]
      %v2433 = vld [vmem:[#allocation2 + $0xa0] sm:$0xff]
      %v2434 = vld [vmem:[#allocation2 + $0xa8] sm:$0xff]
      %v2435 = vld [vmem:[#allocation2 + $0xb0] sm:$0xff]
      %v2436 = vld [vmem:[#allocation2 + $0xb8] sm:$0xff]
      %v2437 = vld [vmem:[#allocation2 + $0xc0] sm:$0xff]
      %v2438 = vld [vmem:[#allocation2 + $0xc8] sm:$0xff]
      %v2439 = vld [vmem:[#allocation2 + $0xd0] sm:$0xff]
      %v2440 = vld [vmem:[#allocation2 + $0xd8] sm:$0xff]
      %v2441 = vld [vmem:[#allocation2 + $0xe0] sm:$0xff]
      %v2442 = vld [vmem:[#allocation2 + $0xe8] sm:$0xff]
      %v2443 = vld [vmem:[#allocation2 + $0xf0] sm:$0xff]
      %v2444 = vld [vmem:[#allocation2 + $0xf8] sm:$0xff]
      %v2445 = vld [vmem:[#allocation2 + $0x100] sm:$0xff]
      %v2446 = vld [vmem:[#allocation2 + $0x108] sm:$0xff]
      %v2447 = vld [vmem:[#allocation2 + $0x110] sm:$0xff]
      %v2448 = vld [vmem:[#allocation2 + $0x118] sm:$0xff]
      %s2449 = scalar_lea.vmem %s210, 8
      %v2450 = vld [vmem:[%s2449] sm:$0x3]
      %v2488 = vunpack.c.l.b16 %v2376
      %v2489 = vunpack.c.l.b16 %v2377
      %v2490 = vunpack.c.l.b16 %v2378
      %v2491 = vunpack.c.l.b16 %v2379
      %v2492 = vunpack.c.l.b16 %v2380
      %v2493 = vunpack.c.l.b16 %v2381
      %v2494 = vunpack.c.l.b16 %v2382
      %v2495 = vunpack.c.l.b16 %v2383
      %v2496 = vunpack.c.l.b16 %v2384
      %v2497 = vunpack.c.l.b16 %v2385
      %v2498 = vunpack.c.l.b16 %v2386
      %v2499 = vunpack.c.l.b16 %v2387
      %v2500 = vunpack.c.l.b16 %v2388
      %v2501 = vunpack.c.l.b16 %v2389
      %v2502 = vunpack.c.l.b16 %v2390
      %v2503 = vunpack.c.l.b16 %v2391
      %v2504 = vunpack.c.l.b16 %v2392
      %v2505 = vunpack.c.l.b16 %v2393
      %v2506 = vunpack.c.l.b16 %v2394
      %v2507 = vunpack.c.l.b16 %v2395
      %v2508 = vunpack.c.l.b16 %v2396
      %v2509 = vunpack.c.l.b16 %v2397
      %v2510 = vunpack.c.l.b16 %v2398
      %v2511 = vunpack.c.l.b16 %v2399
      %v2512 = vunpack.c.l.b16 %v2400
      %v2513 = vunpack.c.l.b16 %v2401
      %v2514 = vunpack.c.l.b16 %v2402
      %v2515 = vunpack.c.l.b16 %v2403
      %v2516 = vunpack.c.l.b16 %v2404
      %v2517 = vunpack.c.l.b16 %v2405
      %v2518 = vunpack.c.l.b16 %v2406
      %v2519 = vunpack.c.l.b16 %v2407
      %v2520 = vunpack.c.l.b16 %v2408
      %v2521 = vunpack.c.l.b16 %v2409
      %v2522 = vunpack.c.l.b16 %v2410
      %v2523 = vunpack.c.l.b16 %v2411
      %v2524 = vunpack.c.l.b16 %v2412
      %v2525 = vpack.c.b16 %v2489, %v2488
      %v2526 = vpack.c.b16 %v2491, %v2490
      %v2527 = vpack.c.b16 %v2493, %v2492
      %v2528 = vpack.c.b16 %v2495, %v2494
      %v2529 = vpack.c.b16 %v2497, %v2496
      %v2530 = vpack.c.b16 %v2499, %v2498
      %v2531 = vpack.c.b16 %v2501, %v2500
      %v2532 = vpack.c.b16 %v2503, %v2502
      %v2533 = vpack.c.b16 %v2505, %v2504
      %v2534 = vpack.c.b16 %v2507, %v2506
      %v2535 = vpack.c.b16 %v2509, %v2508
      %v2536 = vpack.c.b16 %v2511, %v2510
      %v2537 = vpack.c.b16 %v2513, %v2512
      %v2538 = vpack.c.b16 %v2515, %v2514
      %v2539 = vpack.c.b16 %v2517, %v2516
      %v2540 = vpack.c.b16 %v2519, %v2518
      %v2541 = vpack.c.b16 %v2521, %v2520
      %v2542 = vpack.c.b16 %v2523, %v2522
      %v2543 = vpack.c.b16 %v2524, %v2524
      %vm2544 = vsmask.f32 6400
      %v2546 = vshrl.u32 %v2525, 16
      %v2548 = vrot.slane %v2546, 1
      %v2549 = vshll.u32 %v2525, 16
      %v2551 = vrot.slane %v2549, 2
      %v2552 = vor.u32 %v2548, %v2551
      %v2554 = vshrl.u32 %v2526, 16
      %v2556 = vrot.slane %v2554, 1
      %v2557 = vshll.u32 %v2526, 16
      %v2559 = vrot.slane %v2557, 2
      %v2560 = vor.u32 %v2556, %v2559
      %v2561 = vsel %vm2544, %v2552, %v2560
      %v2563 = vshrl.u32 %v2527, 16
      %v2565 = vrot.slane %v2563, 1
      %v2566 = vshll.u32 %v2527, 16
      %v2568 = vrot.slane %v2566, 2
      %v2569 = vor.u32 %v2565, %v2568
      %v2570 = vsel %vm2544, %v2560, %v2569
      %v2572 = vshrl.u32 %v2528, 16
      %v2574 = vrot.slane %v2572, 1
      %v2575 = vshll.u32 %v2528, 16
      %v2577 = vrot.slane %v2575, 2
      %v2578 = vor.u32 %v2574, %v2577
      %v2579 = vsel %vm2544, %v2569, %v2578
      %v2581 = vshrl.u32 %v2529, 16
      %v2583 = vrot.slane %v2581, 1
      %v2584 = vshll.u32 %v2529, 16
      %v2586 = vrot.slane %v2584, 2
      %v2587 = vor.u32 %v2583, %v2586
      %v2588 = vsel %vm2544, %v2578, %v2587
      %v2590 = vshrl.u32 %v2530, 16
      %v2592 = vrot.slane %v2590, 1
      %v2593 = vshll.u32 %v2530, 16
      %v2595 = vrot.slane %v2593, 2
      %v2596 = vor.u32 %v2592, %v2595
      %v2597 = vsel %vm2544, %v2587, %v2596
      %v2599 = vshrl.u32 %v2531, 16
      %v2601 = vrot.slane %v2599, 1
      %v2602 = vshll.u32 %v2531, 16
      %v2604 = vrot.slane %v2602, 2
      %v2605 = vor.u32 %v2601, %v2604
      %v2606 = vsel %vm2544, %v2596, %v2605
      %v2608 = vshrl.u32 %v2532, 16
      %v2610 = vrot.slane %v2608, 1
      %v2611 = vshll.u32 %v2532, 16
      %v2613 = vrot.slane %v2611, 2
      %v2614 = vor.u32 %v2610, %v2613
      %v2615 = vsel %vm2544, %v2605, %v2614
      %v2617 = vshrl.u32 %v2533, 16
      %v2619 = vrot.slane %v2617, 1
      %v2620 = vshll.u32 %v2533, 16
      %v2622 = vrot.slane %v2620, 2
      %v2623 = vor.u32 %v2619, %v2622
      %v2624 = vsel %vm2544, %v2614, %v2623
      %v2626 = vshrl.u32 %v2534, 16
      %v2628 = vrot.slane %v2626, 1
      %v2629 = vshll.u32 %v2534, 16
      %v2631 = vrot.slane %v2629, 2
      %v2632 = vor.u32 %v2628, %v2631
      %v2633 = vsel %vm2544, %v2623, %v2632
      %v2635 = vshrl.u32 %v2535, 16
      %v2637 = vrot.slane %v2635, 1
      %v2638 = vshll.u32 %v2535, 16
      %v2640 = vrot.slane %v2638, 2
      %v2641 = vor.u32 %v2637, %v2640
      %v2642 = vsel %vm2544, %v2632, %v2641
      %v2644 = vshrl.u32 %v2536, 16
      %v2646 = vrot.slane %v2644, 1
      %v2647 = vshll.u32 %v2536, 16
      %v2649 = vrot.slane %v2647, 2
      %v2650 = vor.u32 %v2646, %v2649
      %v2651 = vsel %vm2544, %v2641, %v2650
      %v2653 = vshrl.u32 %v2537, 16
      %v2655 = vrot.slane %v2653, 1
      %v2656 = vshll.u32 %v2537, 16
      %v2658 = vrot.slane %v2656, 2
      %v2659 = vor.u32 %v2655, %v2658
      %v2660 = vsel %vm2544, %v2650, %v2659
      %v2662 = vshrl.u32 %v2538, 16
      %v2664 = vrot.slane %v2662, 1
      %v2665 = vshll.u32 %v2538, 16
      %v2667 = vrot.slane %v2665, 2
      %v2668 = vor.u32 %v2664, %v2667
      %v2669 = vsel %vm2544, %v2659, %v2668
      %v2671 = vshrl.u32 %v2539, 16
      %v2673 = vrot.slane %v2671, 1
      %v2674 = vshll.u32 %v2539, 16
      %v2676 = vrot.slane %v2674, 2
      %v2677 = vor.u32 %v2673, %v2676
      %v2678 = vsel %vm2544, %v2668, %v2677
      %v2680 = vshrl.u32 %v2540, 16
      %v2682 = vrot.slane %v2680, 1
      %v2683 = vshll.u32 %v2540, 16
      %v2685 = vrot.slane %v2683, 2
      %v2686 = vor.u32 %v2682, %v2685
      %v2687 = vsel %vm2544, %v2677, %v2686
      %v2689 = vshrl.u32 %v2541, 16
      %v2691 = vrot.slane %v2689, 1
      %v2692 = vshll.u32 %v2541, 16
      %v2694 = vrot.slane %v2692, 2
      %v2695 = vor.u32 %v2691, %v2694
      %v2696 = vsel %vm2544, %v2686, %v2695
      %v2698 = vshrl.u32 %v2542, 16
      %v2700 = vrot.slane %v2698, 1
      %v2701 = vshll.u32 %v2542, 16
      %v2703 = vrot.slane %v2701, 2
      %v2704 = vor.u32 %v2700, %v2703
      %v2705 = vsel %vm2544, %v2695, %v2704
      %v2707 = vshrl.u32 %v2543, 16
      %v2709 = vrot.slane %v2707, 1
      %v2710 = vshll.u32 %v2543, 16
      %v2712 = vrot.slane %v2710, 2
      %v2713 = vor.u32 %v2709, %v2712
      %v2714 = vsel %vm2544, %v2704, %v2713
      %v2716 = vsel %vm422, %v2561, 0
      %v2719 = vsel %vm422, %v2570, 0
      %v2722 = vsel %vm422, %v2579, 0
      %v2725 = vsel %vm422, %v2588, 0
      %v2728 = vsel %vm422, %v2597, 0
      %v2731 = vsel %vm422, %v2606, 0
      %v2734 = vsel %vm422, %v2615, 0
      %v2737 = vsel %vm422, %v2624, 0
      %v2740 = vsel %vm422, %v2633, 0
      %v2743 = vsel %vm422, %v2642, 0
      %v2746 = vsel %vm422, %v2651, 0
      %v2749 = vsel %vm422, %v2660, 0
      %v2752 = vsel %vm422, %v2669, 0
      %v2755 = vsel %vm422, %v2678, 0
      %v2758 = vsel %vm422, %v2687, 0
      %v2761 = vsel %vm422, %v2696, 0
      %v2764 = vsel %vm422, %v2705, 0
      %v2767 = vsel %vm422, %v2714, 0
      %v2770 = vsel %vm477, %v2450, 0
      %2772 = vmatprep.subr.bf16.mxu0 0
      %2773 = vmatpush1.bf16.msra.mxu0 %v2770
      %2774 = vmatprep.subr.bf16.mxu0 0
      %2775 = vmatpush1.bf16.msra.mxu0 0
      %2776 = vmatprep.subr.bf16.mxu0 0
      %2777 = vmatpush1.bf16.msra.mxu0 0
      %2778 = vmatprep.subr.bf16.mxu0 0
      %2779 = vmatpush1.bf16.msra.mxu0 0
      %2780 = vmatprep.subr.bf16.mxu0 0
      %2781 = vmatpush1.bf16.msra.mxu0 0
      %2782 = vmatprep.subr.bf16.mxu0 0
      %2783 = vmatpush1.bf16.msra.mxu0 0
      %2784 = vmatprep.subr.bf16.mxu0 0
      %2785 = vmatpush1.bf16.msra.mxu0 0
      %2786 = vmatprep.subr.bf16.mxu0 0
      %2787 = vmatpush1.bf16.msra.mxu0 0
      %2788 = vmatprep.subr.bf16.mxu0 0
      %2789 = vmatpush1.bf16.msra.mxu0 0
      %2790 = vmatprep.subr.bf16.mxu0 0
      %2791 = vmatpush1.bf16.msra.mxu0 0
      %2792 = vmatprep.subr.bf16.mxu0 0
      %2793 = vmatpush1.bf16.msra.mxu0 0
      %2794 = vmatprep.subr.bf16.mxu0 0
      %2795 = vmatpush1.bf16.msra.mxu0 0
      %2796 = vmatprep.subr.bf16.mxu0 0
      %2797 = vmatpush1.bf16.msra.mxu0 0
      %2798 = vmatprep.subr.bf16.mxu0 0
      %2799 = vmatpush1.bf16.msra.mxu0 0
      %2800 = vmatprep.subr.bf16.mxu0 0
      %2801 = vmatpush1.bf16.msra.mxu0 0
      %2802 = vmatprep.subr.bf16.mxu0 0
      %2803 = vmatpush1.bf16.msra.mxu0 0
      %2804 = vmatprep.mubr.bf16.mxu0 0
      %2805 = vmatmul.mubr.bf16.gmra.mrb[0].mxu0 %v2716
      %v2806 = vpop.f32.mrb[0].mxu0
      %v2807 = vadd.f32 0.0, %v2806
      %v2808 = vpop.f32.mrb[0].mxu0
      %v2809 = vpop.f32.mrb[0].mxu0
      %v2810 = vadd.f32 0.0, %v2809
      %v2811 = vpop.f32.mrb[0].mxu0
      %2812 = vmatprep.mubr.bf16.mxu0 0
      %2813 = vmatmul.mubr.bf16.gmra.mrb[0].mxu0 %v2719
      %v2814 = vpop.f32.mrb[0].mxu0
      %v2815 = vadd.f32 0.0, %v2814
      %v2816 = vpop.f32.mrb[0].mxu0
      %v2817 = vpop.f32.mrb[0].mxu0
      %v2818 = vadd.f32 0.0, %v2817
      %v2819 = vpop.f32.mrb[0].mxu0
      %2820 = vmatprep.mubr.bf16.mxu0 0
      %2821 = vmatmul.mubr.bf16.gmra.mrb[0].mxu0 %v2722
      %v2822 = vpop.f32.mrb[0].mxu0
      %v2823 = vadd.f32 0.0, %v2822
      %v2824 = vpop.f32.mrb[0].mxu0
      %v2825 = vpop.f32.mrb[0].mxu0
      %v2826 = vadd.f32 0.0, %v2825
      %v2827 = vpop.f32.mrb[0].mxu0
      %2828 = vmatprep.mubr.bf16.mxu0 0
      %2829 = vmatmul.mubr.bf16.gmra.mrb[0].mxu0 %v2725
      %v2830 = vpop.f32.mrb[0].mxu0
      %v2831 = vadd.f32 0.0, %v2830
      %v2832 = vpop.f32.mrb[0].mxu0
      %v2833 = vpop.f32.mrb[0].mxu0
      %v2834 = vadd.f32 0.0, %v2833
      %v2835 = vpop.f32.mrb[0].mxu0
      %2836 = vmatprep.mubr.bf16.mxu0 0
      %2837 = vmatmul.mubr.bf16.gmra.mrb[0].mxu0 %v2728
      %v2838 = vpop.f32.mrb[0].mxu0
      %v2839 = vadd.f32 0.0, %v2838
      %v2840 = vpop.f32.mrb[0].mxu0
      %v2841 = vpop.f32.mrb[0].mxu0
      %v2842 = vadd.f32 0.0, %v2841
      %v2843 = vpop.f32.mrb[0].mxu0
      %2844 = vmatprep.mubr.bf16.mxu0 0
      %2845 = vmatmul.mubr.bf16.gmra.mrb[0].mxu0 %v2731
      %v2846 = vpop.f32.mrb[0].mxu0
      %v2847 = vadd.f32 0.0, %v2846
      %v2848 = vpop.f32.mrb[0].mxu0
      %v2849 = vpop.f32.mrb[0].mxu0
      %v2850 = vadd.f32 0.0, %v2849
      %v2851 = vpop.f32.mrb[0].mxu0
      %2852 = vmatprep.mubr.bf16.mxu0 0
      %2853 = vmatmul.mubr.bf16.gmra.mrb[0].mxu0 %v2734
      %v2854 = vpop.f32.mrb[0].mxu0
      %v2855 = vadd.f32 0.0, %v2854
      %v2856 = vpop.f32.mrb[0].mxu0
      %v2857 = vpop.f32.mrb[0].mxu0
      %v2858 = vadd.f32 0.0, %v2857
      %v2859 = vpop.f32.mrb[0].mxu0
      %2860 = vmatprep.mubr.bf16.mxu0 0
      %2861 = vmatmul.mubr.bf16.gmra.mrb[0].mxu0 %v2737
      %v2862 = vpop.f32.mrb[0].mxu0
      %v2863 = vadd.f32 0.0, %v2862
      %v2864 = vpop.f32.mrb[0].mxu0
      %v2865 = vpop.f32.mrb[0].mxu0
      %v2866 = vadd.f32 0.0, %v2865
      %v2867 = vpop.f32.mrb[0].mxu0
      %2868 = vmatprep.mubr.bf16.mxu0 0
      %2869 = vmatmul.mubr.bf16.gmra.mrb[0].mxu0 %v2740
      %v2870 = vpop.f32.mrb[0].mxu0
      %v2871 = vadd.f32 0.0, %v2870
      %v2872 = vpop.f32.mrb[0].mxu0
      %v2873 = vpop.f32.mrb[0].mxu0
      %v2874 = vadd.f32 0.0, %v2873
      %v2875 = vpop.f32.mrb[0].mxu0
      %2876 = vmatprep.mubr.bf16.mxu0 0
      %2877 = vmatmul.mubr.bf16.gmra.mrb[0].mxu0 %v2743
      %v2878 = vpop.f32.mrb[0].mxu0
      %v2879 = vadd.f32 0.0, %v2878
      %v2880 = vpop.f32.mrb[0].mxu0
      %v2881 = vpop.f32.mrb[0].mxu0
      %v2882 = vadd.f32 0.0, %v2881
      %v2883 = vpop.f32.mrb[0].mxu0
      %2884 = vmatprep.mubr.bf16.mxu0 0
      %2885 = vmatmul.mubr.bf16.gmra.mrb[0].mxu0 %v2746
      %v2886 = vpop.f32.mrb[0].mxu0
      %v2887 = vadd.f32 0.0, %v2886
      %v2888 = vpop.f32.mrb[0].mxu0
      %v2889 = vpop.f32.mrb[0].mxu0
      %v2890 = vadd.f32 0.0, %v2889
      %v2891 = vpop.f32.mrb[0].mxu0
      %2892 = vmatprep.mubr.bf16.mxu0 0
      %2893 = vmatmul.mubr.bf16.gmra.mrb[0].mxu0 %v2749
      %v2894 = vpop.f32.mrb[0].mxu0
      %v2895 = vadd.f32 0.0, %v2894
      %v2896 = vpop.f32.mrb[0].mxu0
      %v2897 = vpop.f32.mrb[0].mxu0
      %v2898 = vadd.f32 0.0, %v2897
      %v2899 = vpop.f32.mrb[0].mxu0
      %2900 = vmatprep.mubr.bf16.mxu0 0
      %2901 = vmatmul.mubr.bf16.gmra.mrb[0].mxu0 %v2752
      %v2902 = vpop.f32.mrb[0].mxu0
      %v2903 = vadd.f32 0.0, %v2902
      %v2904 = vpop.f32.mrb[0].mxu0
      %v2905 = vpop.f32.mrb[0].mxu0
      %v2906 = vadd.f32 0.0, %v2905
      %v2907 = vpop.f32.mrb[0].mxu0
      %2908 = vmatprep.mubr.bf16.mxu0 0
      %2909 = vmatmul.mubr.bf16.gmra.mrb[0].mxu0 %v2755
      %v2910 = vpop.f32.mrb[0].mxu0
      %v2911 = vadd.f32 0.0, %v2910
      %v2912 = vpop.f32.mrb[0].mxu0
      %v2913 = vpop.f32.mrb[0].mxu0
      %v2914 = vadd.f32 0.0, %v2913
      %v2915 = vpop.f32.mrb[0].mxu0
      %2916 = vmatprep.mubr.bf16.mxu0 0
      %2917 = vmatmul.mubr.bf16.gmra.mrb[0].mxu0 %v2758
      %v2918 = vpop.f32.mrb[0].mxu0
      %v2919 = vadd.f32 0.0, %v2918
      %v2920 = vpop.f32.mrb[0].mxu0
      %v2921 = vpop.f32.mrb[0].mxu0
      %v2922 = vadd.f32 0.0, %v2921
      %v2923 = vpop.f32.mrb[0].mxu0
      %2924 = vmatprep.mubr.bf16.mxu0 0
      %2925 = vmatmul.mubr.bf16.gmra.mrb[0].mxu0 %v2761
      %v2926 = vpop.f32.mrb[0].mxu0
      %v2927 = vadd.f32 0.0, %v2926
      %v2928 = vpop.f32.mrb[0].mxu0
      %v2929 = vpop.f32.mrb[0].mxu0
      %v2930 = vadd.f32 0.0, %v2929
      %v2931 = vpop.f32.mrb[0].mxu0
      %2932 = vmatprep.mubr.bf16.mxu0 0
      %2933 = vmatmul.mubr.bf16.gmra.mrb[0].mxu0 %v2764
      %v2934 = vpop.f32.mrb[0].mxu0
      %v2935 = vadd.f32 0.0, %v2934
      %v2936 = vpop.f32.mrb[0].mxu0
      %v2937 = vpop.f32.mrb[0].mxu0
      %v2938 = vadd.f32 0.0, %v2937
      %v2939 = vpop.f32.mrb[0].mxu0
      %2940 = vmatprep.mubr.bf16.mxu0 0
      %2941 = vmatmul.mubr.bf16.gmra.mrb[0].mxu0 %v2767
      %v2942 = vpop.f32.mrb[0].mxu0
      %v2943 = vadd.f32 0.0, %v2942
      %v2944 = vpop.f32.mrb[0].mxu0
      %v2945 = vpop.f32.mrb[0].mxu0
      %v2946 = vadd.f32 0.0, %v2945
      %v2947 = vpop.f32.mrb[0].mxu0
      %2948 = vdwg.mxu0
      %v2949 = vadd.f32 %v2413, %v2807
      %v2950 = vadd.f32 %v2414, %v2810
      %v2951 = vadd.f32 %v2415, %v2815
      %v2952 = vadd.f32 %v2416, %v2818
      %v2953 = vadd.f32 %v2417, %v2823
      %v2954 = vadd.f32 %v2418, %v2826
      %v2955 = vadd.f32 %v2419, %v2831
      %v2956 = vadd.f32 %v2420, %v2834
      %v2957 = vadd.f32 %v2421, %v2839
      %v2958 = vadd.f32 %v2422, %v2842
      %v2959 = vadd.f32 %v2423, %v2847
      %v2960 = vadd.f32 %v2424, %v2850
      %v2961 = vadd.f32 %v2425, %v2855
      %v2962 = vadd.f32 %v2426, %v2858
      %v2963 = vadd.f32 %v2427, %v2863
      %v2964 = vadd.f32 %v2428, %v2866
      %v2965 = vadd.f32 %v2429, %v2871
      %v2966 = vadd.f32 %v2430, %v2874
      %v2967 = vadd.f32 %v2431, %v2879
      %v2968 = vadd.f32 %v2432, %v2882
      %v2969 = vadd.f32 %v2433, %v2887
      %v2970 = vadd.f32 %v2434, %v2890
      %v2971 = vadd.f32 %v2435, %v2895
      %v2972 = vadd.f32 %v2436, %v2898
      %v2973 = vadd.f32 %v2437, %v2903
      %v2974 = vadd.f32 %v2438, %v2906
      %v2975 = vadd.f32 %v2439, %v2911
      %v2976 = vadd.f32 %v2440, %v2914
      %v2977 = vadd.f32 %v2441, %v2919
      %v2978 = vadd.f32 %v2442, %v2922
      %v2979 = vadd.f32 %v2443, %v2927
      %v2980 = vadd.f32 %v2444, %v2930
      %v2981 = vadd.f32 %v2445, %v2935
      %v2982 = vadd.f32 %v2446, %v2938
      %v2983 = vadd.f32 %v2447, %v2943
      %v2984 = vadd.f32 %v2448, %v2946
      %2985 = vst [vmem:[#allocation2] sm:$0xff] %v2949
      %2986 = vst [vmem:[#allocation2 + $0x8] sm:$0xff] %v2950
      %2987 = vst [vmem:[#allocation2 + $0x10] sm:$0xff] %v2951
      %2988 = vst [vmem:[#allocation2 + $0x18] sm:$0xff] %v2952
      %2989 = vst [vmem:[#allocation2 + $0x20] sm:$0xff] %v2953
      %2990 = vst [vmem:[#allocation2 + $0x28] sm:$0xff] %v2954
      %2991 = vst [vmem:[#allocation2 + $0x30] sm:$0xff] %v2955
      %2992 = vst [vmem:[#allocation2 + $0x38] sm:$0xff] %v2956
      %2993 = vst [vmem:[#allocation2 + $0x40] sm:$0xff] %v2957
      %2994 = vst [vmem:[#allocation2 + $0x48] sm:$0xff] %v2958
      %2995 = vst [vmem:[#allocation2 + $0x50] sm:$0xff] %v2959
      %2996 = vst [vmem:[#allocation2 + $0x58] sm:$0xff] %v2960
      %2997 = vst [vmem:[#allocation2 + $0x60] sm:$0xff] %v2961
      %2998 = vst [vmem:[#allocation2 + $0x68] sm:$0xff] %v2962
      %2999 = vst [vmem:[#allocation2 + $0x70] sm:$0xff] %v2963
      %3000 = vst [vmem:[#allocation2 + $0x78] sm:$0xff] %v2964
      %3001 = vst [vmem:[#allocation2 + $0x80] sm:$0xff] %v2965
      %3002 = vst [vmem:[#allocation2 + $0x88] sm:$0xff] %v2966
      %3003 = vst [vmem:[#allocation2 + $0x90] sm:$0xff] %v2967
      %3004 = vst [vmem:[#allocation2 + $0x98] sm:$0xff] %v2968
      %3005 = vst [vmem:[#allocation2 + $0xa0] sm:$0xff] %v2969
      %3006 = vst [vmem:[#allocation2 + $0xa8] sm:$0xff] %v2970
      %3007 = vst [vmem:[#allocation2 + $0xb0] sm:$0xff] %v2971
      %3008 = vst [vmem:[#allocation2 + $0xb8] sm:$0xff] %v2972
      %3009 = vst [vmem:[#allocation2 + $0xc0] sm:$0xff] %v2973
      %3010 = vst [vmem:[#allocation2 + $0xc8] sm:$0xff] %v2974
      %3011 = vst [vmem:[#allocation2 + $0xd0] sm:$0xff] %v2975
      %3012 = vst [vmem:[#allocation2 + $0xd8] sm:$0xff] %v2976
      %3013 = vst [vmem:[#allocation2 + $0xe0] sm:$0xff] %v2977
      %3014 = vst [vmem:[#allocation2 + $0xe8] sm:$0xff] %v2978
      %3015 = vst [vmem:[#allocation2 + $0xf0] sm:$0xff] %v2979
      %3016 = vst [vmem:[#allocation2 + $0xf8] sm:$0xff] %v2980
      %3017 = vst [vmem:[#allocation2 + $0x100] sm:$0xff] %v2981
      %3018 = vst [vmem:[#allocation2 + $0x108] sm:$0xff] %v2982
      %3019 = vst [vmem:[#allocation2 + $0x110] sm:$0xff] %v2983
      %3020 = vst [vmem:[#allocation2 + $0x118] sm:$0xff] %v2984
      %v3021 = vld [vmem:[%s206 + $0x8] sm:$0xc]
      %v3022 = vld [vmem:[%s206 + $0xc] sm:$0xf]
      %v3023 = vld [vmem:[%s206 + $0x10] sm:$0xf]
      %v3024 = vld [vmem:[%s206 + $0x14] sm:$0xf]
      %v3025 = vld [vmem:[%s206 + $0x18] sm:$0xf]
      %v3026 = vld [vmem:[%s206 + $0x1c] sm:$0xf]
      %v3027 = vld [vmem:[%s206 + $0x20] sm:$0xf]
      %v3028 = vld [vmem:[%s206 + $0x24] sm:$0xf]
      %v3029 = vld [vmem:[%s206 + $0x28] sm:$0xf]
      %v3030 = vld [vmem:[%s206 + $0x2c] sm:$0xf]
      %v3031 = vld [vmem:[%s206 + $0x30] sm:$0xf]
      %v3032 = vld [vmem:[%s206 + $0x34] sm:$0xf]
      %v3033 = vld [vmem:[%s206 + $0x38] sm:$0xf]
      %v3034 = vld [vmem:[%s206 + $0x3c] sm:$0xf]
      %v3035 = vld [vmem:[%s206 + $0x40] sm:$0xf]
      %v3036 = vld [vmem:[%s206 + $0x44] sm:$0xf]
      %v3037 = vld [vmem:[%s206 + $0x48] sm:$0xf]
      %v3038 = vld [vmem:[%s206 + $0x4c] sm:$0xf]
      %v3039 = vld [vmem:[%s206 + $0x50] sm:$0xf]
      %v3040 = vld [vmem:[%s206 + $0x54] sm:$0xf]
      %v3041 = vld [vmem:[%s206 + $0x58] sm:$0xf]
      %v3042 = vld [vmem:[%s206 + $0x5c] sm:$0xf]
      %v3043 = vld [vmem:[%s206 + $0x60] sm:$0xf]
      %v3044 = vld [vmem:[%s206 + $0x64] sm:$0xf]
      %v3045 = vld [vmem:[%s206 + $0x68] sm:$0xf]
      %v3046 = vld [vmem:[%s206 + $0x6c] sm:$0xf]
      %v3047 = vld [vmem:[%s206 + $0x70] sm:$0xf]
      %v3048 = vld [vmem:[%s206 + $0x74] sm:$0xf]
      %v3049 = vld [vmem:[%s206 + $0x78] sm:$0xf]
      %v3050 = vld [vmem:[%s206 + $0x7c] sm:$0xf]
      %v3051 = vld [vmem:[%s206 + $0x80] sm:$0xf]
      %v3052 = vld [vmem:[%s206 + $0x84] sm:$0xf]
      %v3053 = vld [vmem:[%s206 + $0x88] sm:$0xf]
      %v3054 = vld [vmem:[%s206 + $0x8c] sm:$0xf]
      %v3055 = vld [vmem:[%s206 + $0x90] sm:$0xf]
      %v3056 = vld [vmem:[%s206 + $0x94] sm:$0xf]
      %v3057 = vld [vmem:[%s206 + $0x98] sm:$0x3]
      %v3058 = vld [vmem:[#allocation2] sm:$0xff]
      %v3059 = vld [vmem:[#allocation2 + $0x8] sm:$0xff]
      %v3060 = vld [vmem:[#allocation2 + $0x10] sm:$0xff]
      %v3061 = vld [vmem:[#allocation2 + $0x18] sm:$0xff]
      %v3062 = vld [vmem:[#allocation2 + $0x20] sm:$0xff]
      %v3063 = vld [vmem:[#allocation2 + $0x28] sm:$0xff]
      %v3064 = vld [vmem:[#allocation2 + $0x30] sm:$0xff]
      %v3065 = vld [vmem:[#allocation2 + $0x38] sm:$0xff]
      %v3066 = vld [vmem:[#allocation2 + $0x40] sm:$0xff]
      %v3067 = vld [vmem:[#allocation2 + $0x48] sm:$0xff]
      %v3068 = vld [vmem:[#allocation2 + $0x50] sm:$0xff]
      %v3069 = vld [vmem:[#allocation2 + $0x58] sm:$0xff]
      %v3070 = vld [vmem:[#allocation2 + $0x60] sm:$0xff]
      %v3071 = vld [vmem:[#allocation2 + $0x68] sm:$0xff]
      %v3072 = vld [vmem:[#allocation2 + $0x70] sm:$0xff]
      %v3073 = vld [vmem:[#allocation2 + $0x78] sm:$0xff]
      %v3074 = vld [vmem:[#allocation2 + $0x80] sm:$0xff]
      %v3075 = vld [vmem:[#allocation2 + $0x88] sm:$0xff]
      %v3076 = vld [vmem:[#allocation2 + $0x90] sm:$0xff]
      %v3077 = vld [vmem:[#allocation2 + $0x98] sm:$0xff]
      %v3078 = vld [vmem:[#allocation2 + $0xa0] sm:$0xff]
      %v3079 = vld [vmem:[#allocation2 + $0xa8] sm:$0xff]
      %v3080 = vld [vmem:[#allocation2 + $0xb0] sm:$0xff]
      %v3081 = vld [vmem:[#allocation2 + $0xb8] sm:$0xff]
      %v3082 = vld [vmem:[#allocation2 + $0xc0] sm:$0xff]
      %v3083 = vld [vmem:[#allocation2 + $0xc8] sm:$0xff]
      %v3084 = vld [vmem:[#allocation2 + $0xd0] sm:$0xff]
      %v3085 = vld [vmem:[#allocation2 + $0xd8] sm:$0xff]
      %v3086 = vld [vmem:[#allocation2 + $0xe0] sm:$0xff]
      %v3087 = vld [vmem:[#allocation2 + $0xe8] sm:$0xff]
      %v3088 = vld [vmem:[#allocation2 + $0xf0] sm:$0xff]
      %v3089 = vld [vmem:[#allocation2 + $0xf8] sm:$0xff]
      %v3090 = vld [vmem:[#allocation2 + $0x100] sm:$0xff]
      %v3091 = vld [vmem:[#allocation2 + $0x108] sm:$0xff]
      %v3092 = vld [vmem:[#allocation2 + $0x110] sm:$0xff]
      %v3093 = vld [vmem:[#allocation2 + $0x118] sm:$0xff]
      %s3094 = scalar_lea.vmem %s210, 10
      %v3095 = vld [vmem:[%s3094] sm:$0x3]
      %v3133 = vunpack.c.l.b16 %v3021
      %v3134 = vunpack.c.l.b16 %v3022
      %v3135 = vunpack.c.l.b16 %v3023
      %v3136 = vunpack.c.l.b16 %v3024
      %v3137 = vunpack.c.l.b16 %v3025
      %v3138 = vunpack.c.l.b16 %v3026
      %v3139 = vunpack.c.l.b16 %v3027
      %v3140 = vunpack.c.l.b16 %v3028
      %v3141 = vunpack.c.l.b16 %v3029
      %v3142 = vunpack.c.l.b16 %v3030
      %v3143 = vunpack.c.l.b16 %v3031
      %v3144 = vunpack.c.l.b16 %v3032
      %v3145 = vunpack.c.l.b16 %v3033
      %v3146 = vunpack.c.l.b16 %v3034
      %v3147 = vunpack.c.l.b16 %v3035
      %v3148 = vunpack.c.l.b16 %v3036
      %v3149 = vunpack.c.l.b16 %v3037
      %v3150 = vunpack.c.l.b16 %v3038
      %v3151 = vunpack.c.l.b16 %v3039
      %v3152 = vunpack.c.l.b16 %v3040
      %v3153 = vunpack.c.l.b16 %v3041
      %v3154 = vunpack.c.l.b16 %v3042
      %v3155 = vunpack.c.l.b16 %v3043
      %v3156 = vunpack.c.l.b16 %v3044
      %v3157 = vunpack.c.l.b16 %v3045
      %v3158 = vunpack.c.l.b16 %v3046
      %v3159 = vunpack.c.l.b16 %v3047
      %v3160 = vunpack.c.l.b16 %v3048
      %v3161 = vunpack.c.l.b16 %v3049
      %v3162 = vunpack.c.l.b16 %v3050
      %v3163 = vunpack.c.l.b16 %v3051
      %v3164 = vunpack.c.l.b16 %v3052
      %v3165 = vunpack.c.l.b16 %v3053
      %v3166 = vunpack.c.l.b16 %v3054
      %v3167 = vunpack.c.l.b16 %v3055
      %v3168 = vunpack.c.l.b16 %v3056
      %v3169 = vunpack.c.l.b16 %v3057
      %v3170 = vpack.c.b16 %v3134, %v3133
      %v3171 = vpack.c.b16 %v3136, %v3135
      %v3172 = vpack.c.b16 %v3138, %v3137
      %v3173 = vpack.c.b16 %v3140, %v3139
      %v3174 = vpack.c.b16 %v3142, %v3141
      %v3175 = vpack.c.b16 %v3144, %v3143
      %v3176 = vpack.c.b16 %v3146, %v3145
      %v3177 = vpack.c.b16 %v3148, %v3147
      %v3178 = vpack.c.b16 %v3150, %v3149
      %v3179 = vpack.c.b16 %v3152, %v3151
      %v3180 = vpack.c.b16 %v3154, %v3153
      %v3181 = vpack.c.b16 %v3156, %v3155
      %v3182 = vpack.c.b16 %v3158, %v3157
      %v3183 = vpack.c.b16 %v3160, %v3159
      %v3184 = vpack.c.b16 %v3162, %v3161
      %v3185 = vpack.c.b16 %v3164, %v3163
      %v3186 = vpack.c.b16 %v3166, %v3165
      %v3187 = vpack.c.b16 %v3168, %v3167
      %v3188 = vpack.c.b16 %v3169, %v3169
      %vm3189 = vcmask 1045504
      %v3190 = vrot.slane %v3170, 2
      %v3191 = vrot.slane %v3171, 2
      %v3192 = vsel %vm3189, %v3190, %v3191
      %v3193 = vrot.slane %v3172, 2
      %v3194 = vsel %vm3189, %v3191, %v3193
      %v3195 = vrot.slane %v3173, 2
      %v3196 = vsel %vm3189, %v3193, %v3195
      %v3197 = vrot.slane %v3174, 2
      %v3198 = vsel %vm3189, %v3195, %v3197
      %v3199 = vrot.slane %v3175, 2
      %v3200 = vsel %vm3189, %v3197, %v3199
      %v3201 = vrot.slane %v3176, 2
      %v3202 = vsel %vm3189, %v3199, %v3201
      %v3203 = vrot.slane %v3177, 2
      %v3204 = vsel %vm3189, %v3201, %v3203
      %v3205 = vrot.slane %v3178, 2
      %v3206 = vsel %vm3189, %v3203, %v3205
      %v3207 = vrot.slane %v3179, 2
      %v3208 = vsel %vm3189, %v3205, %v3207
      %v3209 = vrot.slane %v3180, 2
      %v3210 = vsel %vm3189, %v3207, %v3209
      %v3211 = vrot.slane %v3181, 2
      %v3212 = vsel %vm3189, %v3209, %v3211
      %v3213 = vrot.slane %v3182, 2
      %v3214 = vsel %vm3189, %v3211, %v3213
      %v3215 = vrot.slane %v3183, 2
      %v3216 = vsel %vm3189, %v3213, %v3215
      %v3217 = vrot.slane %v3184, 2
      %v3218 = vsel %vm3189, %v3215, %v3217
      %v3219 = vrot.slane %v3185, 2
      %v3220 = vsel %vm3189, %v3217, %v3219
      %v3221 = vrot.slane %v3186, 2
      %v3222 = vsel %vm3189, %v3219, %v3221
      %v3223 = vrot.slane %v3187, 2
      %v3224 = vsel %vm3189, %v3221, %v3223
      %v3225 = vrot.slane %v3188, 2
      %v3226 = vsel %vm3189, %v3223, %v3225
      %v3228 = vsel %vm422, %v3192, 0
      %v3231 = vsel %vm422, %v3194, 0
      %v3234 = vsel %vm422, %v3196, 0
      %v3237 = vsel %vm422, %v3198, 0
      %v3240 = vsel %vm422, %v3200, 0
      %v3243 = vsel %vm422, %v3202, 0
      %v3246 = vsel %vm422, %v3204, 0
      %v3249 = vsel %vm422, %v3206, 0
      %v3252 = vsel %vm422, %v3208, 0
      %v3255 = vsel %vm422, %v3210, 0
      %v3258 = vsel %vm422, %v3212, 0
      %v3261 = vsel %vm422, %v3214, 0
      %v3264 = vsel %vm422, %v3216, 0
      %v3267 = vsel %vm422, %v3218, 0
      %v3270 = vsel %vm422, %v3220, 0
      %v3273 = vsel %vm422, %v3222, 0
      %v3276 = vsel %vm422, %v3224, 0
      %v3279 = vsel %vm422, %v3226, 0
      %v3282 = vsel %vm477, %v3095, 0
      %3284 = vmatprep.subr.bf16.mxu0 0
      %3285 = vmatpush1.bf16.msra.mxu0 %v3282
      %3286 = vmatprep.subr.bf16.mxu0 0
      %3287 = vmatpush1.bf16.msra.mxu0 0
      %3288 = vmatprep.subr.bf16.mxu0 0
      %3289 = vmatpush1.bf16.msra.mxu0 0
      %3290 = vmatprep.subr.bf16.mxu0 0
      %3291 = vmatpush1.bf16.msra.mxu0 0
      %3292 = vmatprep.subr.bf16.mxu0 0
      %3293 = vmatpush1.bf16.msra.mxu0 0
      %3294 = vmatprep.subr.bf16.mxu0 0
      %3295 = vmatpush1.bf16.msra.mxu0 0
      %3296 = vmatprep.subr.bf16.mxu0 0
      %3297 = vmatpush1.bf16.msra.mxu0 0
      %3298 = vmatprep.subr.bf16.mxu0 0
      %3299 = vmatpush1.bf16.msra.mxu0 0
      %3300 = vmatprep.subr.bf16.mxu0 0
      %3301 = vmatpush1.bf16.msra.mxu0 0
      %3302 = vmatprep.subr.bf16.mxu0 0
      %3303 = vmatpush1.bf16.msra.mxu0 0
      %3304 = vmatprep.subr.bf16.mxu0 0
      %3305 = vmatpush1.bf16.msra.mxu0 0
      %3306 = vmatprep.subr.bf16.mxu0 0
      %3307 = vmatpush1.bf16.msra.mxu0 0
      %3308 = vmatprep.subr.bf16.mxu0 0
      %3309 = vmatpush1.bf16.msra.mxu0 0
      %3310 = vmatprep.subr.bf16.mxu0 0
      %3311 = vmatpush1.bf16.msra.mxu0 0
      %3312 = vmatprep.subr.bf16.mxu0 0
      %3313 = vmatpush1.bf16.msra.mxu0 0
      %3314 = vmatprep.subr.bf16.mxu0 0
      %3315 = vmatpush1.bf16.msra.mxu0 0
      %3316 = vmatprep.mubr.bf16.mxu0 0
      %3317 = vmatmul.mubr.bf16.gmra.mrb[0].mxu0 %v3228
      %v3318 = vpop.f32.mrb[0].mxu0
      %v3319 = vadd.f32 0.0, %v3318
      %v3320 = vpop.f32.mrb[0].mxu0
      %v3321 = vpop.f32.mrb[0].mxu0
      %v3322 = vadd.f32 0.0, %v3321
      %v3323 = vpop.f32.mrb[0].mxu0
      %3324 = vmatprep.mubr.bf16.mxu0 0
      %3325 = vmatmul.mubr.bf16.gmra.mrb[0].mxu0 %v3231
      %v3326 = vpop.f32.mrb[0].mxu0
      %v3327 = vadd.f32 0.0, %v3326
      %v3328 = vpop.f32.mrb[0].mxu0
      %v3329 = vpop.f32.mrb[0].mxu0
      %v3330 = vadd.f32 0.0, %v3329
      %v3331 = vpop.f32.mrb[0].mxu0
      %3332 = vmatprep.mubr.bf16.mxu0 0
      %3333 = vmatmul.mubr.bf16.gmra.mrb[0].mxu0 %v3234
      %v3334 = vpop.f32.mrb[0].mxu0
      %v3335 = vadd.f32 0.0, %v3334
      %v3336 = vpop.f32.mrb[0].mxu0
      %v3337 = vpop.f32.mrb[0].mxu0
      %v3338 = vadd.f32 0.0, %v3337
      %v3339 = vpop.f32.mrb[0].mxu0
      %3340 = vmatprep.mubr.bf16.mxu0 0
      %3341 = vmatmul.mubr.bf16.gmra.mrb[0].mxu0 %v3237
      %v3342 = vpop.f32.mrb[0].mxu0
      %v3343 = vadd.f32 0.0, %v3342
      %v3344 = vpop.f32.mrb[0].mxu0
      %v3345 = vpop.f32.mrb[0].mxu0
      %v3346 = vadd.f32 0.0, %v3345
      %v3347 = vpop.f32.mrb[0].mxu0
      %3348 = vmatprep.mubr.bf16.mxu0 0
      %3349 = vmatmul.mubr.bf16.gmra.mrb[0].mxu0 %v3240
      %v3350 = vpop.f32.mrb[0].mxu0
      %v3351 = vadd.f32 0.0, %v3350
      %v3352 = vpop.f32.mrb[0].mxu0
      %v3353 = vpop.f32.mrb[0].mxu0
      %v3354 = vadd.f32 0.0, %v3353
      %v3355 = vpop.f32.mrb[0].mxu0
      %3356 = vmatprep.mubr.bf16.mxu0 0
      %3357 = vmatmul.mubr.bf16.gmra.mrb[0].mxu0 %v3243
      %v3358 = vpop.f32.mrb[0].mxu0
      %v3359 = vadd.f32 0.0, %v3358
      %v3360 = vpop.f32.mrb[0].mxu0
      %v3361 = vpop.f32.mrb[0].mxu0
      %v3362 = vadd.f32 0.0, %v3361
      %v3363 = vpop.f32.mrb[0].mxu0
      %3364 = vmatprep.mubr.bf16.mxu0 0
      %3365 = vmatmul.mubr.bf16.gmra.mrb[0].mxu0 %v3246
      %v3366 = vpop.f32.mrb[0].mxu0
      %v3367 = vadd.f32 0.0, %v3366
      %v3368 = vpop.f32.mrb[0].mxu0
      %v3369 = vpop.f32.mrb[0].mxu0
      %v3370 = vadd.f32 0.0, %v3369
      %v3371 = vpop.f32.mrb[0].mxu0
      %3372 = vmatprep.mubr.bf16.mxu0 0
      %3373 = vmatmul.mubr.bf16.gmra.mrb[0].mxu0 %v3249
      %v3374 = vpop.f32.mrb[0].mxu0
      %v3375 = vadd.f32 0.0, %v3374
      %v3376 = vpop.f32.mrb[0].mxu0
      %v3377 = vpop.f32.mrb[0].mxu0
      %v3378 = vadd.f32 0.0, %v3377
      %v3379 = vpop.f32.mrb[0].mxu0
      %3380 = vmatprep.mubr.bf16.mxu0 0
      %3381 = vmatmul.mubr.bf16.gmra.mrb[0].mxu0 %v3252
      %v3382 = vpop.f32.mrb[0].mxu0
      %v3383 = vadd.f32 0.0, %v3382
      %v3384 = vpop.f32.mrb[0].mxu0
      %v3385 = vpop.f32.mrb[0].mxu0
      %v3386 = vadd.f32 0.0, %v3385
      %v3387 = vpop.f32.mrb[0].mxu0
      %3388 = vmatprep.mubr.bf16.mxu0 0
      %3389 = vmatmul.mubr.bf16.gmra.mrb[0].mxu0 %v3255
      %v3390 = vpop.f32.mrb[0].mxu0
      %v3391 = vadd.f32 0.0, %v3390
      %v3392 = vpop.f32.mrb[0].mxu0
      %v3393 = vpop.f32.mrb[0].mxu0
      %v3394 = vadd.f32 0.0, %v3393
      %v3395 = vpop.f32.mrb[0].mxu0
      %3396 = vmatprep.mubr.bf16.mxu0 0
      %3397 = vmatmul.mubr.bf16.gmra.mrb[0].mxu0 %v3258
      %v3398 = vpop.f32.mrb[0].mxu0
      %v3399 = vadd.f32 0.0, %v3398
      %v3400 = vpop.f32.mrb[0].mxu0
      %v3401 = vpop.f32.mrb[0].mxu0
      %v3402 = vadd.f32 0.0, %v3401
      %v3403 = vpop.f32.mrb[0].mxu0
      %3404 = vmatprep.mubr.bf16.mxu0 0
      %3405 = vmatmul.mubr.bf16.gmra.mrb[0].mxu0 %v3261
      %v3406 = vpop.f32.mrb[0].mxu0
      %v3407 = vadd.f32 0.0, %v3406
      %v3408 = vpop.f32.mrb[0].mxu0
      %v3409 = vpop.f32.mrb[0].mxu0
      %v3410 = vadd.f32 0.0, %v3409
      %v3411 = vpop.f32.mrb[0].mxu0
      %3412 = vmatprep.mubr.bf16.mxu0 0
      %3413 = vmatmul.mubr.bf16.gmra.mrb[0].mxu0 %v3264
      %v3414 = vpop.f32.mrb[0].mxu0
      %v3415 = vadd.f32 0.0, %v3414
      %v3416 = vpop.f32.mrb[0].mxu0
      %v3417 = vpop.f32.mrb[0].mxu0
      %v3418 = vadd.f32 0.0, %v3417
      %v3419 = vpop.f32.mrb[0].mxu0
      %3420 = vmatprep.mubr.bf16.mxu0 0
      %3421 = vmatmul.mubr.bf16.gmra.mrb[0].mxu0 %v3267
      %v3422 = vpop.f32.mrb[0].mxu0
      %v3423 = vadd.f32 0.0, %v3422
      %v3424 = vpop.f32.mrb[0].mxu0
      %v3425 = vpop.f32.mrb[0].mxu0
      %v3426 = vadd.f32 0.0, %v3425
      %v3427 = vpop.f32.mrb[0].mxu0
      %3428 = vmatprep.mubr.bf16.mxu0 0
      %3429 = vmatmul.mubr.bf16.gmra.mrb[0].mxu0 %v3270
      %v3430 = vpop.f32.mrb[0].mxu0
      %v3431 = vadd.f32 0.0, %v3430
      %v3432 = vpop.f32.mrb[0].mxu0
      %v3433 = vpop.f32.mrb[0].mxu0
      %v3434 = vadd.f32 0.0, %v3433
      %v3435 = vpop.f32.mrb[0].mxu0
      %3436 = vmatprep.mubr.bf16.mxu0 0
      %3437 = vmatmul.mubr.bf16.gmra.mrb[0].mxu0 %v3273
      %v3438 = vpop.f32.mrb[0].mxu0
      %v3439 = vadd.f32 0.0, %v3438
      %v3440 = vpop.f32.mrb[0].mxu0
      %v3441 = vpop.f32.mrb[0].mxu0
      %v3442 = vadd.f32 0.0, %v3441
      %v3443 = vpop.f32.mrb[0].mxu0
      %3444 = vmatprep.mubr.bf16.mxu0 0
      %3445 = vmatmul.mubr.bf16.gmra.mrb[0].mxu0 %v3276
      %v3446 = vpop.f32.mrb[0].mxu0
      %v3447 = vadd.f32 0.0, %v3446
      %v3448 = vpop.f32.mrb[0].mxu0
      %v3449 = vpop.f32.mrb[0].mxu0
      %v3450 = vadd.f32 0.0, %v3449
      %v3451 = vpop.f32.mrb[0].mxu0
      %3452 = vmatprep.mubr.bf16.mxu0 0
      %3453 = vmatmul.mubr.bf16.gmra.mrb[0].mxu0 %v3279
      %v3454 = vpop.f32.mrb[0].mxu0
      %v3455 = vadd.f32 0.0, %v3454
      %v3456 = vpop.f32.mrb[0].mxu0
      %v3457 = vpop.f32.mrb[0].mxu0
      %v3458 = vadd.f32 0.0, %v3457
      %v3459 = vpop.f32.mrb[0].mxu0
      %3460 = vdwg.mxu0
      %v3461 = vadd.f32 %v3058, %v3319
      %v3462 = vadd.f32 %v3059, %v3322
      %v3463 = vadd.f32 %v3060, %v3327
      %v3464 = vadd.f32 %v3061, %v3330
      %v3465 = vadd.f32 %v3062, %v3335
      %v3466 = vadd.f32 %v3063, %v3338
      %v3467 = vadd.f32 %v3064, %v3343
      %v3468 = vadd.f32 %v3065, %v3346
      %v3469 = vadd.f32 %v3066, %v3351
      %v3470 = vadd.f32 %v3067, %v3354
      %v3471 = vadd.f32 %v3068, %v3359
      %v3472 = vadd.f32 %v3069, %v3362
      %v3473 = vadd.f32 %v3070, %v3367
      %v3474 = vadd.f32 %v3071, %v3370
      %v3475 = vadd.f32 %v3072, %v3375
      %v3476 = vadd.f32 %v3073, %v3378
      %v3477 = vadd.f32 %v3074, %v3383
      %v3478 = vadd.f32 %v3075, %v3386
      %v3479 = vadd.f32 %v3076, %v3391
      %v3480 = vadd.f32 %v3077, %v3394
      %v3481 = vadd.f32 %v3078, %v3399
      %v3482 = vadd.f32 %v3079, %v3402
      %v3483 = vadd.f32 %v3080, %v3407
      %v3484 = vadd.f32 %v3081, %v3410
      %v3485 = vadd.f32 %v3082, %v3415
      %v3486 = vadd.f32 %v3083, %v3418
      %v3487 = vadd.f32 %v3084, %v3423
      %v3488 = vadd.f32 %v3085, %v3426
      %v3489 = vadd.f32 %v3086, %v3431
      %v3490 = vadd.f32 %v3087, %v3434
      %v3491 = vadd.f32 %v3088, %v3439
      %v3492 = vadd.f32 %v3089, %v3442
      %v3493 = vadd.f32 %v3090, %v3447
      %v3494 = vadd.f32 %v3091, %v3450
      %v3495 = vadd.f32 %v3092, %v3455
      %v3496 = vadd.f32 %v3093, %v3458
      %3497 = vst [vmem:[#allocation2] sm:$0xff] %v3461
      %3498 = vst [vmem:[#allocation2 + $0x8] sm:$0xff] %v3462
      %3499 = vst [vmem:[#allocation2 + $0x10] sm:$0xff] %v3463
      %3500 = vst [vmem:[#allocation2 + $0x18] sm:$0xff] %v3464
      %3501 = vst [vmem:[#allocation2 + $0x20] sm:$0xff] %v3465
      %3502 = vst [vmem:[#allocation2 + $0x28] sm:$0xff] %v3466
      %3503 = vst [vmem:[#allocation2 + $0x30] sm:$0xff] %v3467
      %3504 = vst [vmem:[#allocation2 + $0x38] sm:$0xff] %v3468
      %3505 = vst [vmem:[#allocation2 + $0x40] sm:$0xff] %v3469
      %3506 = vst [vmem:[#allocation2 + $0x48] sm:$0xff] %v3470
      %3507 = vst [vmem:[#allocation2 + $0x50] sm:$0xff] %v3471
      %3508 = vst [vmem:[#allocation2 + $0x58] sm:$0xff] %v3472
      %3509 = vst [vmem:[#allocation2 + $0x60] sm:$0xff] %v3473
      %3510 = vst [vmem:[#allocation2 + $0x68] sm:$0xff] %v3474
      %3511 = vst [vmem:[#allocation2 + $0x70] sm:$0xff] %v3475
      %3512 = vst [vmem:[#allocation2 + $0x78] sm:$0xff] %v3476
      %3513 = vst [vmem:[#allocation2 + $0x80] sm:$0xff] %v3477
      %3514 = vst [vmem:[#allocation2 + $0x88] sm:$0xff] %v3478
      %3515 = vst [vmem:[#allocation2 + $0x90] sm:$0xff] %v3479
      %3516 = vst [vmem:[#allocation2 + $0x98] sm:$0xff] %v3480
      %3517 = vst [vmem:[#allocation2 + $0xa0] sm:$0xff] %v3481
      %3518 = vst [vmem:[#allocation2 + $0xa8] sm:$0xff] %v3482
      %3519 = vst [vmem:[#allocation2 + $0xb0] sm:$0xff] %v3483
      %3520 = vst [vmem:[#allocation2 + $0xb8] sm:$0xff] %v3484
      %3521 = vst [vmem:[#allocation2 + $0xc0] sm:$0xff] %v3485
      %3522 = vst [vmem:[#allocation2 + $0xc8] sm:$0xff] %v3486
      %3523 = vst [vmem:[#allocation2 + $0xd0] sm:$0xff] %v3487
      %3524 = vst [vmem:[#allocation2 + $0xd8] sm:$0xff] %v3488
      %3525 = vst [vmem:[#allocation2 + $0xe0] sm:$0xff] %v3489
      %3526 = vst [vmem:[#allocation2 + $0xe8] sm:$0xff] %v3490
      %3527 = vst [vmem:[#allocation2 + $0xf0] sm:$0xff] %v3491
      %3528 = vst [vmem:[#allocation2 + $0xf8] sm:$0xff] %v3492
      %3529 = vst [vmem:[#allocation2 + $0x100] sm:$0xff] %v3493
      %3530 = vst [vmem:[#allocation2 + $0x108] sm:$0xff] %v3494
      %3531 = vst [vmem:[#allocation2 + $0x110] sm:$0xff] %v3495
      %3532 = vst [vmem:[#allocation2 + $0x118] sm:$0xff] %v3496
      %v3533 = vld [vmem:[%s206 + $0x10] sm:$0xc]
      %v3534 = vld [vmem:[%s206 + $0x14] sm:$0xf]
      %v3535 = vld [vmem:[%s206 + $0x18] sm:$0xf]
      %v3536 = vld [vmem:[%s206 + $0x1c] sm:$0xf]
      %v3537 = vld [vmem:[%s206 + $0x20] sm:$0xf]
      %v3538 = vld [vmem:[%s206 + $0x24] sm:$0xf]
      %v3539 = vld [vmem:[%s206 + $0x28] sm:$0xf]
      %v3540 = vld [vmem:[%s206 + $0x2c] sm:$0xf]
      %v3541 = vld [vmem:[%s206 + $0x30] sm:$0xf]
      %v3542 = vld [vmem:[%s206 + $0x34] sm:$0xf]
      %v3543 = vld [vmem:[%s206 + $0x38] sm:$0xf]
      %v3544 = vld [vmem:[%s206 + $0x3c] sm:$0xf]
      %v3545 = vld [vmem:[%s206 + $0x40] sm:$0xf]
      %v3546 = vld [vmem:[%s206 + $0x44] sm:$0xf]
      %v3547 = vld [vmem:[%s206 + $0x48] sm:$0xf]
      %v3548 = vld [vmem:[%s206 + $0x4c] sm:$0xf]
      %v3549 = vld [vmem:[%s206 + $0x50] sm:$0xf]
      %v3550 = vld [vmem:[%s206 + $0x54] sm:$0xf]
      %v3551 = vld [vmem:[%s206 + $0x58] sm:$0xf]
      %v3552 = vld [vmem:[%s206 + $0x5c] sm:$0xf]
      %v3553 = vld [vmem:[%s206 + $0x60] sm:$0xf]
      %v3554 = vld [vmem:[%s206 + $0x64] sm:$0xf]
      %v3555 = vld [vmem:[%s206 + $0x68] sm:$0xf]
      %v3556 = vld [vmem:[%s206 + $0x6c] sm:$0xf]
      %v3557 = vld [vmem:[%s206 + $0x70] sm:$0xf]
      %v3558 = vld [vmem:[%s206 + $0x74] sm:$0xf]
      %v3559 = vld [vmem:[%s206 + $0x78] sm:$0xf]
      %v3560 = vld [vmem:[%s206 + $0x7c] sm:$0xf]
      %v3561 = vld [vmem:[%s206 + $0x80] sm:$0xf]
      %v3562 = vld [vmem:[%s206 + $0x84] sm:$0xf]
      %v3563 = vld [vmem:[%s206 + $0x88] sm:$0xf]
      %v3564 = vld [vmem:[%s206 + $0x8c] sm:$0xf]
      %v3565 = vld [vmem:[%s206 + $0x90] sm:$0xf]
      %v3566 = vld [vmem:[%s206 + $0x94] sm:$0xf]
      %v3567 = vld [vmem:[%s206 + $0x98] sm:$0xf]
      %v3568 = vld [vmem:[%s206 + $0x9c] sm:$0xf]
      %v3569 = vld [vmem:[%s206 + $0xa0] sm:$0x3]
      %v3570 = vld [vmem:[#allocation2] sm:$0xff]
      %v3571 = vld [vmem:[#allocation2 + $0x8] sm:$0xff]
      %v3572 = vld [vmem:[#allocation2 + $0x10] sm:$0xff]
      %v3573 = vld [vmem:[#allocation2 + $0x18] sm:$0xff]
      %v3574 = vld [vmem:[#allocation2 + $0x20] sm:$0xff]
      %v3575 = vld [vmem:[#allocation2 + $0x28] sm:$0xff]
      %v3576 = vld [vmem:[#allocation2 + $0x30] sm:$0xff]
      %v3577 = vld [vmem:[#allocation2 + $0x38] sm:$0xff]
      %v3578 = vld [vmem:[#allocation2 + $0x40] sm:$0xff]
      %v3579 = vld [vmem:[#allocation2 + $0x48] sm:$0xff]
      %v3580 = vld [vmem:[#allocation2 + $0x50] sm:$0xff]
      %v3581 = vld [vmem:[#allocation2 + $0x58] sm:$0xff]
      %v3582 = vld [vmem:[#allocation2 + $0x60] sm:$0xff]
      %v3583 = vld [vmem:[#allocation2 + $0x68] sm:$0xff]
      %v3584 = vld [vmem:[#allocation2 + $0x70] sm:$0xff]
      %v3585 = vld [vmem:[#allocation2 + $0x78] sm:$0xff]
      %v3586 = vld [vmem:[#allocation2 + $0x80] sm:$0xff]
      %v3587 = vld [vmem:[#allocation2 + $0x88] sm:$0xff]
      %v3588 = vld [vmem:[#allocation2 + $0x90] sm:$0xff]
      %v3589 = vld [vmem:[#allocation2 + $0x98] sm:$0xff]
      %v3590 = vld [vmem:[#allocation2 + $0xa0] sm:$0xff]
      %v3591 = vld [vmem:[#allocation2 + $0xa8] sm:$0xff]
      %v3592 = vld [vmem:[#allocation2 + $0xb0] sm:$0xff]
      %v3593 = vld [vmem:[#allocation2 + $0xb8] sm:$0xff]
      %v3594 = vld [vmem:[#allocation2 + $0xc0] sm:$0xff]
      %v3595 = vld [vmem:[#allocation2 + $0xc8] sm:$0xff]
      %v3596 = vld [vmem:[#allocation2 + $0xd0] sm:$0xff]
      %v3597 = vld [vmem:[#allocation2 + $0xd8] sm:$0xff]
      %v3598 = vld [vmem:[#allocation2 + $0xe0] sm:$0xff]
      %v3599 = vld [vmem:[#allocation2 + $0xe8] sm:$0xff]
      %v3600 = vld [vmem:[#allocation2 + $0xf0] sm:$0xff]
      %v3601 = vld [vmem:[#allocation2 + $0xf8] sm:$0xff]
      %v3602 = vld [vmem:[#allocation2 + $0x100] sm:$0xff]
      %v3603 = vld [vmem:[#allocation2 + $0x108] sm:$0xff]
      %v3604 = vld [vmem:[#allocation2 + $0x110] sm:$0xff]
      %v3605 = vld [vmem:[#allocation2 + $0x118] sm:$0xff]
      %s3606 = scalar_lea.vmem %s210, 12
      %v3607 = vld [vmem:[%s3606] sm:$0x3]
      %v3645 = vunpack.c.l.b16 %v3533
      %v3646 = vunpack.c.l.b16 %v3534
      %v3647 = vunpack.c.l.b16 %v3535
      %v3648 = vunpack.c.l.b16 %v3536
      %v3649 = vunpack.c.l.b16 %v3537
      %v3650 = vunpack.c.l.b16 %v3538
      %v3651 = vunpack.c.l.b16 %v3539
      %v3652 = vunpack.c.l.b16 %v3540
      %v3653 = vunpack.c.l.b16 %v3541
      %v3654 = vunpack.c.l.b16 %v3542
      %v3655 = vunpack.c.l.b16 %v3543
      %v3656 = vunpack.c.l.b16 %v3544
      %v3657 = vunpack.c.l.b16 %v3545
      %v3658 = vunpack.c.l.b16 %v3546
      %v3659 = vunpack.c.l.b16 %v3547
      %v3660 = vunpack.c.l.b16 %v3548
      %v3661 = vunpack.c.l.b16 %v3549
      %v3662 = vunpack.c.l.b16 %v3550
      %v3663 = vunpack.c.l.b16 %v3551
      %v3664 = vunpack.c.l.b16 %v3552
      %v3665 = vunpack.c.l.b16 %v3553
      %v3666 = vunpack.c.l.b16 %v3554
      %v3667 = vunpack.c.l.b16 %v3555
      %v3668 = vunpack.c.l.b16 %v3556
      %v3669 = vunpack.c.l.b16 %v3557
      %v3670 = vunpack.c.l.b16 %v3558
      %v3671 = vunpack.c.l.b16 %v3559
      %v3672 = vunpack.c.l.b16 %v3560
      %v3673 = vunpack.c.l.b16 %v3561
      %v3674 = vunpack.c.l.b16 %v3562
      %v3675 = vunpack.c.l.b16 %v3563
      %v3676 = vunpack.c.l.b16 %v3564
      %v3677 = vunpack.c.l.b16 %v3565
      %v3678 = vunpack.c.l.b16 %v3566
      %v3679 = vunpack.c.l.b16 %v3567
      %v3680 = vunpack.c.l.b16 %v3568
      %v3681 = vunpack.c.l.b16 %v3569
      %v3682 = vpack.c.b16 %v3646, %v3645
      %v3683 = vpack.c.b16 %v3648, %v3647
      %v3684 = vpack.c.b16 %v3650, %v3649
      %v3685 = vpack.c.b16 %v3652, %v3651
      %v3686 = vpack.c.b16 %v3654, %v3653
      %v3687 = vpack.c.b16 %v3656, %v3655
      %v3688 = vpack.c.b16 %v3658, %v3657
      %v3689 = vpack.c.b16 %v3660, %v3659
      %v3690 = vpack.c.b16 %v3662, %v3661
      %v3691 = vpack.c.b16 %v3664, %v3663
      %v3692 = vpack.c.b16 %v3666, %v3665
      %v3693 = vpack.c.b16 %v3668, %v3667
      %v3694 = vpack.c.b16 %v3670, %v3669
      %v3695 = vpack.c.b16 %v3672, %v3671
      %v3696 = vpack.c.b16 %v3674, %v3673
      %v3697 = vpack.c.b16 %v3676, %v3675
      %v3698 = vpack.c.b16 %v3678, %v3677
      %v3699 = vpack.c.b16 %v3680, %v3679
      %v3700 = vpack.c.b16 %v3681, %v3681
      %v3701 = vrot.slane %v3682, 2
      %v3702 = vrot.slane %v3683, 2
      %v3703 = vsel %vm3189, %v3701, %v3702
      %v3704 = vrot.slane %v3684, 2
      %v3705 = vsel %vm3189, %v3702, %v3704
      %v3706 = vrot.slane %v3685, 2
      %v3707 = vsel %vm3189, %v3704, %v3706
      %v3708 = vrot.slane %v3686, 2
      %v3709 = vsel %vm3189, %v3706, %v3708
      %v3710 = vrot.slane %v3687, 2
      %v3711 = vsel %vm3189, %v3708, %v3710
      %v3712 = vrot.slane %v3688, 2
      %v3713 = vsel %vm3189, %v3710, %v3712
      %v3714 = vrot.slane %v3689, 2
      %v3715 = vsel %vm3189, %v3712, %v3714
      %v3716 = vrot.slane %v3690, 2
      %v3717 = vsel %vm3189, %v3714, %v3716
      %v3718 = vrot.slane %v3691, 2
      %v3719 = vsel %vm3189, %v3716, %v3718
      %v3720 = vrot.slane %v3692, 2
      %v3721 = vsel %vm3189, %v3718, %v3720
      %v3722 = vrot.slane %v3693, 2
      %v3723 = vsel %vm3189, %v3720, %v3722
      %v3724 = vrot.slane %v3694, 2
      %v3725 = vsel %vm3189, %v3722, %v3724
      %v3726 = vrot.slane %v3695, 2
      %v3727 = vsel %vm3189, %v3724, %v3726
      %v3728 = vrot.slane %v3696, 2
      %v3729 = vsel %vm3189, %v3726, %v3728
      %v3730 = vrot.slane %v3697, 2
      %v3731 = vsel %vm3189, %v3728, %v3730
      %v3732 = vrot.slane %v3698, 2
      %v3733 = vsel %vm3189, %v3730, %v3732
      %v3734 = vrot.slane %v3699, 2
      %v3735 = vsel %vm3189, %v3732, %v3734
      %v3736 = vrot.slane %v3700, 2
      %v3737 = vsel %vm3189, %v3734, %v3736
      %v3739 = vsel %vm422, %v3703, 0
      %v3742 = vsel %vm422, %v3705, 0
      %v3745 = vsel %vm422, %v3707, 0
      %v3748 = vsel %vm422, %v3709, 0
      %v3751 = vsel %vm422, %v3711, 0
      %v3754 = vsel %vm422, %v3713, 0
      %v3757 = vsel %vm422, %v3715, 0
      %v3760 = vsel %vm422, %v3717, 0
      %v3763 = vsel %vm422, %v3719, 0
      %v3766 = vsel %vm422, %v3721, 0
      %v3769 = vsel %vm422, %v3723, 0
      %v3772 = vsel %vm422, %v3725, 0
      %v3775 = vsel %vm422, %v3727, 0
      %v3778 = vsel %vm422, %v3729, 0
      %v3781 = vsel %vm422, %v3731, 0
      %v3784 = vsel %vm422, %v3733, 0
      %v3787 = vsel %vm422, %v3735, 0
      %v3790 = vsel %vm422, %v3737, 0
      %v3793 = vsel %vm477, %v3607, 0
      %3795 = vmatprep.subr.bf16.mxu0 0
      %3796 = vmatpush1.bf16.msra.mxu0 %v3793
      %3797 = vmatprep.subr.bf16.mxu0 0
      %3798 = vmatpush1.bf16.msra.mxu0 0
      %3799 = vmatprep.subr.bf16.mxu0 0
      %3800 = vmatpush1.bf16.msra.mxu0 0
      %3801 = vmatprep.subr.bf16.mxu0 0
      %3802 = vmatpush1.bf16.msra.mxu0 0
      %3803 = vmatprep.subr.bf16.mxu0 0
      %3804 = vmatpush1.bf16.msra.mxu0 0
      %3805 = vmatprep.subr.bf16.mxu0 0
      %3806 = vmatpush1.bf16.msra.mxu0 0
      %3807 = vmatprep.subr.bf16.mxu0 0
      %3808 = vmatpush1.bf16.msra.mxu0 0
      %3809 = vmatprep.subr.bf16.mxu0 0
      %3810 = vmatpush1.bf16.msra.mxu0 0
      %3811 = vmatprep.subr.bf16.mxu0 0
      %3812 = vmatpush1.bf16.msra.mxu0 0
      %3813 = vmatprep.subr.bf16.mxu0 0
      %3814 = vmatpush1.bf16.msra.mxu0 0
      %3815 = vmatprep.subr.bf16.mxu0 0
      %3816 = vmatpush1.bf16.msra.mxu0 0
      %3817 = vmatprep.subr.bf16.mxu0 0
      %3818 = vmatpush1.bf16.msra.mxu0 0
      %3819 = vmatprep.subr.bf16.mxu0 0
      %3820 = vmatpush1.bf16.msra.mxu0 0
      %3821 = vmatprep.subr.bf16.mxu0 0
      %3822 = vmatpush1.bf16.msra.mxu0 0
      %3823 = vmatprep.subr.bf16.mxu0 0
      %3824 = vmatpush1.bf16.msra.mxu0 0
      %3825 = vmatprep.subr.bf16.mxu0 0
      %3826 = vmatpush1.bf16.msra.mxu0 0
      %3827 = vmatprep.mubr.bf16.mxu0 0
      %3828 = vmatmul.mubr.bf16.gmra.mrb[0].mxu0 %v3739
      %v3829 = vpop.f32.mrb[0].mxu0
      %v3830 = vadd.f32 0.0, %v3829
      %v3831 = vpop.f32.mrb[0].mxu0
      %v3832 = vpop.f32.mrb[0].mxu0
      %v3833 = vadd.f32 0.0, %v3832
      %v3834 = vpop.f32.mrb[0].mxu0
      %3835 = vmatprep.mubr.bf16.mxu0 0
      %3836 = vmatmul.mubr.bf16.gmra.mrb[0].mxu0 %v3742
      %v3837 = vpop.f32.mrb[0].mxu0
      %v3838 = vadd.f32 0.0, %v3837
      %v3839 = vpop.f32.mrb[0].mxu0
      %v3840 = vpop.f32.mrb[0].mxu0
      %v3841 = vadd.f32 0.0, %v3840
      %v3842 = vpop.f32.mrb[0].mxu0
      %3843 = vmatprep.mubr.bf16.mxu0 0
      %3844 = vmatmul.mubr.bf16.gmra.mrb[0].mxu0 %v3745
      %v3845 = vpop.f32.mrb[0].mxu0
      %v3846 = vadd.f32 0.0, %v3845
      %v3847 = vpop.f32.mrb[0].mxu0
      %v3848 = vpop.f32.mrb[0].mxu0
      %v3849 = vadd.f32 0.0, %v3848
      %v3850 = vpop.f32.mrb[0].mxu0
      %3851 = vmatprep.mubr.bf16.mxu0 0
      %3852 = vmatmul.mubr.bf16.gmra.mrb[0].mxu0 %v3748
      %v3853 = vpop.f32.mrb[0].mxu0
      %v3854 = vadd.f32 0.0, %v3853
      %v3855 = vpop.f32.mrb[0].mxu0
      %v3856 = vpop.f32.mrb[0].mxu0
      %v3857 = vadd.f32 0.0, %v3856
      %v3858 = vpop.f32.mrb[0].mxu0
      %3859 = vmatprep.mubr.bf16.mxu0 0
      %3860 = vmatmul.mubr.bf16.gmra.mrb[0].mxu0 %v3751
      %v3861 = vpop.f32.mrb[0].mxu0
      %v3862 = vadd.f32 0.0, %v3861
      %v3863 = vpop.f32.mrb[0].mxu0
      %v3864 = vpop.f32.mrb[0].mxu0
      %v3865 = vadd.f32 0.0, %v3864
      %v3866 = vpop.f32.mrb[0].mxu0
      %3867 = vmatprep.mubr.bf16.mxu0 0
      %3868 = vmatmul.mubr.bf16.gmra.mrb[0].mxu0 %v3754
      %v3869 = vpop.f32.mrb[0].mxu0
      %v3870 = vadd.f32 0.0, %v3869
      %v3871 = vpop.f32.mrb[0].mxu0
      %v3872 = vpop.f32.mrb[0].mxu0
      %v3873 = vadd.f32 0.0, %v3872
      %v3874 = vpop.f32.mrb[0].mxu0
      %3875 = vmatprep.mubr.bf16.mxu0 0
      %3876 = vmatmul.mubr.bf16.gmra.mrb[0].mxu0 %v3757
      %v3877 = vpop.f32.mrb[0].mxu0
      %v3878 = vadd.f32 0.0, %v3877
      %v3879 = vpop.f32.mrb[0].mxu0
      %v3880 = vpop.f32.mrb[0].mxu0
      %v3881 = vadd.f32 0.0, %v3880
      %v3882 = vpop.f32.mrb[0].mxu0
      %3883 = vmatprep.mubr.bf16.mxu0 0
      %3884 = vmatmul.mubr.bf16.gmra.mrb[0].mxu0 %v3760
      %v3885 = vpop.f32.mrb[0].mxu0
      %v3886 = vadd.f32 0.0, %v3885
      %v3887 = vpop.f32.mrb[0].mxu0
      %v3888 = vpop.f32.mrb[0].mxu0
      %v3889 = vadd.f32 0.0, %v3888
      %v3890 = vpop.f32.mrb[0].mxu0
      %3891 = vmatprep.mubr.bf16.mxu0 0
      %3892 = vmatmul.mubr.bf16.gmra.mrb[0].mxu0 %v3763
      %v3893 = vpop.f32.mrb[0].mxu0
      %v3894 = vadd.f32 0.0, %v3893
      %v3895 = vpop.f32.mrb[0].mxu0
      %v3896 = vpop.f32.mrb[0].mxu0
      %v3897 = vadd.f32 0.0, %v3896
      %v3898 = vpop.f32.mrb[0].mxu0
      %3899 = vmatprep.mubr.bf16.mxu0 0
      %3900 = vmatmul.mubr.bf16.gmra.mrb[0].mxu0 %v3766
      %v3901 = vpop.f32.mrb[0].mxu0
      %v3902 = vadd.f32 0.0, %v3901
      %v3903 = vpop.f32.mrb[0].mxu0
      %v3904 = vpop.f32.mrb[0].mxu0
      %v3905 = vadd.f32 0.0, %v3904
      %v3906 = vpop.f32.mrb[0].mxu0
      %3907 = vmatprep.mubr.bf16.mxu0 0
      %3908 = vmatmul.mubr.bf16.gmra.mrb[0].mxu0 %v3769
      %v3909 = vpop.f32.mrb[0].mxu0
      %v3910 = vadd.f32 0.0, %v3909
      %v3911 = vpop.f32.mrb[0].mxu0
      %v3912 = vpop.f32.mrb[0].mxu0
      %v3913 = vadd.f32 0.0, %v3912
      %v3914 = vpop.f32.mrb[0].mxu0
      %3915 = vmatprep.mubr.bf16.mxu0 0
      %3916 = vmatmul.mubr.bf16.gmra.mrb[0].mxu0 %v3772
      %v3917 = vpop.f32.mrb[0].mxu0
      %v3918 = vadd.f32 0.0, %v3917
      %v3919 = vpop.f32.mrb[0].mxu0
      %v3920 = vpop.f32.mrb[0].mxu0
      %v3921 = vadd.f32 0.0, %v3920
      %v3922 = vpop.f32.mrb[0].mxu0
      %3923 = vmatprep.mubr.bf16.mxu0 0
      %3924 = vmatmul.mubr.bf16.gmra.mrb[0].mxu0 %v3775
      %v3925 = vpop.f32.mrb[0].mxu0
      %v3926 = vadd.f32 0.0, %v3925
      %v3927 = vpop.f32.mrb[0].mxu0
      %v3928 = vpop.f32.mrb[0].mxu0
      %v3929 = vadd.f32 0.0, %v3928
      %v3930 = vpop.f32.mrb[0].mxu0
      %3931 = vmatprep.mubr.bf16.mxu0 0
      %3932 = vmatmul.mubr.bf16.gmra.mrb[0].mxu0 %v3778
      %v3933 = vpop.f32.mrb[0].mxu0
      %v3934 = vadd.f32 0.0, %v3933
      %v3935 = vpop.f32.mrb[0].mxu0
      %v3936 = vpop.f32.mrb[0].mxu0
      %v3937 = vadd.f32 0.0, %v3936
      %v3938 = vpop.f32.mrb[0].mxu0
      %3939 = vmatprep.mubr.bf16.mxu0 0
      %3940 = vmatmul.mubr.bf16.gmra.mrb[0].mxu0 %v3781
      %v3941 = vpop.f32.mrb[0].mxu0
      %v3942 = vadd.f32 0.0, %v3941
      %v3943 = vpop.f32.mrb[0].mxu0
      %v3944 = vpop.f32.mrb[0].mxu0
      %v3945 = vadd.f32 0.0, %v3944
      %v3946 = vpop.f32.mrb[0].mxu0
      %3947 = vmatprep.mubr.bf16.mxu0 0
      %3948 = vmatmul.mubr.bf16.gmra.mrb[0].mxu0 %v3784
      %v3949 = vpop.f32.mrb[0].mxu0
      %v3950 = vadd.f32 0.0, %v3949
      %v3951 = vpop.f32.mrb[0].mxu0
      %v3952 = vpop.f32.mrb[0].mxu0
      %v3953 = vadd.f32 0.0, %v3952
      %v3954 = vpop.f32.mrb[0].mxu0
      %3955 = vmatprep.mubr.bf16.mxu0 0
      %3956 = vmatmul.mubr.bf16.gmra.mrb[0].mxu0 %v3787
      %v3957 = vpop.f32.mrb[0].mxu0
      %v3958 = vadd.f32 0.0, %v3957
      %v3959 = vpop.f32.mrb[0].mxu0
      %v3960 = vpop.f32.mrb[0].mxu0
      %v3961 = vadd.f32 0.0, %v3960
      %v3962 = vpop.f32.mrb[0].mxu0
      %3963 = vmatprep.mubr.bf16.mxu0 0
      %3964 = vmatmul.mubr.bf16.gmra.mrb[0].mxu0 %v3790
      %v3965 = vpop.f32.mrb[0].mxu0
      %v3966 = vadd.f32 0.0, %v3965
      %v3967 = vpop.f32.mrb[0].mxu0
      %v3968 = vpop.f32.mrb[0].mxu0
      %v3969 = vadd.f32 0.0, %v3968
      %v3970 = vpop.f32.mrb[0].mxu0
      %3971 = vdwg.mxu0
      %v3972 = vadd.f32 %v3570, %v3830
      %v3973 = vadd.f32 %v3571, %v3833
      %v3974 = vadd.f32 %v3572, %v3838
      %v3975 = vadd.f32 %v3573, %v3841
      %v3976 = vadd.f32 %v3574, %v3846
      %v3977 = vadd.f32 %v3575, %v3849
      %v3978 = vadd.f32 %v3576, %v3854
      %v3979 = vadd.f32 %v3577, %v3857
      %v3980 = vadd.f32 %v3578, %v3862
      %v3981 = vadd.f32 %v3579, %v3865
      %v3982 = vadd.f32 %v3580, %v3870
      %v3983 = vadd.f32 %v3581, %v3873
      %v3984 = vadd.f32 %v3582, %v3878
      %v3985 = vadd.f32 %v3583, %v3881
      %v3986 = vadd.f32 %v3584, %v3886
      %v3987 = vadd.f32 %v3585, %v3889
      %v3988 = vadd.f32 %v3586, %v3894
      %v3989 = vadd.f32 %v3587, %v3897
      %v3990 = vadd.f32 %v3588, %v3902
      %v3991 = vadd.f32 %v3589, %v3905
      %v3992 = vadd.f32 %v3590, %v3910
      %v3993 = vadd.f32 %v3591, %v3913
      %v3994 = vadd.f32 %v3592, %v3918
      %v3995 = vadd.f32 %v3593, %v3921
      %v3996 = vadd.f32 %v3594, %v3926
      %v3997 = vadd.f32 %v3595, %v3929
      %v3998 = vadd.f32 %v3596, %v3934
      %v3999 = vadd.f32 %v3597, %v3937
      %v4000 = vadd.f32 %v3598, %v3942
      %v4001 = vadd.f32 %v3599, %v3945
      %v4002 = vadd.f32 %v3600, %v3950
      %v4003 = vadd.f32 %v3601, %v3953
      %v4004 = vadd.f32 %v3602, %v3958
      %v4005 = vadd.f32 %v3603, %v3961
      %v4006 = vadd.f32 %v3604, %v3966
      %v4007 = vadd.f32 %v3605, %v3969
      %4008 = vst [vmem:[#allocation2] sm:$0xff] %v3972
      %4009 = vst [vmem:[#allocation2 + $0x8] sm:$0xff] %v3973
      %4010 = vst [vmem:[#allocation2 + $0x10] sm:$0xff] %v3974
      %4011 = vst [vmem:[#allocation2 + $0x18] sm:$0xff] %v3975
      %4012 = vst [vmem:[#allocation2 + $0x20] sm:$0xff] %v3976
      %4013 = vst [vmem:[#allocation2 + $0x28] sm:$0xff] %v3977
      %4014 = vst [vmem:[#allocation2 + $0x30] sm:$0xff] %v3978
      %4015 = vst [vmem:[#allocation2 + $0x38] sm:$0xff] %v3979
      %4016 = vst [vmem:[#allocation2 + $0x40] sm:$0xff] %v3980
      %4017 = vst [vmem:[#allocation2 + $0x48] sm:$0xff] %v3981
      %4018 = vst [vmem:[#allocation2 + $0x50] sm:$0xff] %v3982
      %4019 = vst [vmem:[#allocation2 + $0x58] sm:$0xff] %v3983
      %4020 = vst [vmem:[#allocation2 + $0x60] sm:$0xff] %v3984
      %4021 = vst [vmem:[#allocation2 + $0x68] sm:$0xff] %v3985
      %4022 = vst [vmem:[#allocation2 + $0x70] sm:$0xff] %v3986
      %4023 = vst [vmem:[#allocation2 + $0x78] sm:$0xff] %v3987
      %4024 = vst [vmem:[#allocation2 + $0x80] sm:$0xff] %v3988
      %4025 = vst [vmem:[#allocation2 + $0x88] sm:$0xff] %v3989
      %4026 = vst [vmem:[#allocation2 + $0x90] sm:$0xff] %v3990
      %4027 = vst [vmem:[#allocation2 + $0x98] sm:$0xff] %v3991
      %4028 = vst [vmem:[#allocation2 + $0xa0] sm:$0xff] %v3992
      %4029 = vst [vmem:[#allocation2 + $0xa8] sm:$0xff] %v3993
      %4030 = vst [vmem:[#allocation2 + $0xb0] sm:$0xff] %v3994
      %4031 = vst [vmem:[#allocation2 + $0xb8] sm:$0xff] %v3995
      %4032 = vst [vmem:[#allocation2 + $0xc0] sm:$0xff] %v3996
      %4033 = vst [vmem:[#allocation2 + $0xc8] sm:$0xff] %v3997
      %4034 = vst [vmem:[#allocation2 + $0xd0] sm:$0xff] %v3998
      %4035 = vst [vmem:[#allocation2 + $0xd8] sm:$0xff] %v3999
      %4036 = vst [vmem:[#allocation2 + $0xe0] sm:$0xff] %v4000
      %4037 = vst [vmem:[#allocation2 + $0xe8] sm:$0xff] %v4001
      %4038 = vst [vmem:[#allocation2 + $0xf0] sm:$0xff] %v4002
      %4039 = vst [vmem:[#allocation2 + $0xf8] sm:$0xff] %v4003
      %4040 = vst [vmem:[#allocation2 + $0x100] sm:$0xff] %v4004
      %4041 = vst [vmem:[#allocation2 + $0x108] sm:$0xff] %v4005
      %4042 = vst [vmem:[#allocation2 + $0x110] sm:$0xff] %v4006
      %4043 = vst [vmem:[#allocation2 + $0x118] sm:$0xff] %v4007
      %v4044 = vld [vmem:[%s206 + $0x10] sm:$0xc]
      %v4045 = vld [vmem:[%s206 + $0x14] sm:$0xf]
      %v4046 = vld [vmem:[%s206 + $0x18] sm:$0xf]
      %v4047 = vld [vmem:[%s206 + $0x1c] sm:$0xf]
      %v4048 = vld [vmem:[%s206 + $0x20] sm:$0xf]
      %v4049 = vld [vmem:[%s206 + $0x24] sm:$0xf]
      %v4050 = vld [vmem:[%s206 + $0x28] sm:$0xf]
      %v4051 = vld [vmem:[%s206 + $0x2c] sm:$0xf]
      %v4052 = vld [vmem:[%s206 + $0x30] sm:$0xf]
      %v4053 = vld [vmem:[%s206 + $0x34] sm:$0xf]
      %v4054 = vld [vmem:[%s206 + $0x38] sm:$0xf]
      %v4055 = vld [vmem:[%s206 + $0x3c] sm:$0xf]
      %v4056 = vld [vmem:[%s206 + $0x40] sm:$0xf]
      %v4057 = vld [vmem:[%s206 + $0x44] sm:$0xf]
      %v4058 = vld [vmem:[%s206 + $0x48] sm:$0xf]
      %v4059 = vld [vmem:[%s206 + $0x4c] sm:$0xf]
      %v4060 = vld [vmem:[%s206 + $0x50] sm:$0xf]
      %v4061 = vld [vmem:[%s206 + $0x54] sm:$0xf]
      %v4062 = vld [vmem:[%s206 + $0x58] sm:$0xf]
      %v4063 = vld [vmem:[%s206 + $0x5c] sm:$0xf]
      %v4064 = vld [vmem:[%s206 + $0x60] sm:$0xf]
      %v4065 = vld [vmem:[%s206 + $0x64] sm:$0xf]
      %v4066 = vld [vmem:[%s206 + $0x68] sm:$0xf]
      %v4067 = vld [vmem:[%s206 + $0x6c] sm:$0xf]
      %v4068 = vld [vmem:[%s206 + $0x70] sm:$0xf]
      %v4069 = vld [vmem:[%s206 + $0x74] sm:$0xf]
      %v4070 = vld [vmem:[%s206 + $0x78] sm:$0xf]
      %v4071 = vld [vmem:[%s206 + $0x7c] sm:$0xf]
      %v4072 = vld [vmem:[%s206 + $0x80] sm:$0xf]
      %v4073 = vld [vmem:[%s206 + $0x84] sm:$0xf]
      %v4074 = vld [vmem:[%s206 + $0x88] sm:$0xf]
      %v4075 = vld [vmem:[%s206 + $0x8c] sm:$0xf]
      %v4076 = vld [vmem:[%s206 + $0x90] sm:$0xf]
      %v4077 = vld [vmem:[%s206 + $0x94] sm:$0xf]
      %v4078 = vld [vmem:[%s206 + $0x98] sm:$0xf]
      %v4079 = vld [vmem:[%s206 + $0x9c] sm:$0xf]
      %v4080 = vld [vmem:[%s206 + $0xa0] sm:$0x7]
      %v4081 = vld [vmem:[#allocation2] sm:$0xff]
      %v4082 = vld [vmem:[#allocation2 + $0x8] sm:$0xff]
      %v4083 = vld [vmem:[#allocation2 + $0x10] sm:$0xff]
      %v4084 = vld [vmem:[#allocation2 + $0x18] sm:$0xff]
      %v4085 = vld [vmem:[#allocation2 + $0x20] sm:$0xff]
      %v4086 = vld [vmem:[#allocation2 + $0x28] sm:$0xff]
      %v4087 = vld [vmem:[#allocation2 + $0x30] sm:$0xff]
      %v4088 = vld [vmem:[#allocation2 + $0x38] sm:$0xff]
      %v4089 = vld [vmem:[#allocation2 + $0x40] sm:$0xff]
      %v4090 = vld [vmem:[#allocation2 + $0x48] sm:$0xff]
      %v4091 = vld [vmem:[#allocation2 + $0x50] sm:$0xff]
      %v4092 = vld [vmem:[#allocation2 + $0x58] sm:$0xff]
      %v4093 = vld [vmem:[#allocation2 + $0x60] sm:$0xff]
      %v4094 = vld [vmem:[#allocation2 + $0x68] sm:$0xff]
      %v4095 = vld [vmem:[#allocation2 + $0x70] sm:$0xff]
      %v4096 = vld [vmem:[#allocation2 + $0x78] sm:$0xff]
      %v4097 = vld [vmem:[#allocation2 + $0x80] sm:$0xff]
      %v4098 = vld [vmem:[#allocation2 + $0x88] sm:$0xff]
      %v4099 = vld [vmem:[#allocation2 + $0x90] sm:$0xff]
      %v4100 = vld [vmem:[#allocation2 + $0x98] sm:$0xff]
      %v4101 = vld [vmem:[#allocation2 + $0xa0] sm:$0xff]
      %v4102 = vld [vmem:[#allocation2 + $0xa8] sm:$0xff]
      %v4103 = vld [vmem:[#allocation2 + $0xb0] sm:$0xff]
      %v4104 = vld [vmem:[#allocation2 + $0xb8] sm:$0xff]
      %v4105 = vld [vmem:[#allocation2 + $0xc0] sm:$0xff]
      %v4106 = vld [vmem:[#allocation2 + $0xc8] sm:$0xff]
      %v4107 = vld [vmem:[#allocation2 + $0xd0] sm:$0xff]
      %v4108 = vld [vmem:[#allocation2 + $0xd8] sm:$0xff]
      %v4109 = vld [vmem:[#allocation2 + $0xe0] sm:$0xff]
      %v4110 = vld [vmem:[#allocation2 + $0xe8] sm:$0xff]
      %v4111 = vld [vmem:[#allocation2 + $0xf0] sm:$0xff]
      %v4112 = vld [vmem:[#allocation2 + $0xf8] sm:$0xff]
      %v4113 = vld [vmem:[#allocation2 + $0x100] sm:$0xff]
      %v4114 = vld [vmem:[#allocation2 + $0x108] sm:$0xff]
      %v4115 = vld [vmem:[#allocation2 + $0x110] sm:$0xff]
      %v4116 = vld [vmem:[#allocation2 + $0x118] sm:$0xff]
      %s4117 = scalar_lea.vmem %s210, 14
      %v4118 = vld [vmem:[%s4117] sm:$0x3]
      %v4156 = vunpack.c.l.b16 %v4044
      %v4157 = vunpack.c.l.b16 %v4045
      %v4158 = vunpack.c.l.b16 %v4046
      %v4159 = vunpack.c.l.b16 %v4047
      %v4160 = vunpack.c.l.b16 %v4048
      %v4161 = vunpack.c.l.b16 %v4049
      %v4162 = vunpack.c.l.b16 %v4050
      %v4163 = vunpack.c.l.b16 %v4051
      %v4164 = vunpack.c.l.b16 %v4052
      %v4165 = vunpack.c.l.b16 %v4053
      %v4166 = vunpack.c.l.b16 %v4054
      %v4167 = vunpack.c.l.b16 %v4055
      %v4168 = vunpack.c.l.b16 %v4056
      %v4169 = vunpack.c.l.b16 %v4057
      %v4170 = vunpack.c.l.b16 %v4058
      %v4171 = vunpack.c.l.b16 %v4059
      %v4172 = vunpack.c.l.b16 %v4060
      %v4173 = vunpack.c.l.b16 %v4061
      %v4174 = vunpack.c.l.b16 %v4062
      %v4175 = vunpack.c.l.b16 %v4063
      %v4176 = vunpack.c.l.b16 %v4064
      %v4177 = vunpack.c.l.b16 %v4065
      %v4178 = vunpack.c.l.b16 %v4066
      %v4179 = vunpack.c.l.b16 %v4067
      %v4180 = vunpack.c.l.b16 %v4068
      %v4181 = vunpack.c.l.b16 %v4069
      %v4182 = vunpack.c.l.b16 %v4070
      %v4183 = vunpack.c.l.b16 %v4071
      %v4184 = vunpack.c.l.b16 %v4072
      %v4185 = vunpack.c.l.b16 %v4073
      %v4186 = vunpack.c.l.b16 %v4074
      %v4187 = vunpack.c.l.b16 %v4075
      %v4188 = vunpack.c.l.b16 %v4076
      %v4189 = vunpack.c.l.b16 %v4077
      %v4190 = vunpack.c.l.b16 %v4078
      %v4191 = vunpack.c.l.b16 %v4079
      %v4192 = vunpack.c.l.b16 %v4080
      %v4193 = vpack.c.b16 %v4157, %v4156
      %v4194 = vpack.c.b16 %v4159, %v4158
      %v4195 = vpack.c.b16 %v4161, %v4160
      %v4196 = vpack.c.b16 %v4163, %v4162
      %v4197 = vpack.c.b16 %v4165, %v4164
      %v4198 = vpack.c.b16 %v4167, %v4166
      %v4199 = vpack.c.b16 %v4169, %v4168
      %v4200 = vpack.c.b16 %v4171, %v4170
      %v4201 = vpack.c.b16 %v4173, %v4172
      %v4202 = vpack.c.b16 %v4175, %v4174
      %v4203 = vpack.c.b16 %v4177, %v4176
      %v4204 = vpack.c.b16 %v4179, %v4178
      %v4205 = vpack.c.b16 %v4181, %v4180
      %v4206 = vpack.c.b16 %v4183, %v4182
      %v4207 = vpack.c.b16 %v4185, %v4184
      %v4208 = vpack.c.b16 %v4187, %v4186
      %v4209 = vpack.c.b16 %v4189, %v4188
      %v4210 = vpack.c.b16 %v4191, %v4190
      %v4211 = vpack.c.b16 %v4192, %v4192
      %vm4212 = vsmask.f32 5376
      %v4214 = vshrl.u32 %v4193, 16
      %v4216 = vrot.slane %v4214, 2
      %v4217 = vshll.u32 %v4193, 16
      %v4219 = vrot.slane %v4217, 3
      %v4220 = vor.u32 %v4216, %v4219
      %v4222 = vshrl.u32 %v4194, 16
      %v4224 = vrot.slane %v4222, 2
      %v4225 = vshll.u32 %v4194, 16
      %v4227 = vrot.slane %v4225, 3
      %v4228 = vor.u32 %v4224, %v4227
      %v4229 = vsel %vm4212, %v4220, %v4228
      %v4231 = vshrl.u32 %v4195, 16
      %v4233 = vrot.slane %v4231, 2
      %v4234 = vshll.u32 %v4195, 16
      %v4236 = vrot.slane %v4234, 3
      %v4237 = vor.u32 %v4233, %v4236
      %v4238 = vsel %vm4212, %v4228, %v4237
      %v4240 = vshrl.u32 %v4196, 16
      %v4242 = vrot.slane %v4240, 2
      %v4243 = vshll.u32 %v4196, 16
      %v4245 = vrot.slane %v4243, 3
      %v4246 = vor.u32 %v4242, %v4245
      %v4247 = vsel %vm4212, %v4237, %v4246
      %v4249 = vshrl.u32 %v4197, 16
      %v4251 = vrot.slane %v4249, 2
      %v4252 = vshll.u32 %v4197, 16
      %v4254 = vrot.slane %v4252, 3
      %v4255 = vor.u32 %v4251, %v4254
      %v4256 = vsel %vm4212, %v4246, %v4255
      %v4258 = vshrl.u32 %v4198, 16
      %v4260 = vrot.slane %v4258, 2
      %v4261 = vshll.u32 %v4198, 16
      %v4263 = vrot.slane %v4261, 3
      %v4264 = vor.u32 %v4260, %v4263
      %v4265 = vsel %vm4212, %v4255, %v4264
      %v4267 = vshrl.u32 %v4199, 16
      %v4269 = vrot.slane %v4267, 2
      %v4270 = vshll.u32 %v4199, 16
      %v4272 = vrot.slane %v4270, 3
      %v4273 = vor.u32 %v4269, %v4272
      %v4274 = vsel %vm4212, %v4264, %v4273
      %v4276 = vshrl.u32 %v4200, 16
      %v4278 = vrot.slane %v4276, 2
      %v4279 = vshll.u32 %v4200, 16
      %v4281 = vrot.slane %v4279, 3
      %v4282 = vor.u32 %v4278, %v4281
      %v4283 = vsel %vm4212, %v4273, %v4282
      %v4285 = vshrl.u32 %v4201, 16
      %v4287 = vrot.slane %v4285, 2
      %v4288 = vshll.u32 %v4201, 16
      %v4290 = vrot.slane %v4288, 3
      %v4291 = vor.u32 %v4287, %v4290
      %v4292 = vsel %vm4212, %v4282, %v4291
      %v4294 = vshrl.u32 %v4202, 16
      %v4296 = vrot.slane %v4294, 2
      %v4297 = vshll.u32 %v4202, 16
      %v4299 = vrot.slane %v4297, 3
      %v4300 = vor.u32 %v4296, %v4299
      %v4301 = vsel %vm4212, %v4291, %v4300
      %v4303 = vshrl.u32 %v4203, 16
      %v4305 = vrot.slane %v4303, 2
      %v4306 = vshll.u32 %v4203, 16
      %v4308 = vrot.slane %v4306, 3
      %v4309 = vor.u32 %v4305, %v4308
      %v4310 = vsel %vm4212, %v4300, %v4309
      %v4312 = vshrl.u32 %v4204, 16
      %v4314 = vrot.slane %v4312, 2
      %v4315 = vshll.u32 %v4204, 16
      %v4317 = vrot.slane %v4315, 3
      %v4318 = vor.u32 %v4314, %v4317
      %v4319 = vsel %vm4212, %v4309, %v4318
      %v4321 = vshrl.u32 %v4205, 16
      %v4323 = vrot.slane %v4321, 2
      %v4324 = vshll.u32 %v4205, 16
      %v4326 = vrot.slane %v4324, 3
      %v4327 = vor.u32 %v4323, %v4326
      %v4328 = vsel %vm4212, %v4318, %v4327
      %v4330 = vshrl.u32 %v4206, 16
      %v4332 = vrot.slane %v4330, 2
      %v4333 = vshll.u32 %v4206, 16
      %v4335 = vrot.slane %v4333, 3
      %v4336 = vor.u32 %v4332, %v4335
      %v4337 = vsel %vm4212, %v4327, %v4336
      %v4339 = vshrl.u32 %v4207, 16
      %v4341 = vrot.slane %v4339, 2
      %v4342 = vshll.u32 %v4207, 16
      %v4344 = vrot.slane %v4342, 3
      %v4345 = vor.u32 %v4341, %v4344
      %v4346 = vsel %vm4212, %v4336, %v4345
      %v4348 = vshrl.u32 %v4208, 16
      %v4350 = vrot.slane %v4348, 2
      %v4351 = vshll.u32 %v4208, 16
      %v4353 = vrot.slane %v4351, 3
      %v4354 = vor.u32 %v4350, %v4353
      %v4355 = vsel %vm4212, %v4345, %v4354
      %v4357 = vshrl.u32 %v4209, 16
      %v4359 = vrot.slane %v4357, 2
      %v4360 = vshll.u32 %v4209, 16
      %v4362 = vrot.slane %v4360, 3
      %v4363 = vor.u32 %v4359, %v4362
      %v4364 = vsel %vm4212, %v4354, %v4363
      %v4366 = vshrl.u32 %v4210, 16
      %v4368 = vrot.slane %v4366, 2
      %v4369 = vshll.u32 %v4210, 16
      %v4371 = vrot.slane %v4369, 3
      %v4372 = vor.u32 %v4368, %v4371
      %v4373 = vsel %vm4212, %v4363, %v4372
      %v4375 = vshrl.u32 %v4211, 16
      %v4377 = vrot.slane %v4375, 2
      %v4378 = vshll.u32 %v4211, 16
      %v4380 = vrot.slane %v4378, 3
      %v4381 = vor.u32 %v4377, %v4380
      %v4382 = vsel %vm4212, %v4372, %v4381
      %v4384 = vsel %vm422, %v4229, 0
      %v4387 = vsel %vm422, %v4238, 0
      %v4390 = vsel %vm422, %v4247, 0
      %v4393 = vsel %vm422, %v4256, 0
      %v4396 = vsel %vm422, %v4265, 0
      %v4399 = vsel %vm422, %v4274, 0
      %v4402 = vsel %vm422, %v4283, 0
      %v4405 = vsel %vm422, %v4292, 0
      %v4408 = vsel %vm422, %v4301, 0
      %v4411 = vsel %vm422, %v4310, 0
      %v4414 = vsel %vm422, %v4319, 0
      %v4417 = vsel %vm422, %v4328, 0
      %v4420 = vsel %vm422, %v4337, 0
      %v4423 = vsel %vm422, %v4346, 0
      %v4426 = vsel %vm422, %v4355, 0
      %v4429 = vsel %vm422, %v4364, 0
      %v4432 = vsel %vm422, %v4373, 0
      %v4435 = vsel %vm422, %v4382, 0
      %v4438 = vsel %vm477, %v4118, 0
      %4440 = vmatprep.subr.bf16.mxu0 0
      %4441 = vmatpush1.bf16.msra.mxu0 %v4438
      %4442 = vmatprep.subr.bf16.mxu0 0
      %4443 = vmatpush1.bf16.msra.mxu0 0
      %4444 = vmatprep.subr.bf16.mxu0 0
      %4445 = vmatpush1.bf16.msra.mxu0 0
      %4446 = vmatprep.subr.bf16.mxu0 0
      %4447 = vmatpush1.bf16.msra.mxu0 0
      %4448 = vmatprep.subr.bf16.mxu0 0
      %4449 = vmatpush1.bf16.msra.mxu0 0
      %4450 = vmatprep.subr.bf16.mxu0 0
      %4451 = vmatpush1.bf16.msra.mxu0 0
      %4452 = vmatprep.subr.bf16.mxu0 0
      %4453 = vmatpush1.bf16.msra.mxu0 0
      %4454 = vmatprep.subr.bf16.mxu0 0
      %4455 = vmatpush1.bf16.msra.mxu0 0
      %4456 = vmatprep.subr.bf16.mxu0 0
      %4457 = vmatpush1.bf16.msra.mxu0 0
      %4458 = vmatprep.subr.bf16.mxu0 0
      %4459 = vmatpush1.bf16.msra.mxu0 0
      %4460 = vmatprep.subr.bf16.mxu0 0
      %4461 = vmatpush1.bf16.msra.mxu0 0
      %4462 = vmatprep.subr.bf16.mxu0 0
      %4463 = vmatpush1.bf16.msra.mxu0 0
      %4464 = vmatprep.subr.bf16.mxu0 0
      %4465 = vmatpush1.bf16.msra.mxu0 0
      %4466 = vmatprep.subr.bf16.mxu0 0
      %4467 = vmatpush1.bf16.msra.mxu0 0
      %4468 = vmatprep.subr.bf16.mxu0 0
      %4469 = vmatpush1.bf16.msra.mxu0 0
      %4470 = vmatprep.subr.bf16.mxu0 0
      %4471 = vmatpush1.bf16.msra.mxu0 0
      %4472 = vmatprep.mubr.bf16.mxu0 0
      %4473 = vmatmul.mubr.bf16.gmra.mrb[0].mxu0 %v4384
      %v4474 = vpop.f32.mrb[0].mxu0
      %v4475 = vadd.f32 0.0, %v4474
      %v4476 = vpop.f32.mrb[0].mxu0
      %v4477 = vpop.f32.mrb[0].mxu0
      %v4478 = vadd.f32 0.0, %v4477
      %v4479 = vpop.f32.mrb[0].mxu0
      %4480 = vmatprep.mubr.bf16.mxu0 0
      %4481 = vmatmul.mubr.bf16.gmra.mrb[0].mxu0 %v4387
      %v4482 = vpop.f32.mrb[0].mxu0
      %v4483 = vadd.f32 0.0, %v4482
      %v4484 = vpop.f32.mrb[0].mxu0
      %v4485 = vpop.f32.mrb[0].mxu0
      %v4486 = vadd.f32 0.0, %v4485
      %v4487 = vpop.f32.mrb[0].mxu0
      %4488 = vmatprep.mubr.bf16.mxu0 0
      %4489 = vmatmul.mubr.bf16.gmra.mrb[0].mxu0 %v4390
      %v4490 = vpop.f32.mrb[0].mxu0
      %v4491 = vadd.f32 0.0, %v4490
      %v4492 = vpop.f32.mrb[0].mxu0
      %v4493 = vpop.f32.mrb[0].mxu0
      %v4494 = vadd.f32 0.0, %v4493
      %v4495 = vpop.f32.mrb[0].mxu0
      %4496 = vmatprep.mubr.bf16.mxu0 0
      %4497 = vmatmul.mubr.bf16.gmra.mrb[0].mxu0 %v4393
      %v4498 = vpop.f32.mrb[0].mxu0
      %v4499 = vadd.f32 0.0, %v4498
      %v4500 = vpop.f32.mrb[0].mxu0
      %v4501 = vpop.f32.mrb[0].mxu0
      %v4502 = vadd.f32 0.0, %v4501
      %v4503 = vpop.f32.mrb[0].mxu0
      %4504 = vmatprep.mubr.bf16.mxu0 0
      %4505 = vmatmul.mubr.bf16.gmra.mrb[0].mxu0 %v4396
      %v4506 = vpop.f32.mrb[0].mxu0
      %v4507 = vadd.f32 0.0, %v4506
      %v4508 = vpop.f32.mrb[0].mxu0
      %v4509 = vpop.f32.mrb[0].mxu0
      %v4510 = vadd.f32 0.0, %v4509
      %v4511 = vpop.f32.mrb[0].mxu0
      %4512 = vmatprep.mubr.bf16.mxu0 0
      %4513 = vmatmul.mubr.bf16.gmra.mrb[0].mxu0 %v4399
      %v4514 = vpop.f32.mrb[0].mxu0
      %v4515 = vadd.f32 0.0, %v4514
      %v4516 = vpop.f32.mrb[0].mxu0
      %v4517 = vpop.f32.mrb[0].mxu0
      %v4518 = vadd.f32 0.0, %v4517
      %v4519 = vpop.f32.mrb[0].mxu0
      %4520 = vmatprep.mubr.bf16.mxu0 0
      %4521 = vmatmul.mubr.bf16.gmra.mrb[0].mxu0 %v4402
      %v4522 = vpop.f32.mrb[0].mxu0
      %v4523 = vadd.f32 0.0, %v4522
      %v4524 = vpop.f32.mrb[0].mxu0
      %v4525 = vpop.f32.mrb[0].mxu0
      %v4526 = vadd.f32 0.0, %v4525
      %v4527 = vpop.f32.mrb[0].mxu0
      %4528 = vmatprep.mubr.bf16.mxu0 0
      %4529 = vmatmul.mubr.bf16.gmra.mrb[0].mxu0 %v4405
      %v4530 = vpop.f32.mrb[0].mxu0
      %v4531 = vadd.f32 0.0, %v4530
      %v4532 = vpop.f32.mrb[0].mxu0
      %v4533 = vpop.f32.mrb[0].mxu0
      %v4534 = vadd.f32 0.0, %v4533
      %v4535 = vpop.f32.mrb[0].mxu0
      %4536 = vmatprep.mubr.bf16.mxu0 0
      %4537 = vmatmul.mubr.bf16.gmra.mrb[0].mxu0 %v4408
      %v4538 = vpop.f32.mrb[0].mxu0
      %v4539 = vadd.f32 0.0, %v4538
      %v4540 = vpop.f32.mrb[0].mxu0
      %v4541 = vpop.f32.mrb[0].mxu0
      %v4542 = vadd.f32 0.0, %v4541
      %v4543 = vpop.f32.mrb[0].mxu0
      %4544 = vmatprep.mubr.bf16.mxu0 0
      %4545 = vmatmul.mubr.bf16.gmra.mrb[0].mxu0 %v4411
      %v4546 = vpop.f32.mrb[0].mxu0
      %v4547 = vadd.f32 0.0, %v4546
      %v4548 = vpop.f32.mrb[0].mxu0
      %v4549 = vpop.f32.mrb[0].mxu0
      %v4550 = vadd.f32 0.0, %v4549
      %v4551 = vpop.f32.mrb[0].mxu0
      %4552 = vmatprep.mubr.bf16.mxu0 0
      %4553 = vmatmul.mubr.bf16.gmra.mrb[0].mxu0 %v4414
      %v4554 = vpop.f32.mrb[0].mxu0
      %v4555 = vadd.f32 0.0, %v4554
      %v4556 = vpop.f32.mrb[0].mxu0
      %v4557 = vpop.f32.mrb[0].mxu0
      %v4558 = vadd.f32 0.0, %v4557
      %v4559 = vpop.f32.mrb[0].mxu0
      %4560 = vmatprep.mubr.bf16.mxu0 0
      %4561 = vmatmul.mubr.bf16.gmra.mrb[0].mxu0 %v4417
      %v4562 = vpop.f32.mrb[0].mxu0
      %v4563 = vadd.f32 0.0, %v4562
      %v4564 = vpop.f32.mrb[0].mxu0
      %v4565 = vpop.f32.mrb[0].mxu0
      %v4566 = vadd.f32 0.0, %v4565
      %v4567 = vpop.f32.mrb[0].mxu0
      %4568 = vmatprep.mubr.bf16.mxu0 0
      %4569 = vmatmul.mubr.bf16.gmra.mrb[0].mxu0 %v4420
      %v4570 = vpop.f32.mrb[0].mxu0
      %v4571 = vadd.f32 0.0, %v4570
      %v4572 = vpop.f32.mrb[0].mxu0
      %v4573 = vpop.f32.mrb[0].mxu0
      %v4574 = vadd.f32 0.0, %v4573
      %v4575 = vpop.f32.mrb[0].mxu0
      %4576 = vmatprep.mubr.bf16.mxu0 0
      %4577 = vmatmul.mubr.bf16.gmra.mrb[0].mxu0 %v4423
      %v4578 = vpop.f32.mrb[0].mxu0
      %v4579 = vadd.f32 0.0, %v4578
      %v4580 = vpop.f32.mrb[0].mxu0
      %v4581 = vpop.f32.mrb[0].mxu0
      %v4582 = vadd.f32 0.0, %v4581
      %v4583 = vpop.f32.mrb[0].mxu0
      %4584 = vmatprep.mubr.bf16.mxu0 0
      %4585 = vmatmul.mubr.bf16.gmra.mrb[0].mxu0 %v4426
      %v4586 = vpop.f32.mrb[0].mxu0
      %v4587 = vadd.f32 0.0, %v4586
      %v4588 = vpop.f32.mrb[0].mxu0
      %v4589 = vpop.f32.mrb[0].mxu0
      %v4590 = vadd.f32 0.0, %v4589
      %v4591 = vpop.f32.mrb[0].mxu0
      %4592 = vmatprep.mubr.bf16.mxu0 0
      %4593 = vmatmul.mubr.bf16.gmra.mrb[0].mxu0 %v4429
      %v4594 = vpop.f32.mrb[0].mxu0
      %v4595 = vadd.f32 0.0, %v4594
      %v4596 = vpop.f32.mrb[0].mxu0
      %v4597 = vpop.f32.mrb[0].mxu0
      %v4598 = vadd.f32 0.0, %v4597
      %v4599 = vpop.f32.mrb[0].mxu0
      %4600 = vmatprep.mubr.bf16.mxu0 0
      %4601 = vmatmul.mubr.bf16.gmra.mrb[0].mxu0 %v4432
      %v4602 = vpop.f32.mrb[0].mxu0
      %v4603 = vadd.f32 0.0, %v4602
      %v4604 = vpop.f32.mrb[0].mxu0
      %v4605 = vpop.f32.mrb[0].mxu0
      %v4606 = vadd.f32 0.0, %v4605
      %v4607 = vpop.f32.mrb[0].mxu0
      %4608 = vmatprep.mubr.bf16.mxu0 0
      %4609 = vmatmul.mubr.bf16.gmra.mrb[0].mxu0 %v4435
      %v4610 = vpop.f32.mrb[0].mxu0
      %v4611 = vadd.f32 0.0, %v4610
      %v4612 = vpop.f32.mrb[0].mxu0
      %v4613 = vpop.f32.mrb[0].mxu0
      %v4614 = vadd.f32 0.0, %v4613
      %v4615 = vpop.f32.mrb[0].mxu0
      %4616 = vdwg.mxu0
      %v4617 = vadd.f32 %v4081, %v4475
      %v4618 = vadd.f32 %v4082, %v4478
      %v4619 = vadd.f32 %v4083, %v4483
      %v4620 = vadd.f32 %v4084, %v4486
      %v4621 = vadd.f32 %v4085, %v4491
      %v4622 = vadd.f32 %v4086, %v4494
      %v4623 = vadd.f32 %v4087, %v4499
      %v4624 = vadd.f32 %v4088, %v4502
      %v4625 = vadd.f32 %v4089, %v4507
      %v4626 = vadd.f32 %v4090, %v4510
      %v4627 = vadd.f32 %v4091, %v4515
      %v4628 = vadd.f32 %v4092, %v4518
      %v4629 = vadd.f32 %v4093, %v4523
      %v4630 = vadd.f32 %v4094, %v4526
      %v4631 = vadd.f32 %v4095, %v4531
      %v4632 = vadd.f32 %v4096, %v4534
      %v4633 = vadd.f32 %v4097, %v4539
      %v4634 = vadd.f32 %v4098, %v4542
      %v4635 = vadd.f32 %v4099, %v4547
      %v4636 = vadd.f32 %v4100, %v4550
      %v4637 = vadd.f32 %v4101, %v4555
      %v4638 = vadd.f32 %v4102, %v4558
      %v4639 = vadd.f32 %v4103, %v4563
      %v4640 = vadd.f32 %v4104, %v4566
      %v4641 = vadd.f32 %v4105, %v4571
      %v4642 = vadd.f32 %v4106, %v4574
      %v4643 = vadd.f32 %v4107, %v4579
      %v4644 = vadd.f32 %v4108, %v4582
      %v4645 = vadd.f32 %v4109, %v4587
      %v4646 = vadd.f32 %v4110, %v4590
      %v4647 = vadd.f32 %v4111, %v4595
      %v4648 = vadd.f32 %v4112, %v4598
      %v4649 = vadd.f32 %v4113, %v4603
      %v4650 = vadd.f32 %v4114, %v4606
      %v4651 = vadd.f32 %v4115, %v4611
      %v4652 = vadd.f32 %v4116, %v4614
      %4653 = vst [vmem:[#allocation2] sm:$0xff] %v4617
      %4654 = vst [vmem:[#allocation2 + $0x8] sm:$0xff] %v4618
      %4655 = vst [vmem:[#allocation2 + $0x10] sm:$0xff] %v4619
      %4656 = vst [vmem:[#allocation2 + $0x18] sm:$0xff] %v4620
      %4657 = vst [vmem:[#allocation2 + $0x20] sm:$0xff] %v4621
      %4658 = vst [vmem:[#allocation2 + $0x28] sm:$0xff] %v4622
      %4659 = vst [vmem:[#allocation2 + $0x30] sm:$0xff] %v4623
      %4660 = vst [vmem:[#allocation2 + $0x38] sm:$0xff] %v4624
      %4661 = vst [vmem:[#allocation2 + $0x40] sm:$0xff] %v4625
      %4662 = vst [vmem:[#allocation2 + $0x48] sm:$0xff] %v4626
      %4663 = vst [vmem:[#allocation2 + $0x50] sm:$0xff] %v4627
      %4664 = vst [vmem:[#allocation2 + $0x58] sm:$0xff] %v4628
      %4665 = vst [vmem:[#allocation2 + $0x60] sm:$0xff] %v4629
      %4666 = vst [vmem:[#allocation2 + $0x68] sm:$0xff] %v4630
      %4667 = vst [vmem:[#allocation2 + $0x70] sm:$0xff] %v4631
      %4668 = vst [vmem:[#allocation2 + $0x78] sm:$0xff] %v4632
      %4669 = vst [vmem:[#allocation2 + $0x80] sm:$0xff] %v4633
      %4670 = vst [vmem:[#allocation2 + $0x88] sm:$0xff] %v4634
      %4671 = vst [vmem:[#allocation2 + $0x90] sm:$0xff] %v4635
      %4672 = vst [vmem:[#allocation2 + $0x98] sm:$0xff] %v4636
      %4673 = vst [vmem:[#allocation2 + $0xa0] sm:$0xff] %v4637
      %4674 = vst [vmem:[#allocation2 + $0xa8] sm:$0xff] %v4638
      %4675 = vst [vmem:[#allocation2 + $0xb0] sm:$0xff] %v4639
      %4676 = vst [vmem:[#allocation2 + $0xb8] sm:$0xff] %v4640
      %4677 = vst [vmem:[#allocation2 + $0xc0] sm:$0xff] %v4641
      %4678 = vst [vmem:[#allocation2 + $0xc8] sm:$0xff] %v4642
      %4679 = vst [vmem:[#allocation2 + $0xd0] sm:$0xff] %v4643
      %4680 = vst [vmem:[#allocation2 + $0xd8] sm:$0xff] %v4644
      %4681 = vst [vmem:[#allocation2 + $0xe0] sm:$0xff] %v4645
      %4682 = vst [vmem:[#allocation2 + $0xe8] sm:$0xff] %v4646
      %4683 = vst [vmem:[#allocation2 + $0xf0] sm:$0xff] %v4647
      %4684 = vst [vmem:[#allocation2 + $0xf8] sm:$0xff] %v4648
      %4685 = vst [vmem:[#allocation2 + $0x100] sm:$0xff] %v4649
      %4686 = vst [vmem:[#allocation2 + $0x108] sm:$0xff] %v4650
      %4687 = vst [vmem:[#allocation2 + $0x110] sm:$0xff] %v4651
      %4688 = vst [vmem:[#allocation2 + $0x118] sm:$0xff] %v4652
      %v4689 = vld [vmem:[%s206 + $0x10] sm:$0x8]
      %v4690 = vld [vmem:[%s206 + $0x14] sm:$0xf]
      %v4691 = vld [vmem:[%s206 + $0x18] sm:$0xf]
      %v4692 = vld [vmem:[%s206 + $0x1c] sm:$0xf]
      %v4693 = vld [vmem:[%s206 + $0x20] sm:$0xf]
      %v4694 = vld [vmem:[%s206 + $0x24] sm:$0xf]
      %v4695 = vld [vmem:[%s206 + $0x28] sm:$0xf]
      %v4696 = vld [vmem:[%s206 + $0x2c] sm:$0xf]
      %v4697 = vld [vmem:[%s206 + $0x30] sm:$0xf]
      %v4698 = vld [vmem:[%s206 + $0x34] sm:$0xf]
      %v4699 = vld [vmem:[%s206 + $0x38] sm:$0xf]
      %v4700 = vld [vmem:[%s206 + $0x3c] sm:$0xf]
      %v4701 = vld [vmem:[%s206 + $0x40] sm:$0xf]
      %v4702 = vld [vmem:[%s206 + $0x44] sm:$0xf]
      %v4703 = vld [vmem:[%s206 + $0x48] sm:$0xf]
      %v4704 = vld [vmem:[%s206 + $0x4c] sm:$0xf]
      %v4705 = vld [vmem:[%s206 + $0x50] sm:$0xf]
      %v4706 = vld [vmem:[%s206 + $0x54] sm:$0xf]
      %v4707 = vld [vmem:[%s206 + $0x58] sm:$0xf]
      %v4708 = vld [vmem:[%s206 + $0x5c] sm:$0xf]
      %v4709 = vld [vmem:[%s206 + $0x60] sm:$0xf]
      %v4710 = vld [vmem:[%s206 + $0x64] sm:$0xf]
      %v4711 = vld [vmem:[%s206 + $0x68] sm:$0xf]
      %v4712 = vld [vmem:[%s206 + $0x6c] sm:$0xf]
      %v4713 = vld [vmem:[%s206 + $0x70] sm:$0xf]
      %v4714 = vld [vmem:[%s206 + $0x74] sm:$0xf]
      %v4715 = vld [vmem:[%s206 + $0x78] sm:$0xf]
      %v4716 = vld [vmem:[%s206 + $0x7c] sm:$0xf]
      %v4717 = vld [vmem:[%s206 + $0x80] sm:$0xf]
      %v4718 = vld [vmem:[%s206 + $0x84] sm:$0xf]
      %v4719 = vld [vmem:[%s206 + $0x88] sm:$0xf]
      %v4720 = vld [vmem:[%s206 + $0x8c] sm:$0xf]
      %v4721 = vld [vmem:[%s206 + $0x90] sm:$0xf]
      %v4722 = vld [vmem:[%s206 + $0x94] sm:$0xf]
      %v4723 = vld [vmem:[%s206 + $0x98] sm:$0xf]
      %v4724 = vld [vmem:[%s206 + $0x9c] sm:$0xf]
      %v4725 = vld [vmem:[%s206 + $0xa0] sm:$0x7]
      %v4726 = vld [vmem:[#allocation2] sm:$0xff]
      %v4727 = vld [vmem:[#allocation2 + $0x8] sm:$0xff]
      %v4728 = vld [vmem:[#allocation2 + $0x10] sm:$0xff]
      %v4729 = vld [vmem:[#allocation2 + $0x18] sm:$0xff]
      %v4730 = vld [vmem:[#allocation2 + $0x20] sm:$0xff]
      %v4731 = vld [vmem:[#allocation2 + $0x28] sm:$0xff]
      %v4732 = vld [vmem:[#allocation2 + $0x30] sm:$0xff]
      %v4733 = vld [vmem:[#allocation2 + $0x38] sm:$0xff]
      %v4734 = vld [vmem:[#allocation2 + $0x40] sm:$0xff]
      %v4735 = vld [vmem:[#allocation2 + $0x48] sm:$0xff]
      %v4736 = vld [vmem:[#allocation2 + $0x50] sm:$0xff]
      %v4737 = vld [vmem:[#allocation2 + $0x58] sm:$0xff]
      %v4738 = vld [vmem:[#allocation2 + $0x60] sm:$0xff]
      %v4739 = vld [vmem:[#allocation2 + $0x68] sm:$0xff]
      %v4740 = vld [vmem:[#allocation2 + $0x70] sm:$0xff]
      %v4741 = vld [vmem:[#allocation2 + $0x78] sm:$0xff]
      %v4742 = vld [vmem:[#allocation2 + $0x80] sm:$0xff]
      %v4743 = vld [vmem:[#allocation2 + $0x88] sm:$0xff]
      %v4744 = vld [vmem:[#allocation2 + $0x90] sm:$0xff]
      %v4745 = vld [vmem:[#allocation2 + $0x98] sm:$0xff]
      %v4746 = vld [vmem:[#allocation2 + $0xa0] sm:$0xff]
      %v4747 = vld [vmem:[#allocation2 + $0xa8] sm:$0xff]
      %v4748 = vld [vmem:[#allocation2 + $0xb0] sm:$0xff]
      %v4749 = vld [vmem:[#allocation2 + $0xb8] sm:$0xff]
      %v4750 = vld [vmem:[#allocation2 + $0xc0] sm:$0xff]
      %v4751 = vld [vmem:[#allocation2 + $0xc8] sm:$0xff]
      %v4752 = vld [vmem:[#allocation2 + $0xd0] sm:$0xff]
      %v4753 = vld [vmem:[#allocation2 + $0xd8] sm:$0xff]
      %v4754 = vld [vmem:[#allocation2 + $0xe0] sm:$0xff]
      %v4755 = vld [vmem:[#allocation2 + $0xe8] sm:$0xff]
      %v4756 = vld [vmem:[#allocation2 + $0xf0] sm:$0xff]
      %v4757 = vld [vmem:[#allocation2 + $0xf8] sm:$0xff]
      %v4758 = vld [vmem:[#allocation2 + $0x100] sm:$0xff]
      %v4759 = vld [vmem:[#allocation2 + $0x108] sm:$0xff]
      %v4760 = vld [vmem:[#allocation2 + $0x110] sm:$0xff]
      %v4761 = vld [vmem:[#allocation2 + $0x118] sm:$0xff]
      %s4762 = scalar_lea.vmem %s210, 16
      %v4763 = vld [vmem:[%s4762] sm:$0x3]
      %v4801 = vunpack.c.l.b16 %v4689
      %v4802 = vunpack.c.l.b16 %v4690
      %v4803 = vunpack.c.l.b16 %v4691
      %v4804 = vunpack.c.l.b16 %v4692
      %v4805 = vunpack.c.l.b16 %v4693
      %v4806 = vunpack.c.l.b16 %v4694
      %v4807 = vunpack.c.l.b16 %v4695
      %v4808 = vunpack.c.l.b16 %v4696
      %v4809 = vunpack.c.l.b16 %v4697
      %v4810 = vunpack.c.l.b16 %v4698
      %v4811 = vunpack.c.l.b16 %v4699
      %v4812 = vunpack.c.l.b16 %v4700
      %v4813 = vunpack.c.l.b16 %v4701
      %v4814 = vunpack.c.l.b16 %v4702
      %v4815 = vunpack.c.l.b16 %v4703
      %v4816 = vunpack.c.l.b16 %v4704
      %v4817 = vunpack.c.l.b16 %v4705
      %v4818 = vunpack.c.l.b16 %v4706
      %v4819 = vunpack.c.l.b16 %v4707
      %v4820 = vunpack.c.l.b16 %v4708
      %v4821 = vunpack.c.l.b16 %v4709
      %v4822 = vunpack.c.l.b16 %v4710
      %v4823 = vunpack.c.l.b16 %v4711
      %v4824 = vunpack.c.l.b16 %v4712
      %v4825 = vunpack.c.l.b16 %v4713
      %v4826 = vunpack.c.l.b16 %v4714
      %v4827 = vunpack.c.l.b16 %v4715
      %v4828 = vunpack.c.l.b16 %v4716
      %v4829 = vunpack.c.l.b16 %v4717
      %v4830 = vunpack.c.l.b16 %v4718
      %v4831 = vunpack.c.l.b16 %v4719
      %v4832 = vunpack.c.l.b16 %v4720
      %v4833 = vunpack.c.l.b16 %v4721
      %v4834 = vunpack.c.l.b16 %v4722
      %v4835 = vunpack.c.l.b16 %v4723
      %v4836 = vunpack.c.l.b16 %v4724
      %v4837 = vunpack.c.l.b16 %v4725
      %v4838 = vpack.c.b16 %v4802, %v4801
      %v4839 = vpack.c.b16 %v4804, %v4803
      %v4840 = vpack.c.b16 %v4806, %v4805
      %v4841 = vpack.c.b16 %v4808, %v4807
      %v4842 = vpack.c.b16 %v4810, %v4809
      %v4843 = vpack.c.b16 %v4812, %v4811
      %v4844 = vpack.c.b16 %v4814, %v4813
      %v4845 = vpack.c.b16 %v4816, %v4815
      %v4846 = vpack.c.b16 %v4818, %v4817
      %v4847 = vpack.c.b16 %v4820, %v4819
      %v4848 = vpack.c.b16 %v4822, %v4821
      %v4849 = vpack.c.b16 %v4824, %v4823
      %v4850 = vpack.c.b16 %v4826, %v4825
      %v4851 = vpack.c.b16 %v4828, %v4827
      %v4852 = vpack.c.b16 %v4830, %v4829
      %v4853 = vpack.c.b16 %v4832, %v4831
      %v4854 = vpack.c.b16 %v4834, %v4833
      %v4855 = vpack.c.b16 %v4836, %v4835
      %v4856 = vpack.c.b16 %v4837, %v4837
      %vm4857 = vcmask 1044480
      %v4858 = vrot.slane %v4838, 3
      %v4859 = vrot.slane %v4839, 3
      %v4860 = vsel %vm4857, %v4858, %v4859
      %v4861 = vrot.slane %v4840, 3
      %v4862 = vsel %vm4857, %v4859, %v4861
      %v4863 = vrot.slane %v4841, 3
      %v4864 = vsel %vm4857, %v4861, %v4863
      %v4865 = vrot.slane %v4842, 3
      %v4866 = vsel %vm4857, %v4863, %v4865
      %v4867 = vrot.slane %v4843, 3
      %v4868 = vsel %vm4857, %v4865, %v4867
      %v4869 = vrot.slane %v4844, 3
      %v4870 = vsel %vm4857, %v4867, %v4869
      %v4871 = vrot.slane %v4845, 3
      %v4872 = vsel %vm4857, %v4869, %v4871
      %v4873 = vrot.slane %v4846, 3
      %v4874 = vsel %vm4857, %v4871, %v4873
      %v4875 = vrot.slane %v4847, 3
      %v4876 = vsel %vm4857, %v4873, %v4875
      %v4877 = vrot.slane %v4848, 3
      %v4878 = vsel %vm4857, %v4875, %v4877
      %v4879 = vrot.slane %v4849, 3
      %v4880 = vsel %vm4857, %v4877, %v4879
      %v4881 = vrot.slane %v4850, 3
      %v4882 = vsel %vm4857, %v4879, %v4881
      %v4883 = vrot.slane %v4851, 3
      %v4884 = vsel %vm4857, %v4881, %v4883
      %v4885 = vrot.slane %v4852, 3
      %v4886 = vsel %vm4857, %v4883, %v4885
      %v4887 = vrot.slane %v4853, 3
      %v4888 = vsel %vm4857, %v4885, %v4887
      %v4889 = vrot.slane %v4854, 3
      %v4890 = vsel %vm4857, %v4887, %v4889
      %v4891 = vrot.slane %v4855, 3
      %v4892 = vsel %vm4857, %v4889, %v4891
      %v4893 = vrot.slane %v4856, 3
      %v4894 = vsel %vm4857, %v4891, %v4893
      %v4896 = vsel %vm422, %v4860, 0
      %v4899 = vsel %vm422, %v4862, 0
      %v4902 = vsel %vm422, %v4864, 0
      %v4905 = vsel %vm422, %v4866, 0
      %v4908 = vsel %vm422, %v4868, 0
      %v4911 = vsel %vm422, %v4870, 0
      %v4914 = vsel %vm422, %v4872, 0
      %v4917 = vsel %vm422, %v4874, 0
      %v4920 = vsel %vm422, %v4876, 0
      %v4923 = vsel %vm422, %v4878, 0
      %v4926 = vsel %vm422, %v4880, 0
      %v4929 = vsel %vm422, %v4882, 0
      %v4932 = vsel %vm422, %v4884, 0
      %v4935 = vsel %vm422, %v4886, 0
      %v4938 = vsel %vm422, %v4888, 0
      %v4941 = vsel %vm422, %v4890, 0
      %v4944 = vsel %vm422, %v4892, 0
      %v4947 = vsel %vm422, %v4894, 0
      %v4950 = vsel %vm477, %v4763, 0
      %4952 = vmatprep.subr.bf16.mxu0 0
      %4953 = vmatpush1.bf16.msra.mxu0 %v4950
      %4954 = vmatprep.subr.bf16.mxu0 0
      %4955 = vmatpush1.bf16.msra.mxu0 0
      %4956 = vmatprep.subr.bf16.mxu0 0
      %4957 = vmatpush1.bf16.msra.mxu0 0
      %4958 = vmatprep.subr.bf16.mxu0 0
      %4959 = vmatpush1.bf16.msra.mxu0 0
      %4960 = vmatprep.subr.bf16.mxu0 0
      %4961 = vmatpush1.bf16.msra.mxu0 0
      %4962 = vmatprep.subr.bf16.mxu0 0
      %4963 = vmatpush1.bf16.msra.mxu0 0
      %4964 = vmatprep.subr.bf16.mxu0 0
      %4965 = vmatpush1.bf16.msra.mxu0 0
      %4966 = vmatprep.subr.bf16.mxu0 0
      %4967 = vmatpush1.bf16.msra.mxu0 0
      %4968 = vmatprep.subr.bf16.mxu0 0
      %4969 = vmatpush1.bf16.msra.mxu0 0
      %4970 = vmatprep.subr.bf16.mxu0 0
      %4971 = vmatpush1.bf16.msra.mxu0 0
      %4972 = vmatprep.subr.bf16.mxu0 0
      %4973 = vmatpush1.bf16.msra.mxu0 0
      %4974 = vmatprep.subr.bf16.mxu0 0
      %4975 = vmatpush1.bf16.msra.mxu0 0
      %4976 = vmatprep.subr.bf16.mxu0 0
      %4977 = vmatpush1.bf16.msra.mxu0 0
      %4978 = vmatprep.subr.bf16.mxu0 0
      %4979 = vmatpush1.bf16.msra.mxu0 0
      %4980 = vmatprep.subr.bf16.mxu0 0
      %4981 = vmatpush1.bf16.msra.mxu0 0
      %4982 = vmatprep.subr.bf16.mxu0 0
      %4983 = vmatpush1.bf16.msra.mxu0 0
      %4984 = vmatprep.mubr.bf16.mxu0 0
      %4985 = vmatmul.mubr.bf16.gmra.mrb[0].mxu0 %v4896
      %v4986 = vpop.f32.mrb[0].mxu0
      %v4987 = vadd.f32 0.0, %v4986
      %v4988 = vpop.f32.mrb[0].mxu0
      %v4989 = vpop.f32.mrb[0].mxu0
      %v4990 = vadd.f32 0.0, %v4989
      %v4991 = vpop.f32.mrb[0].mxu0
      %4992 = vmatprep.mubr.bf16.mxu0 0
      %4993 = vmatmul.mubr.bf16.gmra.mrb[0].mxu0 %v4899
      %v4994 = vpop.f32.mrb[0].mxu0
      %v4995 = vadd.f32 0.0, %v4994
      %v4996 = vpop.f32.mrb[0].mxu0
      %v4997 = vpop.f32.mrb[0].mxu0
      %v4998 = vadd.f32 0.0, %v4997
      %v4999 = vpop.f32.mrb[0].mxu0
      %5000 = vmatprep.mubr.bf16.mxu0 0
      %5001 = vmatmul.mubr.bf16.gmra.mrb[0].mxu0 %v4902
      %v5002 = vpop.f32.mrb[0].mxu0
      %v5003 = vadd.f32 0.0, %v5002
      %v5004 = vpop.f32.mrb[0].mxu0
      %v5005 = vpop.f32.mrb[0].mxu0
      %v5006 = vadd.f32 0.0, %v5005
      %v5007 = vpop.f32.mrb[0].mxu0
      %5008 = vmatprep.mubr.bf16.mxu0 0
      %5009 = vmatmul.mubr.bf16.gmra.mrb[0].mxu0 %v4905
      %v5010 = vpop.f32.mrb[0].mxu0
      %v5011 = vadd.f32 0.0, %v5010
      %v5012 = vpop.f32.mrb[0].mxu0
      %v5013 = vpop.f32.mrb[0].mxu0
      %v5014 = vadd.f32 0.0, %v5013
      %v5015 = vpop.f32.mrb[0].mxu0
      %5016 = vmatprep.mubr.bf16.mxu0 0
      %5017 = vmatmul.mubr.bf16.gmra.mrb[0].mxu0 %v4908
      %v5018 = vpop.f32.mrb[0].mxu0
      %v5019 = vadd.f32 0.0, %v5018
      %v5020 = vpop.f32.mrb[0].mxu0
      %v5021 = vpop.f32.mrb[0].mxu0
      %v5022 = vadd.f32 0.0, %v5021
      %v5023 = vpop.f32.mrb[0].mxu0
      %5024 = vmatprep.mubr.bf16.mxu0 0
      %5025 = vmatmul.mubr.bf16.gmra.mrb[0].mxu0 %v4911
      %v5026 = vpop.f32.mrb[0].mxu0
      %v5027 = vadd.f32 0.0, %v5026
      %v5028 = vpop.f32.mrb[0].mxu0
      %v5029 = vpop.f32.mrb[0].mxu0
      %v5030 = vadd.f32 0.0, %v5029
      %v5031 = vpop.f32.mrb[0].mxu0
      %5032 = vmatprep.mubr.bf16.mxu0 0
      %5033 = vmatmul.mubr.bf16.gmra.mrb[0].mxu0 %v4914
      %v5034 = vpop.f32.mrb[0].mxu0
      %v5035 = vadd.f32 0.0, %v5034
      %v5036 = vpop.f32.mrb[0].mxu0
      %v5037 = vpop.f32.mrb[0].mxu0
      %v5038 = vadd.f32 0.0, %v5037
      %v5039 = vpop.f32.mrb[0].mxu0
      %5040 = vmatprep.mubr.bf16.mxu0 0
      %5041 = vmatmul.mubr.bf16.gmra.mrb[0].mxu0 %v4917
      %v5042 = vpop.f32.mrb[0].mxu0
      %v5043 = vadd.f32 0.0, %v5042
      %v5044 = vpop.f32.mrb[0].mxu0
      %v5045 = vpop.f32.mrb[0].mxu0
      %v5046 = vadd.f32 0.0, %v5045
      %v5047 = vpop.f32.mrb[0].mxu0
      %5048 = vmatprep.mubr.bf16.mxu0 0
      %5049 = vmatmul.mubr.bf16.gmra.mrb[0].mxu0 %v4920
      %v5050 = vpop.f32.mrb[0].mxu0
      %v5051 = vadd.f32 0.0, %v5050
      %v5052 = vpop.f32.mrb[0].mxu0
      %v5053 = vpop.f32.mrb[0].mxu0
      %v5054 = vadd.f32 0.0, %v5053
      %v5055 = vpop.f32.mrb[0].mxu0
      %5056 = vmatprep.mubr.bf16.mxu0 0
      %5057 = vmatmul.mubr.bf16.gmra.mrb[0].mxu0 %v4923
      %v5058 = vpop.f32.mrb[0].mxu0
      %v5059 = vadd.f32 0.0, %v5058
      %v5060 = vpop.f32.mrb[0].mxu0
      %v5061 = vpop.f32.mrb[0].mxu0
      %v5062 = vadd.f32 0.0, %v5061
      %v5063 = vpop.f32.mrb[0].mxu0
      %5064 = vmatprep.mubr.bf16.mxu0 0
      %5065 = vmatmul.mubr.bf16.gmra.mrb[0].mxu0 %v4926
      %v5066 = vpop.f32.mrb[0].mxu0
      %v5067 = vadd.f32 0.0, %v5066
      %v5068 = vpop.f32.mrb[0].mxu0
      %v5069 = vpop.f32.mrb[0].mxu0
      %v5070 = vadd.f32 0.0, %v5069
      %v5071 = vpop.f32.mrb[0].mxu0
      %5072 = vmatprep.mubr.bf16.mxu0 0
      %5073 = vmatmul.mubr.bf16.gmra.mrb[0].mxu0 %v4929
      %v5074 = vpop.f32.mrb[0].mxu0
      %v5075 = vadd.f32 0.0, %v5074
      %v5076 = vpop.f32.mrb[0].mxu0
      %v5077 = vpop.f32.mrb[0].mxu0
      %v5078 = vadd.f32 0.0, %v5077
      %v5079 = vpop.f32.mrb[0].mxu0
      %5080 = vmatprep.mubr.bf16.mxu0 0
      %5081 = vmatmul.mubr.bf16.gmra.mrb[0].mxu0 %v4932
      %v5082 = vpop.f32.mrb[0].mxu0
      %v5083 = vadd.f32 0.0, %v5082
      %v5084 = vpop.f32.mrb[0].mxu0
      %v5085 = vpop.f32.mrb[0].mxu0
      %v5086 = vadd.f32 0.0, %v5085
      %v5087 = vpop.f32.mrb[0].mxu0
      %5088 = vmatprep.mubr.bf16.mxu0 0
      %5089 = vmatmul.mubr.bf16.gmra.mrb[0].mxu0 %v4935
      %v5090 = vpop.f32.mrb[0].mxu0
      %v5091 = vadd.f32 0.0, %v5090
      %v5092 = vpop.f32.mrb[0].mxu0
      %v5093 = vpop.f32.mrb[0].mxu0
      %v5094 = vadd.f32 0.0, %v5093
      %v5095 = vpop.f32.mrb[0].mxu0
      %5096 = vmatprep.mubr.bf16.mxu0 0
      %5097 = vmatmul.mubr.bf16.gmra.mrb[0].mxu0 %v4938
      %v5098 = vpop.f32.mrb[0].mxu0
      %v5099 = vadd.f32 0.0, %v5098
      %v5100 = vpop.f32.mrb[0].mxu0
      %v5101 = vpop.f32.mrb[0].mxu0
      %v5102 = vadd.f32 0.0, %v5101
      %v5103 = vpop.f32.mrb[0].mxu0
      %5104 = vmatprep.mubr.bf16.mxu0 0
      %5105 = vmatmul.mubr.bf16.gmra.mrb[0].mxu0 %v4941
      %v5106 = vpop.f32.mrb[0].mxu0
      %v5107 = vadd.f32 0.0, %v5106
      %v5108 = vpop.f32.mrb[0].mxu0
      %v5109 = vpop.f32.mrb[0].mxu0
      %v5110 = vadd.f32 0.0, %v5109
      %v5111 = vpop.f32.mrb[0].mxu0
      %5112 = vmatprep.mubr.bf16.mxu0 0
      %5113 = vmatmul.mubr.bf16.gmra.mrb[0].mxu0 %v4944
      %v5114 = vpop.f32.mrb[0].mxu0
      %v5115 = vadd.f32 0.0, %v5114
      %v5116 = vpop.f32.mrb[0].mxu0
      %v5117 = vpop.f32.mrb[0].mxu0
      %v5118 = vadd.f32 0.0, %v5117
      %v5119 = vpop.f32.mrb[0].mxu0
      %5120 = vmatprep.mubr.bf16.mxu0 0
      %5121 = vmatmul.mubr.bf16.gmra.mrb[0].mxu0 %v4947
      %v5122 = vpop.f32.mrb[0].mxu0
      %v5123 = vadd.f32 0.0, %v5122
      %v5124 = vpop.f32.mrb[0].mxu0
      %v5125 = vpop.f32.mrb[0].mxu0
      %v5126 = vadd.f32 0.0, %v5125
      %v5127 = vpop.f32.mrb[0].mxu0
      %5128 = vdwg.mxu0
      %v5129 = vadd.f32 %v4726, %v4987
      %v5130 = vadd.f32 %v4727, %v4990
      %v5131 = vadd.f32 %v4728, %v4995
      %v5132 = vadd.f32 %v4729, %v4998
      %v5133 = vadd.f32 %v4730, %v5003
      %v5134 = vadd.f32 %v4731, %v5006
      %v5135 = vadd.f32 %v4732, %v5011
      %v5136 = vadd.f32 %v4733, %v5014
      %v5137 = vadd.f32 %v4734, %v5019
      %v5138 = vadd.f32 %v4735, %v5022
      %v5139 = vadd.f32 %v4736, %v5027
      %v5140 = vadd.f32 %v4737, %v5030
      %v5141 = vadd.f32 %v4738, %v5035
      %v5142 = vadd.f32 %v4739, %v5038
      %v5143 = vadd.f32 %v4740, %v5043
      %v5144 = vadd.f32 %v4741, %v5046
      %v5145 = vadd.f32 %v4742, %v5051
      %v5146 = vadd.f32 %v4743, %v5054
      %v5147 = vadd.f32 %v4744, %v5059
      %v5148 = vadd.f32 %v4745, %v5062
      %v5149 = vadd.f32 %v4746, %v5067
      %v5150 = vadd.f32 %v4747, %v5070
      %v5151 = vadd.f32 %v4748, %v5075
      %v5152 = vadd.f32 %v4749, %v5078
      %v5153 = vadd.f32 %v4750, %v5083
      %v5154 = vadd.f32 %v4751, %v5086
      %v5155 = vadd.f32 %v4752, %v5091
      %v5156 = vadd.f32 %v4753, %v5094
      %v5157 = vadd.f32 %v4754, %v5099
      %v5158 = vadd.f32 %v4755, %v5102
      %v5159 = vadd.f32 %v4756, %v5107
      %v5160 = vadd.f32 %v4757, %v5110
      %v5161 = vadd.f32 %v4758, %v5115
      %v5162 = vadd.f32 %v4759, %v5118
      %v5163 = vadd.f32 %v4760, %v5123
      %v5164 = vadd.f32 %v4761, %v5126
      %5165 = vst [vmem:[#allocation2] sm:$0xff] %v5129
      %5166 = vst [vmem:[#allocation2 + $0x8] sm:$0xff] %v5130
      %5167 = vst [vmem:[#allocation2 + $0x10] sm:$0xff] %v5131
      %5168 = vst [vmem:[#allocation2 + $0x18] sm:$0xff] %v5132
      %5169 = vst [vmem:[#allocation2 + $0x20] sm:$0xff] %v5133
      %5170 = vst [vmem:[#allocation2 + $0x28] sm:$0xff] %v5134
      %5171 = vst [vmem:[#allocation2 + $0x30] sm:$0xff] %v5135
      %5172 = vst [vmem:[#allocation2 + $0x38] sm:$0xff] %v5136
      %5173 = vst [vmem:[#allocation2 + $0x40] sm:$0xff] %v5137
      %5174 = vst [vmem:[#allocation2 + $0x48] sm:$0xff] %v5138
      %5175 = vst [vmem:[#allocation2 + $0x50] sm:$0xff] %v5139
      %5176 = vst [vmem:[#allocation2 + $0x58] sm:$0xff] %v5140
      %5177 = vst [vmem:[#allocation2 + $0x60] sm:$0xff] %v5141
      %5178 = vst [vmem:[#allocation2 + $0x68] sm:$0xff] %v5142
      %5179 = vst [vmem:[#allocation2 + $0x70] sm:$0xff] %v5143
      %5180 = vst [vmem:[#allocation2 + $0x78] sm:$0xff] %v5144
      %5181 = vst [vmem:[#allocation2 + $0x80] sm:$0xff] %v5145
      %5182 = vst [vmem:[#allocation2 + $0x88] sm:$0xff] %v5146
      %5183 = vst [vmem:[#allocation2 + $0x90] sm:$0xff] %v5147
      %5184 = vst [vmem:[#allocation2 + $0x98] sm:$0xff] %v5148
      %5185 = vst [vmem:[#allocation2 + $0xa0] sm:$0xff] %v5149
      %5186 = vst [vmem:[#allocation2 + $0xa8] sm:$0xff] %v5150
      %5187 = vst [vmem:[#allocation2 + $0xb0] sm:$0xff] %v5151
      %5188 = vst [vmem:[#allocation2 + $0xb8] sm:$0xff] %v5152
      %5189 = vst [vmem:[#allocation2 + $0xc0] sm:$0xff] %v5153
      %5190 = vst [vmem:[#allocation2 + $0xc8] sm:$0xff] %v5154
      %5191 = vst [vmem:[#allocation2 + $0xd0] sm:$0xff] %v5155
      %5192 = vst [vmem:[#allocation2 + $0xd8] sm:$0xff] %v5156
      %5193 = vst [vmem:[#allocation2 + $0xe0] sm:$0xff] %v5157
      %5194 = vst [vmem:[#allocation2 + $0xe8] sm:$0xff] %v5158
      %5195 = vst [vmem:[#allocation2 + $0xf0] sm:$0xff] %v5159
      %5196 = vst [vmem:[#allocation2 + $0xf8] sm:$0xff] %v5160
      %5197 = vst [vmem:[#allocation2 + $0x100] sm:$0xff] %v5161
      %5198 = vst [vmem:[#allocation2 + $0x108] sm:$0xff] %v5162
      %5199 = vst [vmem:[#allocation2 + $0x110] sm:$0xff] %v5163
      %5200 = vst [vmem:[#allocation2 + $0x118] sm:$0xff] %v5164
      %v5201 = vld [vmem:[#allocation2] sm:$0xff]
      %v5202 = vld [vmem:[#allocation2 + $0x8] sm:$0xff]
      %v5203 = vld [vmem:[#allocation2 + $0x10] sm:$0xff]
      %v5204 = vld [vmem:[#allocation2 + $0x18] sm:$0xff]
      %v5205 = vld [vmem:[#allocation2 + $0x20] sm:$0xff]
      %v5206 = vld [vmem:[#allocation2 + $0x28] sm:$0xff]
      %v5207 = vld [vmem:[#allocation2 + $0x30] sm:$0xff]
      %v5208 = vld [vmem:[#allocation2 + $0x38] sm:$0xff]
      %v5209 = vld [vmem:[#allocation2 + $0x40] sm:$0xff]
      %v5210 = vld [vmem:[#allocation2 + $0x48] sm:$0xff]
      %v5211 = vld [vmem:[#allocation2 + $0x50] sm:$0xff]
      %v5212 = vld [vmem:[#allocation2 + $0x58] sm:$0xff]
      %v5213 = vld [vmem:[#allocation2 + $0x60] sm:$0xff]
      %v5214 = vld [vmem:[#allocation2 + $0x68] sm:$0xff]
      %v5215 = vld [vmem:[#allocation2 + $0x70] sm:$0xff]
      %v5216 = vld [vmem:[#allocation2 + $0x78] sm:$0xff]
      %v5217 = vld [vmem:[#allocation2 + $0x80] sm:$0xff]
      %v5218 = vld [vmem:[#allocation2 + $0x88] sm:$0xff]
      %v5219 = vld [vmem:[#allocation2 + $0x90] sm:$0xff]
      %v5220 = vld [vmem:[#allocation2 + $0x98] sm:$0xff]
      %v5221 = vld [vmem:[#allocation2 + $0xa0] sm:$0xff]
      %v5222 = vld [vmem:[#allocation2 + $0xa8] sm:$0xff]
      %v5223 = vld [vmem:[#allocation2 + $0xb0] sm:$0xff]
      %v5224 = vld [vmem:[#allocation2 + $0xb8] sm:$0xff]
      %v5225 = vld [vmem:[#allocation2 + $0xc0] sm:$0xff]
      %v5226 = vld [vmem:[#allocation2 + $0xc8] sm:$0xff]
      %v5227 = vld [vmem:[#allocation2 + $0xd0] sm:$0xff]
      %v5228 = vld [vmem:[#allocation2 + $0xd8] sm:$0xff]
      %v5229 = vld [vmem:[#allocation2 + $0xe0] sm:$0xff]
      %v5230 = vld [vmem:[#allocation2 + $0xe8] sm:$0xff]
      %v5231 = vld [vmem:[#allocation2 + $0xf0] sm:$0xff]
      %v5232 = vld [vmem:[#allocation2 + $0xf8] sm:$0xff]
      %v5233 = vld [vmem:[#allocation2 + $0x100] sm:$0xff]
      %v5234 = vld [vmem:[#allocation2 + $0x108] sm:$0xff]
      %v5235 = vld [vmem:[#allocation2 + $0x110] sm:$0xff]
      %v5236 = vld [vmem:[#allocation2 + $0x118] sm:$0xff]
      %v5237 = vld [vmem:[%s213] sm:$0x1]
      %v5239 = vlaneseq
      %v5240 = vshrl.u32 %v5239, 7
      %v5241 = vsub.s32 0, %v5240
      %v5242 = vrot.slane %v5237, %v5241
      %v5244 = vadd.f32 %v5201, %v5242
      %v5245 = vadd.f32 %v5202, %v5242
      %v5246 = vadd.f32 %v5203, %v5242
      %v5247 = vadd.f32 %v5204, %v5242
      %v5248 = vadd.f32 %v5205, %v5242
      %v5249 = vadd.f32 %v5206, %v5242
      %v5250 = vadd.f32 %v5207, %v5242
      %v5251 = vadd.f32 %v5208, %v5242
      %v5252 = vadd.f32 %v5209, %v5242
      %v5253 = vadd.f32 %v5210, %v5242
      %v5254 = vadd.f32 %v5211, %v5242
      %v5255 = vadd.f32 %v5212, %v5242
      %v5256 = vadd.f32 %v5213, %v5242
      %v5257 = vadd.f32 %v5214, %v5242
      %v5258 = vadd.f32 %v5215, %v5242
      %v5259 = vadd.f32 %v5216, %v5242
      %v5260 = vadd.f32 %v5217, %v5242
      %v5261 = vadd.f32 %v5218, %v5242
      %v5262 = vadd.f32 %v5219, %v5242
      %v5263 = vadd.f32 %v5220, %v5242
      %v5264 = vadd.f32 %v5221, %v5242
      %v5265 = vadd.f32 %v5222, %v5242
      %v5266 = vadd.f32 %v5223, %v5242
      %v5267 = vadd.f32 %v5224, %v5242
      %v5268 = vadd.f32 %v5225, %v5242
      %v5269 = vadd.f32 %v5226, %v5242
      %v5270 = vadd.f32 %v5227, %v5242
      %v5271 = vadd.f32 %v5228, %v5242
      %v5272 = vadd.f32 %v5229, %v5242
      %v5273 = vadd.f32 %v5230, %v5242
      %v5274 = vadd.f32 %v5231, %v5242
      %v5275 = vadd.f32 %v5232, %v5242
      %v5276 = vadd.f32 %v5233, %v5242
      %v5277 = vadd.f32 %v5234, %v5242
      %v5278 = vadd.f32 %v5235, %v5242
      %v5279 = vadd.f32 %v5236, %v5242
      %5280 = vst [vmem:[%s221] sm:$0xff] %v5244
      %5281 = vst [vmem:[%s221 + $0x8] sm:$0xff] %v5245
      %5282 = vst [vmem:[%s221 + $0x10] sm:$0xff] %v5246
      %5283 = vst [vmem:[%s221 + $0x18] sm:$0xff] %v5247
      %5284 = vst [vmem:[%s221 + $0x20] sm:$0xff] %v5248
      %5285 = vst [vmem:[%s221 + $0x28] sm:$0xff] %v5249
      %5286 = vst [vmem:[%s221 + $0x30] sm:$0xff] %v5250
      %5287 = vst [vmem:[%s221 + $0x38] sm:$0xff] %v5251
      %5288 = vst [vmem:[%s221 + $0x40] sm:$0xff] %v5252
      %5289 = vst [vmem:[%s221 + $0x48] sm:$0xff] %v5253
      %5290 = vst [vmem:[%s221 + $0x50] sm:$0xff] %v5254
      %5291 = vst [vmem:[%s221 + $0x58] sm:$0xff] %v5255
      %5292 = vst [vmem:[%s221 + $0x60] sm:$0xff] %v5256
      %5293 = vst [vmem:[%s221 + $0x68] sm:$0xff] %v5257
      %5294 = vst [vmem:[%s221 + $0x70] sm:$0xff] %v5258
      %5295 = vst [vmem:[%s221 + $0x78] sm:$0xff] %v5259
      %5296 = vst [vmem:[%s221 + $0x80] sm:$0xff] %v5260
      %5297 = vst [vmem:[%s221 + $0x88] sm:$0xff] %v5261
      %5298 = vst [vmem:[%s221 + $0x90] sm:$0xff] %v5262
      %5299 = vst [vmem:[%s221 + $0x98] sm:$0xff] %v5263
      %5300 = vst [vmem:[%s221 + $0xa0] sm:$0xff] %v5264
      %5301 = vst [vmem:[%s221 + $0xa8] sm:$0xff] %v5265
      %5302 = vst [vmem:[%s221 + $0xb0] sm:$0xff] %v5266
      %5303 = vst [vmem:[%s221 + $0xb8] sm:$0xff] %v5267
      %5304 = vst [vmem:[%s221 + $0xc0] sm:$0xff] %v5268
      %5305 = vst [vmem:[%s221 + $0xc8] sm:$0xff] %v5269
      %5306 = vst [vmem:[%s221 + $0xd0] sm:$0xff] %v5270
      %5307 = vst [vmem:[%s221 + $0xd8] sm:$0xff] %v5271
      %5308 = vst [vmem:[%s221 + $0xe0] sm:$0xff] %v5272
      %5309 = vst [vmem:[%s221 + $0xe8] sm:$0xff] %v5273
      %5310 = vst [vmem:[%s221 + $0xf0] sm:$0xff] %v5274
      %5311 = vst [vmem:[%s221 + $0xf8] sm:$0xff] %v5275
      %5312 = vst [vmem:[%s221 + $0x100] sm:$0xff] %v5276
      %5313 = vst [vmem:[%s221 + $0x108] sm:$0xff] %v5277
      %5314 = vst [vmem:[%s221 + $0x110] sm:$0xff] %v5278
      %5315 = vst [vmem:[%s221 + $0x118] sm:$0xff] %v5279
      %p5316 = scmp.lt.s32.totalorder %s18, 1
      %s5317 = scalar_select %p5316, %s18, 1
      %p5318 = scmp.lt.s32.totalorder %s19, 0
      %s5319 = scalar_select %p5318, %s19, 0
      %s5320 = smul.addr %s5317, 36
      %s5321 = sadd.s32 %s5319, %s5320
      %s5322 = smul.addr %s5321, 8
      %s5323 = scalar_lea.vmem %s3, %s5322
      // Predicated region
      $region33: #{conv2d_forward.1} parent=31 // pred_check
        %p5324 = pneg %p124
      $region34: #{conv2d_forward.1} parent=31 // pred_check_branch
        %5326 = sbr.rel (%p5324) target = $region36
      $region35: #{conv2d_forward.1} parent=31 // pred_region
        _
      $region36: #{conv2d_forward.1} parent=31 // pred_fallthru
        _
    $region32: #{conv2d_forward.1} parent=5 // pred_fallthru
      _
    %p5327 = scmp.le.s32.totalorder 2, %s9
    // Predicated region
    $region37: #{conv2d_forward.1} parent=5 // pred_check
      %p5328 = pneg %p5327
    $region38: #{conv2d_forward.1} parent=5 // pred_check_branch
      %5330 = sbr.rel (%p5328) target = $region40
    $region39: #{conv2d_forward.1} parent=5 // pred_region
      %s5331 = ssub.s32 %s9, 2
      // Predicated region
      $region41: #{conv2d_forward.1} parent=39 // pred_check
        %p5332 = pneg %p130
      $region42: #{conv2d_forward.1} parent=39 // pred_check_branch
        %5334 = sbr.rel (%p5332) target = $region44
      $region43: #{conv2d_forward.1} parent=39 // pred_region
        %p5335 = scmp.lt.s32.totalorder %s20, 1
        %s5336 = scalar_select %p5335, %s20, 1
        %p5337 = scmp.lt.s32.totalorder %s21, 0
        %s5338 = scalar_select %p5337, %s21, 0
        %s5339 = smul.addr %s5336, 36
        %s5340 = sadd.s32 %s5338, %s5339
        %s5341 = smul.addr %s5340, 8
        %s5342 = scalar_lea.vmem %s3, %s5341
      $region44: #{conv2d_forward.1} parent=39 // pred_fallthru
        _
    $region40: #{conv2d_forward.1} parent=5 // pred_fallthru
      _
  $region6: #{conv2d_forward.1} parent=0 // loop_footer
    %s13 = sadd.s32 1, %s9
  $region7: #{conv2d_forward.1} parent=0 // loop_footer_branch
    %8 = sbr.rel target = $region3
  $region8: #{conv2d_forward.1} parent=0 // loop_exit
    _

</llo_original>
